<compile_context>
chip_gen: v5e
topology: v5e:2x2
jax: 0.10.0
libtpu: 0.0.40
codegen_flags: <defaults>
</compile_context>

<pallas_src>
import functools
import math

import jax
import jax.numpy as jnp
import numpy as np
from jax import lax
from jax.experimental import pallas as pl
from jax.experimental.pallas import tpu as pltpu


def _mha_kernel(x_ref, wq_ref, wk_ref, wv_ref, wo_ref, o_ref, *, nheads, dk, seq):
    """One grid step: Nb batch elements, flattened to rows = Nb*seq.

    x_ref:  (rows, E)       activation slab (f32 or bf16)
    wq_ref: (H, E, dk)      query weights, 1/sqrt(dk) already folded in
    wk_ref: (H, E, dk)
    wv_ref: (H, E, dk)
    wo_ref: (H, dk, E)      output projection, split per head
    o_ref:  (rows, E)
    """
    rows = x_ref.shape[0]
    nb = rows // seq
    od = x_ref.dtype                       # operand dtype for MXU feeds

    x = x_ref[...]                         # (rows, E)

    acc = None
    for h in range(nheads):                # static unroll over heads (nheads=4)
        # Per-head projections; wq_ref[h] is a free static Ref view -> (E, dk).
        q = jnp.dot(x, wq_ref[h], preferred_element_type=jnp.float32)   # (rows, dk)
        k = jnp.dot(x, wk_ref[h], preferred_element_type=jnp.float32)
        v = jnp.dot(x, wv_ref[h], preferred_element_type=jnp.float32)

        # (rows, dk) -> (nb, seq, dk): splits the sublane dim on a tile
        # boundary (seq = 8), minor dim unchanged -> cheap layout-preserving
        # reshape.
        q3 = q.reshape(nb, seq, dk).astype(od)
        k3 = k.reshape(nb, seq, dk).astype(od)
        v3 = v.reshape(nb, seq, dk)

        # scores[b, i, j] = q[b, i, :] . k[b, j, :]   (scale folded into wq)
        s = lax.dot_general(
            q3, k3,
            dimension_numbers=(((2,), (2,)), ((0,), (0,))),
            preferred_element_type=jnp.float32)                          # (nb, seq, seq)

        # Softmax over the last axis, all in f32; reciprocal on the EUP.
        m = jnp.max(s, axis=-1, keepdims=True)
        e = jnp.exp(s - m)
        inv = pl.reciprocal(jnp.sum(e, axis=-1, keepdims=True), approx=True)
        p = (e * inv).astype(od)

        hv = lax.dot_general(
            p, v3.astype(od),
            dimension_numbers=(((2,), (1,)), ((0,), (0,))),
            preferred_element_type=jnp.float32)                          # (nb, seq, dk)

        # Per-head output projection accumulated into (rows, E) -- no concat.
        contrib = jnp.dot(hv.reshape(rows, dk).astype(od), wo_ref[h],
                          preferred_element_type=jnp.float32)            # (rows, E)
        acc = contrib if acc is None else acc + contrib

    o_ref[...] = acc.astype(o_ref.dtype)


def prepare_weights(mhwqkv, wo, *, nheads, dk):
    """Reorganize the torch-layout parameters once, at weight-init time.

    mhwqkv: (E, nheads*3*dk) with per-head [Q|K|V] column blocks.
    wo:     (nheads*dk, E).
    Returns wq, wk, wv of shape (H, E, dk) (1/sqrt(dk) folded into wq)
    and wo3 of shape (H, dk, E).
    """
    E = mhwqkv.shape[0]
    w4 = mhwqkv.reshape(E, nheads, 3, dk).transpose(1, 2, 0, 3)  # (H, 3, E, dk)
    wq = w4[:, 0] * (1.0 / math.sqrt(dk))   # fold softmax scale into Q weights
    wk = w4[:, 1]
    wv = w4[:, 2]
    wo3 = wo.reshape(nheads, dk, E)
    return wq, wk, wv, wo3


def multi_head_attention(x, wq, wk, wv, wo, *, block_batch=16, operand_dtype=None):
    """x: (N, W, E); prepared weights from prepare_weights(). Returns (N, W, E)."""
    N, W, E = x.shape
    nheads, _, dk = wq.shape
    out_dtype = x.dtype

    nb = max(1, min(block_batch, N))
    if (nb * W) % 8 != 0:
        raise ValueError("block_batch * seq must be a multiple of 8 (sublanes)")

    # Pad the batch so it divides evenly into Nb-sized blocks.
    n_pad = -(-N // nb) * nb
    if n_pad != N:
        x = jnp.concatenate(
            [x, jnp.zeros((n_pad - N, W, E), x.dtype)], axis=0)

    # Flatten (N, W, E) -> (N*W, E) so each grid step feeds the MXU a tall LHS.
    xf = x.reshape(n_pad * W, E)
    if operand_dtype is not None:
        xf = xf.astype(operand_dtype)
        wq, wk, wv, wo = (a.astype(operand_dtype) for a in (wq, wk, wv, wo))

    rows = nb * W
    grid = (n_pad // nb,)   # keep >=2 parallel blocks so v7x uses both TCs

    kernel = functools.partial(_mha_kernel, nheads=nheads, dk=dk, seq=W)
    out = pl.pallas_call(
        kernel,
        out_shape=jax.ShapeDtypeStruct((n_pad * W, E), out_dtype),
        grid=grid,
        in_specs=[
            pl.BlockSpec((rows, E), lambda i: (i, 0)),
            # Weights: constant index_map -> fetched once, resident in VMEM.
            pl.BlockSpec(tuple(wq.shape), lambda i: (0, 0, 0)),
            pl.BlockSpec(tuple(wk.shape), lambda i: (0, 0, 0)),
            pl.BlockSpec(tuple(wv.shape), lambda i: (0, 0, 0)),
            pl.BlockSpec(tuple(wo.shape), lambda i: (0, 0, 0)),
        ],
        out_specs=pl.BlockSpec((rows, E), lambda i: (i, 0)),
        # For much larger (E, W, dk) configs, re-derive block_batch per chip
        # generation and set pltpu.CompilerParams(vmem_limit_bytes=...).
        compiler_params=pltpu.CompilerParams(
            dimension_semantics=("parallel",)),
    )(xf, wq, wk, wv, wo)

    return out.reshape(n_pad, W, E)[:N]


def _reference(x, wqkv, wo, *, nheads, dk):
    """Pure-JAX transcription of the PyTorch forward (masked=False)."""
    N, W, E = x.shape
    hqkv = x @ wqkv                                             # (N, W, H*3*dk)
    hqkv = hqkv.reshape(N, W, nheads, 3 * dk).transpose(0, 2, 1, 3)
    hq, hk, hv = hqkv[..., :dk], hqkv[..., dk:2 * dk], hqkv[..., 2 * dk:]
    hi = jnp.einsum("nhqd,nhkd->nhqk", hq, hk) / dk ** 0.5
    hs = jax.nn.softmax(hi, axis=-1)
    ha = jnp.einsum("nhqk,nhkd->nhqd", hs, hv)
    ha = ha.transpose(0, 2, 1, 3).reshape(N, W, nheads * dk)
    return ha @ wo


def _xavier_uniform(key, shape, gain):
    # torch xavier_uniform_: fan_out = shape[0], fan_in = shape[1]
    fan_out, fan_in = shape[0], shape[1]
    bound = gain * math.sqrt(6.0 / (fan_in + fan_out))
    return jax.random.uniform(key, shape, jnp.float32, minval=-bound, maxval=bound)


if __name__ == "__main__":
    # Module config: nheads=4, embed_dim=32, dk=16 (nheads*dk=64 != 32 => Wo used)
    nheads, embed_dim, dk = 4, 32, 16
    N, W = 64, 8          # 64 batch elements, 16 per grid step -> 4 parallel steps

    key = jax.random.PRNGKey(0)
    kx, kw, ko = jax.random.split(key, 3)

    x = jax.random.normal(kx, (N, W, embed_dim), dtype=jnp.float32)
    MhWqkv = _xavier_uniform(kw, (embed_dim, nheads * 3 * dk), gain=0.1)
    Wo = _xavier_uniform(ko, (nheads * dk, embed_dim), gain=0.1)

    z_ref = jax.block_until_ready(_reference(x, MhWqkv, Wo, nheads=nheads, dk=dk))

    # One-time weight reorganization (scale folded into Q weights).
    wq, wk, wv, wo3 = prepare_weights(MhWqkv, Wo, nheads=nheads, dk=dk)

    # f32 path (v5e-friendly; kernel is overhead/memory bound at these sizes).
    z = multi_head_attention(x, wq, wk, wv, wo3, block_batch=16)
    z = jax.block_until_ready(z)
    assert z.shape == (N, W, embed_dim)
    np.testing.assert_allclose(np.asarray(z), np.asarray(z_ref), atol=1e-4, rtol=1e-4)

    # bf16-operand path (v6e/v7x MXU): f32 accumulation + f32 softmax inside.
    z_bf16 = multi_head_attention(x, wq, wk, wv, wo3, block_batch=16,
                                  operand_dtype=jnp.bfloat16)
    z_bf16 = jax.block_until_ready(z_bf16)
    np.testing.assert_allclose(np.asarray(z_bf16), np.asarray(z_ref),
                               atol=5e-3, rtol=5e-2)

    print("KERNEL_OK")
</pallas_src>

<mosaic_0001>
module attributes {stable_mosaic.version = 11 : i64} {
  func.func @_mha_kernel(%arg0: i32, %arg1: memref<128x32xf32, #tpu.memory_space<vmem>>, %arg2: memref<4x32x16xf32, #tpu.memory_space<vmem>>, %arg3: memref<4x32x16xf32, #tpu.memory_space<vmem>>, %arg4: memref<4x32x16xf32, #tpu.memory_space<vmem>>, %arg5: memref<4x16x32xf32, #tpu.memory_space<vmem>>, %arg6: memref<128x32xf32, #tpu.memory_space<vmem>>) attributes {dimension_semantics = [#tpu.dimension_semantics<parallel>], iteration_bounds = array<i64: 4>, scalar_prefetch = 0 : i64, scratch_operands = 0 : i64, tpu.core_type = #tpu.core_type<tc>, window_params = [{transform_indices = @transform_0, window_bounds = array<i64: 128, 32>}, {pipeline_mode = #tpu.pipeline_mode<synchronous>, transform_indices = @transform_1, window_bounds = array<i64: 4, 32, 16>}, {pipeline_mode = #tpu.pipeline_mode<synchronous>, transform_indices = @transform_2, window_bounds = array<i64: 4, 32, 16>}, {pipeline_mode = #tpu.pipeline_mode<synchronous>, transform_indices = @transform_3, window_bounds = array<i64: 4, 32, 16>}, {pipeline_mode = #tpu.pipeline_mode<synchronous>, transform_indices = @transform_4, window_bounds = array<i64: 4, 16, 32>}, {transform_indices = @transform_5, window_bounds = array<i64: 128, 32>}]} {
    %c0 = arith.constant 0 : index
    %c0_0 = arith.constant 0 : index
    %0 = vector.load %arg1[%c0, %c0_0] : memref<128x32xf32, #tpu.memory_space<vmem>>, vector<128x32xf32>
    %c0_1 = arith.constant 0 : index
    %c0_2 = arith.constant 0 : index
    %c0_3 = arith.constant 0 : index
    %1 = vector.load %arg2[%c0_1, %c0_2, %c0_3] : memref<4x32x16xf32, #tpu.memory_space<vmem>>, vector<1x32x16xf32>
    %2 = vector.shape_cast %1 : vector<1x32x16xf32> to vector<32x16xf32>
    %cst = arith.constant dense<0.000000e+00> : vector<128x16xf32>
    %3 = tpu.matmul %0, %2, %cst {dimension_numbers = #tpu.dot_dimension_numbers<[1], [0], [0], [1], [0, 0, 1, 1], [], []>} : vector<128x32xf32>, vector<32x16xf32>, vector<128x16xf32> -> vector<128x16xf32>
    %c0_4 = arith.constant 0 : index
    %c0_5 = arith.constant 0 : index
    %c0_6 = arith.constant 0 : index
    %4 = vector.load %arg3[%c0_4, %c0_5, %c0_6] : memref<4x32x16xf32, #tpu.memory_space<vmem>>, vector<1x32x16xf32>
    %5 = vector.shape_cast %4 : vector<1x32x16xf32> to vector<32x16xf32>
    %cst_7 = arith.constant dense<0.000000e+00> : vector<128x16xf32>
    %6 = tpu.matmul %0, %5, %cst_7 {dimension_numbers = #tpu.dot_dimension_numbers<[1], [0], [0], [1], [0, 0, 1, 1], [], []>} : vector<128x32xf32>, vector<32x16xf32>, vector<128x16xf32> -> vector<128x16xf32>
    %c0_8 = arith.constant 0 : index
    %c0_9 = arith.constant 0 : index
    %c0_10 = arith.constant 0 : index
    %7 = vector.load %arg4[%c0_8, %c0_9, %c0_10] : memref<4x32x16xf32, #tpu.memory_space<vmem>>, vector<1x32x16xf32>
    %8 = vector.shape_cast %7 : vector<1x32x16xf32> to vector<32x16xf32>
    %cst_11 = arith.constant dense<0.000000e+00> : vector<128x16xf32>
    %9 = tpu.matmul %0, %8, %cst_11 {dimension_numbers = #tpu.dot_dimension_numbers<[1], [0], [0], [1], [0, 0, 1, 1], [], []>} : vector<128x32xf32>, vector<32x16xf32>, vector<128x16xf32> -> vector<128x16xf32>
    %10 = vector.shape_cast %3 : vector<128x16xf32> to vector<16x8x16xf32>
    %11 = vector.shape_cast %6 : vector<128x16xf32> to vector<16x8x16xf32>
    %12 = vector.shape_cast %9 : vector<128x16xf32> to vector<16x8x16xf32>
    %cst_12 = arith.constant dense<0.000000e+00> : vector<16x8x8xf32>
    %13 = tpu.matmul %10, %11, %cst_12 {dimension_numbers = #tpu.dot_dimension_numbers<[2], [2], [1], [1], [0, 0, 0, 1, 1, 1], [0], [0]>} : vector<16x8x16xf32>, vector<16x8x16xf32>, vector<16x8x8xf32> -> vector<16x8x8xf32>
    %cst_13 = arith.constant dense<0xFF800000> : vector<16x8xf32>
    %14 = vector.multi_reduction <maximumf>, %13, %cst_13 [2] : vector<16x8x8xf32> to vector<16x8xf32>
    %15 = vector.shape_cast %14 : vector<16x8xf32> to vector<16x8x1xf32>
    %16 = vector.broadcast %15 : vector<16x8x1xf32> to vector<16x8x8xf32>
    %17 = arith.subf %13, %16 : vector<16x8x8xf32>
    %18 = math.exp %17 : vector<16x8x8xf32>
    %cst_14 = arith.constant dense<0.000000e+00> : vector<16x8xf32>
    %19 = vector.multi_reduction <add>, %18, %cst_14 [2] : vector<16x8x8xf32> to vector<16x8xf32>
    %20 = vector.shape_cast %19 : vector<16x8xf32> to vector<16x8x1xf32>
    %21 = tpu.reciprocal %20 {approx = true} : vector<16x8x1xf32> -> vector<16x8x1xf32>
    %22 = vector.broadcast %21 : vector<16x8x1xf32> to vector<16x8x8xf32>
    %23 = arith.mulf %18, %22 : vector<16x8x8xf32>
    %cst_15 = arith.constant dense<0.000000e+00> : vector<16x8x16xf32>
    %24 = tpu.matmul %23, %12, %cst_15 {dimension_numbers = #tpu.dot_dimension_numbers<[2], [1], [1], [2], [0, 0, 0, 1, 1, 2], [0], [0]>} : vector<16x8x8xf32>, vector<16x8x16xf32>, vector<16x8x16xf32> -> vector<16x8x16xf32>
    %25 = vector.shape_cast %24 : vector<16x8x16xf32> to vector<128x16xf32>
    %c0_16 = arith.constant 0 : index
    %c0_17 = arith.constant 0 : index
    %c0_18 = arith.constant 0 : index
    %26 = vector.load %arg5[%c0_16, %c0_17, %c0_18] : memref<4x16x32xf32, #tpu.memory_space<vmem>>, vector<1x16x32xf32>
    %27 = vector.shape_cast %26 : vector<1x16x32xf32> to vector<16x32xf32>
    %cst_19 = arith.constant dense<0.000000e+00> : vector<128x32xf32>
    %28 = tpu.matmul %25, %27, %cst_19 {dimension_numbers = #tpu.dot_dimension_numbers<[1], [0], [0], [1], [0, 0, 1, 1], [], []>} : vector<128x16xf32>, vector<16x32xf32>, vector<128x32xf32> -> vector<128x32xf32>
    %c1 = arith.constant 1 : index
    %c0_20 = arith.constant 0 : index
    %c0_21 = arith.constant 0 : index
    %29 = vector.load %arg2[%c1, %c0_20, %c0_21] : memref<4x32x16xf32, #tpu.memory_space<vmem>>, vector<1x32x16xf32>
    %30 = vector.shape_cast %29 : vector<1x32x16xf32> to vector<32x16xf32>
    %cst_22 = arith.constant dense<0.000000e+00> : vector<128x16xf32>
    %31 = tpu.matmul %0, %30, %cst_22 {dimension_numbers = #tpu.dot_dimension_numbers<[1], [0], [0], [1], [0, 0, 1, 1], [], []>} : vector<128x32xf32>, vector<32x16xf32>, vector<128x16xf32> -> vector<128x16xf32>
    %c1_23 = arith.constant 1 : index
    %c0_24 = arith.constant 0 : index
    %c0_25 = arith.constant 0 : index
    %32 = vector.load %arg3[%c1_23, %c0_24, %c0_25] : memref<4x32x16xf32, #tpu.memory_space<vmem>>, vector<1x32x16xf32>
    %33 = vector.shape_cast %32 : vector<1x32x16xf32> to vector<32x16xf32>
    %cst_26 = arith.constant dense<0.000000e+00> : vector<128x16xf32>
    %34 = tpu.matmul %0, %33, %cst_26 {dimension_numbers = #tpu.dot_dimension_numbers<[1], [0], [0], [1], [0, 0, 1, 1], [], []>} : vector<128x32xf32>, vector<32x16xf32>, vector<128x16xf32> -> vector<128x16xf32>
    %c1_27 = arith.constant 1 : index
    %c0_28 = arith.constant 0 : index
    %c0_29 = arith.constant 0 : index
    %35 = vector.load %arg4[%c1_27, %c0_28, %c0_29] : memref<4x32x16xf32, #tpu.memory_space<vmem>>, vector<1x32x16xf32>
    %36 = vector.shape_cast %35 : vector<1x32x16xf32> to vector<32x16xf32>
    %cst_30 = arith.constant dense<0.000000e+00> : vector<128x16xf32>
    %37 = tpu.matmul %0, %36, %cst_30 {dimension_numbers = #tpu.dot_dimension_numbers<[1], [0], [0], [1], [0, 0, 1, 1], [], []>} : vector<128x32xf32>, vector<32x16xf32>, vector<128x16xf32> -> vector<128x16xf32>
    %38 = vector.shape_cast %31 : vector<128x16xf32> to vector<16x8x16xf32>
    %39 = vector.shape_cast %34 : vector<128x16xf32> to vector<16x8x16xf32>
    %40 = vector.shape_cast %37 : vector<128x16xf32> to vector<16x8x16xf32>
    %cst_31 = arith.constant dense<0.000000e+00> : vector<16x8x8xf32>
    %41 = tpu.matmul %38, %39, %cst_31 {dimension_numbers = #tpu.dot_dimension_numbers<[2], [2], [1], [1], [0, 0, 0, 1, 1, 1], [0], [0]>} : vector<16x8x16xf32>, vector<16x8x16xf32>, vector<16x8x8xf32> -> vector<16x8x8xf32>
    %cst_32 = arith.constant dense<0xFF800000> : vector<16x8xf32>
    %42 = vector.multi_reduction <maximumf>, %41, %cst_32 [2] : vector<16x8x8xf32> to vector<16x8xf32>
    %43 = vector.shape_cast %42 : vector<16x8xf32> to vector<16x8x1xf32>
    %44 = vector.broadcast %43 : vector<16x8x1xf32> to vector<16x8x8xf32>
    %45 = arith.subf %41, %44 : vector<16x8x8xf32>
    %46 = math.exp %45 : vector<16x8x8xf32>
    %cst_33 = arith.constant dense<0.000000e+00> : vector<16x8xf32>
    %47 = vector.multi_reduction <add>, %46, %cst_33 [2] : vector<16x8x8xf32> to vector<16x8xf32>
    %48 = vector.shape_cast %47 : vector<16x8xf32> to vector<16x8x1xf32>
    %49 = tpu.reciprocal %48 {approx = true} : vector<16x8x1xf32> -> vector<16x8x1xf32>
    %50 = vector.broadcast %49 : vector<16x8x1xf32> to vector<16x8x8xf32>
    %51 = arith.mulf %46, %50 : vector<16x8x8xf32>
    %cst_34 = arith.constant dense<0.000000e+00> : vector<16x8x16xf32>
    %52 = tpu.matmul %51, %40, %cst_34 {dimension_numbers = #tpu.dot_dimension_numbers<[2], [1], [1], [2], [0, 0, 0, 1, 1, 2], [0], [0]>} : vector<16x8x8xf32>, vector<16x8x16xf32>, vector<16x8x16xf32> -> vector<16x8x16xf32>
    %53 = vector.shape_cast %52 : vector<16x8x16xf32> to vector<128x16xf32>
    %c1_35 = arith.constant 1 : index
    %c0_36 = arith.constant 0 : index
    %c0_37 = arith.constant 0 : index
    %54 = vector.load %arg5[%c1_35, %c0_36, %c0_37] : memref<4x16x32xf32, #tpu.memory_space<vmem>>, vector<1x16x32xf32>
    %55 = vector.shape_cast %54 : vector<1x16x32xf32> to vector<16x32xf32>
    %cst_38 = arith.constant dense<0.000000e+00> : vector<128x32xf32>
    %56 = tpu.matmul %53, %55, %cst_38 {dimension_numbers = #tpu.dot_dimension_numbers<[1], [0], [0], [1], [0, 0, 1, 1], [], []>} : vector<128x16xf32>, vector<16x32xf32>, vector<128x32xf32> -> vector<128x32xf32>
    %57 = arith.addf %28, %56 : vector<128x32xf32>
    %c2 = arith.constant 2 : index
    %c0_39 = arith.constant 0 : index
    %c0_40 = arith.constant 0 : index
    %58 = vector.load %arg2[%c2, %c0_39, %c0_40] : memref<4x32x16xf32, #tpu.memory_space<vmem>>, vector<1x32x16xf32>
    %59 = vector.shape_cast %58 : vector<1x32x16xf32> to vector<32x16xf32>
    %cst_41 = arith.constant dense<0.000000e+00> : vector<128x16xf32>
    %60 = tpu.matmul %0, %59, %cst_41 {dimension_numbers = #tpu.dot_dimension_numbers<[1], [0], [0], [1], [0, 0, 1, 1], [], []>} : vector<128x32xf32>, vector<32x16xf32>, vector<128x16xf32> -> vector<128x16xf32>
    %c2_42 = arith.constant 2 : index
    %c0_43 = arith.constant 0 : index
    %c0_44 = arith.constant 0 : index
    %61 = vector.load %arg3[%c2_42, %c0_43, %c0_44] : memref<4x32x16xf32, #tpu.memory_space<vmem>>, vector<1x32x16xf32>
    %62 = vector.shape_cast %61 : vector<1x32x16xf32> to vector<32x16xf32>
    %cst_45 = arith.constant dense<0.000000e+00> : vector<128x16xf32>
    %63 = tpu.matmul %0, %62, %cst_45 {dimension_numbers = #tpu.dot_dimension_numbers<[1], [0], [0], [1], [0, 0, 1, 1], [], []>} : vector<128x32xf32>, vector<32x16xf32>, vector<128x16xf32> -> vector<128x16xf32>
    %c2_46 = arith.constant 2 : index
    %c0_47 = arith.constant 0 : index
    %c0_48 = arith.constant 0 : index
    %64 = vector.load %arg4[%c2_46, %c0_47, %c0_48] : memref<4x32x16xf32, #tpu.memory_space<vmem>>, vector<1x32x16xf32>
    %65 = vector.shape_cast %64 : vector<1x32x16xf32> to vector<32x16xf32>
    %cst_49 = arith.constant dense<0.000000e+00> : vector<128x16xf32>
    %66 = tpu.matmul %0, %65, %cst_49 {dimension_numbers = #tpu.dot_dimension_numbers<[1], [0], [0], [1], [0, 0, 1, 1], [], []>} : vector<128x32xf32>, vector<32x16xf32>, vector<128x16xf32> -> vector<128x16xf32>
    %67 = vector.shape_cast %60 : vector<128x16xf32> to vector<16x8x16xf32>
    %68 = vector.shape_cast %63 : vector<128x16xf32> to vector<16x8x16xf32>
    %69 = vector.shape_cast %66 : vector<128x16xf32> to vector<16x8x16xf32>
    %cst_50 = arith.constant dense<0.000000e+00> : vector<16x8x8xf32>
    %70 = tpu.matmul %67, %68, %cst_50 {dimension_numbers = #tpu.dot_dimension_numbers<[2], [2], [1], [1], [0, 0, 0, 1, 1, 1], [0], [0]>} : vector<16x8x16xf32>, vector<16x8x16xf32>, vector<16x8x8xf32> -> vector<16x8x8xf32>
    %cst_51 = arith.constant dense<0xFF800000> : vector<16x8xf32>
    %71 = vector.multi_reduction <maximumf>, %70, %cst_51 [2] : vector<16x8x8xf32> to vector<16x8xf32>
    %72 = vector.shape_cast %71 : vector<16x8xf32> to vector<16x8x1xf32>
    %73 = vector.broadcast %72 : vector<16x8x1xf32> to vector<16x8x8xf32>
    %74 = arith.subf %70, %73 : vector<16x8x8xf32>
    %75 = math.exp %74 : vector<16x8x8xf32>
    %cst_52 = arith.constant dense<0.000000e+00> : vector<16x8xf32>
    %76 = vector.multi_reduction <add>, %75, %cst_52 [2] : vector<16x8x8xf32> to vector<16x8xf32>
    %77 = vector.shape_cast %76 : vector<16x8xf32> to vector<16x8x1xf32>
    %78 = tpu.reciprocal %77 {approx = true} : vector<16x8x1xf32> -> vector<16x8x1xf32>
    %79 = vector.broadcast %78 : vector<16x8x1xf32> to vector<16x8x8xf32>
    %80 = arith.mulf %75, %79 : vector<16x8x8xf32>
    %cst_53 = arith.constant dense<0.000000e+00> : vector<16x8x16xf32>
    %81 = tpu.matmul %80, %69, %cst_53 {dimension_numbers = #tpu.dot_dimension_numbers<[2], [1], [1], [2], [0, 0, 0, 1, 1, 2], [0], [0]>} : vector<16x8x8xf32>, vector<16x8x16xf32>, vector<16x8x16xf32> -> vector<16x8x16xf32>
    %82 = vector.shape_cast %81 : vector<16x8x16xf32> to vector<128x16xf32>
    %c2_54 = arith.constant 2 : index
    %c0_55 = arith.constant 0 : index
    %c0_56 = arith.constant 0 : index
    %83 = vector.load %arg5[%c2_54, %c0_55, %c0_56] : memref<4x16x32xf32, #tpu.memory_space<vmem>>, vector<1x16x32xf32>
    %84 = vector.shape_cast %83 : vector<1x16x32xf32> to vector<16x32xf32>
    %cst_57 = arith.constant dense<0.000000e+00> : vector<128x32xf32>
    %85 = tpu.matmul %82, %84, %cst_57 {dimension_numbers = #tpu.dot_dimension_numbers<[1], [0], [0], [1], [0, 0, 1, 1], [], []>} : vector<128x16xf32>, vector<16x32xf32>, vector<128x32xf32> -> vector<128x32xf32>
    %86 = arith.addf %57, %85 : vector<128x32xf32>
    %c3 = arith.constant 3 : index
    %c0_58 = arith.constant 0 : index
    %c0_59 = arith.constant 0 : index
    %87 = vector.load %arg2[%c3, %c0_58, %c0_59] : memref<4x32x16xf32, #tpu.memory_space<vmem>>, vector<1x32x16xf32>
    %88 = vector.shape_cast %87 : vector<1x32x16xf32> to vector<32x16xf32>
    %cst_60 = arith.constant dense<0.000000e+00> : vector<128x16xf32>
    %89 = tpu.matmul %0, %88, %cst_60 {dimension_numbers = #tpu.dot_dimension_numbers<[1], [0], [0], [1], [0, 0, 1, 1], [], []>} : vector<128x32xf32>, vector<32x16xf32>, vector<128x16xf32> -> vector<128x16xf32>
    %c3_61 = arith.constant 3 : index
    %c0_62 = arith.constant 0 : index
    %c0_63 = arith.constant 0 : index
    %90 = vector.load %arg3[%c3_61, %c0_62, %c0_63] : memref<4x32x16xf32, #tpu.memory_space<vmem>>, vector<1x32x16xf32>
    %91 = vector.shape_cast %90 : vector<1x32x16xf32> to vector<32x16xf32>
    %cst_64 = arith.constant dense<0.000000e+00> : vector<128x16xf32>
    %92 = tpu.matmul %0, %91, %cst_64 {dimension_numbers = #tpu.dot_dimension_numbers<[1], [0], [0], [1], [0, 0, 1, 1], [], []>} : vector<128x32xf32>, vector<32x16xf32>, vector<128x16xf32> -> vector<128x16xf32>
    %c3_65 = arith.constant 3 : index
    %c0_66 = arith.constant 0 : index
    %c0_67 = arith.constant 0 : index
    %93 = vector.load %arg4[%c3_65, %c0_66, %c0_67] : memref<4x32x16xf32, #tpu.memory_space<vmem>>, vector<1x32x16xf32>
    %94 = vector.shape_cast %93 : vector<1x32x16xf32> to vector<32x16xf32>
    %cst_68 = arith.constant dense<0.000000e+00> : vector<128x16xf32>
    %95 = tpu.matmul %0, %94, %cst_68 {dimension_numbers = #tpu.dot_dimension_numbers<[1], [0], [0], [1], [0, 0, 1, 1], [], []>} : vector<128x32xf32>, vector<32x16xf32>, vector<128x16xf32> -> vector<128x16xf32>
    %96 = vector.shape_cast %89 : vector<128x16xf32> to vector<16x8x16xf32>
    %97 = vector.shape_cast %92 : vector<128x16xf32> to vector<16x8x16xf32>
    %98 = vector.shape_cast %95 : vector<128x16xf32> to vector<16x8x16xf32>
    %cst_69 = arith.constant dense<0.000000e+00> : vector<16x8x8xf32>
    %99 = tpu.matmul %96, %97, %cst_69 {dimension_numbers = #tpu.dot_dimension_numbers<[2], [2], [1], [1], [0, 0, 0, 1, 1, 1], [0], [0]>} : vector<16x8x16xf32>, vector<16x8x16xf32>, vector<16x8x8xf32> -> vector<16x8x8xf32>
    %cst_70 = arith.constant dense<0xFF800000> : vector<16x8xf32>
    %100 = vector.multi_reduction <maximumf>, %99, %cst_70 [2] : vector<16x8x8xf32> to vector<16x8xf32>
    %101 = vector.shape_cast %100 : vector<16x8xf32> to vector<16x8x1xf32>
    %102 = vector.broadcast %101 : vector<16x8x1xf32> to vector<16x8x8xf32>
    %103 = arith.subf %99, %102 : vector<16x8x8xf32>
    %104 = math.exp %103 : vector<16x8x8xf32>
    %cst_71 = arith.constant dense<0.000000e+00> : vector<16x8xf32>
    %105 = vector.multi_reduction <add>, %104, %cst_71 [2] : vector<16x8x8xf32> to vector<16x8xf32>
    %106 = vector.shape_cast %105 : vector<16x8xf32> to vector<16x8x1xf32>
    %107 = tpu.reciprocal %106 {approx = true} : vector<16x8x1xf32> -> vector<16x8x1xf32>
    %108 = vector.broadcast %107 : vector<16x8x1xf32> to vector<16x8x8xf32>
    %109 = arith.mulf %104, %108 : vector<16x8x8xf32>
    %cst_72 = arith.constant dense<0.000000e+00> : vector<16x8x16xf32>
    %110 = tpu.matmul %109, %98, %cst_72 {dimension_numbers = #tpu.dot_dimension_numbers<[2], [1], [1], [2], [0, 0, 0, 1, 1, 2], [0], [0]>} : vector<16x8x8xf32>, vector<16x8x16xf32>, vector<16x8x16xf32> -> vector<16x8x16xf32>
    %111 = vector.shape_cast %110 : vector<16x8x16xf32> to vector<128x16xf32>
    %c3_73 = arith.constant 3 : index
    %c0_74 = arith.constant 0 : index
    %c0_75 = arith.constant 0 : index
    %112 = vector.load %arg5[%c3_73, %c0_74, %c0_75] : memref<4x16x32xf32, #tpu.memory_space<vmem>>, vector<1x16x32xf32>
    %113 = vector.shape_cast %112 : vector<1x16x32xf32> to vector<16x32xf32>
    %cst_76 = arith.constant dense<0.000000e+00> : vector<128x32xf32>
    %114 = tpu.matmul %111, %113, %cst_76 {dimension_numbers = #tpu.dot_dimension_numbers<[1], [0], [0], [1], [0, 0, 1, 1], [], []>} : vector<128x16xf32>, vector<16x32xf32>, vector<128x32xf32> -> vector<128x32xf32>
    %115 = arith.addf %86, %114 : vector<128x32xf32>
    %c0_77 = arith.constant 0 : index
    %c0_78 = arith.constant 0 : index
    %116 = vector.load %arg6[%c0_77, %c0_78] : memref<128x32xf32, #tpu.memory_space<vmem>>, vector<128x32xf32>
    tpu.vector_store %arg6[%c0_77, %c0_78], %115 {strides = array<i32>} : memref<128x32xf32, #tpu.memory_space<vmem>>, vector<128x32xf32>,
    return
  }
  func.func @transform_0(%arg0: i32) -> (i32, i32) {
    %c0_i32 = arith.constant 0 : i32
    %c0_i32_0 = arith.constant 0 : i32
    return %arg0, %c0_i32 : i32, i32
  }
  func.func @transform_1(%arg0: i32) -> (i32, i32, i32) {
    %c0_i32 = arith.constant 0 : i32
    %c0_i32_0 = arith.constant 0 : i32
    %c0_i32_1 = arith.constant 0 : i32
    %c0_i32_2 = arith.constant 0 : i32
    return %c0_i32, %c0_i32_0, %c0_i32_1 : i32, i32, i32
  }
  func.func @transform_2(%arg0: i32) -> (i32, i32, i32) {
    %c0_i32 = arith.constant 0 : i32
    %c0_i32_0 = arith.constant 0 : i32
    %c0_i32_1 = arith.constant 0 : i32
    %c0_i32_2 = arith.constant 0 : i32
    return %c0_i32, %c0_i32_0, %c0_i32_1 : i32, i32, i32
  }
  func.func @transform_3(%arg0: i32) -> (i32, i32, i32) {
    %c0_i32 = arith.constant 0 : i32
    %c0_i32_0 = arith.constant 0 : i32
    %c0_i32_1 = arith.constant 0 : i32
    %c0_i32_2 = arith.constant 0 : i32
    return %c0_i32, %c0_i32_0, %c0_i32_1 : i32, i32, i32
  }
  func.func @transform_4(%arg0: i32) -> (i32, i32, i32) {
    %c0_i32 = arith.constant 0 : i32
    %c0_i32_0 = arith.constant 0 : i32
    %c0_i32_1 = arith.constant 0 : i32
    %c0_i32_2 = arith.constant 0 : i32
    return %c0_i32, %c0_i32_0, %c0_i32_1 : i32, i32, i32
  }
  func.func @transform_5(%arg0: i32) -> (i32, i32) {
    %c0_i32 = arith.constant 0 : i32
    %c0_i32_0 = arith.constant 0 : i32
    return %arg0, %c0_i32 : i32, i32
  }
}

</mosaic_0001>

<llo_original>
// kernel: tpu_custom_call.1
$region0: #{tpu_custom_call.1}
  #allocation0 [shape = 'u32[]', space=smem, size = 0x4, offset = 0x4, fixed_abs, tag = 'smem constant byte address 0x4 - core index']
  #allocation1 [shape = 'u32[72,128]{1,0:T(1,128)}', space=vmem, size = 0x9000, scoped, tag = 'internal scratch']
  %s0 = inlined_call_operand.vmem [shape: f32[512,32], index: 0, kind: input, shape index: {}]
  %s1 = inlined_call_operand.vmem [shape: f32[4,32,16], index: 1, kind: input, shape index: {}]
  %s2 = inlined_call_operand.vmem [shape: f32[4,32,16], index: 2, kind: input, shape index: {}]
  %s3 = inlined_call_operand.vmem [shape: f32[4,32,16], index: 3, kind: input, shape index: {}]
  %s4 = inlined_call_operand.vmem [shape: f32[4,16,32], index: 4, kind: input, shape index: {}]
  %s5 = inlined_call_operand.vmem [shape: f32[512,32], index: 5, kind: output, shape index: {}]
  %s6 = sld [smem:[#allocation0]]
  $region53: #{tpu_custom_call.1} parent=0
    _
  %s8 = ssub.s32 1, %s6
  %s9 = scalar_select 0, %s8, %s6
  loop: start=0, step=1, limit=6
  $region2: #{tpu_custom_call.1} parent=0 // loop_pre_header
    _
  $region3: #{tpu_custom_call.1} parent=0 // loop_header
    %s11 = sphi 0, %s15
    %p12 = scmp.ge.s32.totalorder %s11, 6
    %s21 = sphi 0, %s23
    %s24 = sphi 0, %s21
    %s25 = sphi 0, %s24
    %s41 = sphi 0, %s25
    %s45 = sphi 0, %s45
    %s47 = sphi 0, %s45
    %s48 = sphi 0, %s47
    %s62 = sphi 0, %s48
    %s66 = sphi 0, %s66
    %s68 = sphi 0, %s66
    %s69 = sphi 0, %s68
    %s83 = sphi 0, %s69
    %s87 = sphi 0, %s87
    %s89 = sphi 0, %s87
    %s90 = sphi 0, %s89
    %s104 = sphi 0, %s90
    %s108 = sphi 0, %s108
    %s110 = sphi 0, %s108
    %s111 = sphi 0, %s110
    %s125 = sphi 0, %s111
    %s131 = sphi 0, %s133
    %s134 = sphi 0, %s131
    %s135 = sphi 0, %s134
    %s151 = sphi 0, %s135
  $region4: #{tpu_custom_call.1} parent=0 // loop_header_branch
    %14 = sbr.rel (%p12) target = $region8
  $region5: #{tpu_custom_call.1} parent=0 // loop_body
    %s16 = ssub.s32 %s11, 1
    %s17 = ssub.s32 %s11, 2
    %s18 = sadd.s32 %s11, 1
    %s19 = ssub.s32 %s11, %s18
    %p20 = scmp.eq.s32.totalorder %s19, 0
    %s22 = sadd.s32 %s21, 1
    %s23 = scalar_select %p20, %s21, %s22
    %p26 = pneg %p20
    %p27 = scmp.eq.s32.totalorder %s11, 3
    %p28 = por %p26, %p27
    %p29 = scmp.ne.s32.totalorder %s21, %s24
    %p30 = scmp.eq.s32.totalorder %s11, 0
    %p31 = por %p29, %p30
    %p32 = scmp.ne.s32.totalorder %s21, %s24
    %p33 = scmp.eq.s32.totalorder %s16, 3
    %p34 = por %p32, %p33
    %p35 = scmp.ne.s32.totalorder %s24, %s25
    %p36 = scmp.eq.s32.totalorder %s16, 0
    %p37 = por %p35, %p36
    %p38 = scmp.ne.s32.totalorder %s24, %s25
    %p39 = scmp.eq.s32.totalorder %s17, 3
    %p40 = por %p38, %p39
    %p42 = scmp.ne.s32.totalorder %s25, %s41
    %p43 = scmp.eq.s32.totalorder %s17, 0
    %p44 = por %p42, %p43
    %s46 = sadd.s32 %s45, 1
    %p49 = scmp.eq.s32.totalorder %s11, 3
    %p50 = scmp.ne.s32.totalorder %s45, %s47
    %p51 = scmp.eq.s32.totalorder %s11, 0
    %p52 = por %p50, %p51
    %p53 = scmp.ne.s32.totalorder %s45, %s47
    %p54 = scmp.eq.s32.totalorder %s16, 3
    %p55 = por %p53, %p54
    %p56 = scmp.ne.s32.totalorder %s47, %s48
    %p57 = scmp.eq.s32.totalorder %s16, 0
    %p58 = por %p56, %p57
    %p59 = scmp.ne.s32.totalorder %s47, %s48
    %p60 = scmp.eq.s32.totalorder %s17, 3
    %p61 = por %p59, %p60
    %p63 = scmp.ne.s32.totalorder %s48, %s62
    %p64 = scmp.eq.s32.totalorder %s17, 0
    %p65 = por %p63, %p64
    %s67 = sadd.s32 %s66, 1
    %p70 = scmp.eq.s32.totalorder %s11, 3
    %p71 = scmp.ne.s32.totalorder %s66, %s68
    %p72 = scmp.eq.s32.totalorder %s11, 0
    %p73 = por %p71, %p72
    %p74 = scmp.ne.s32.totalorder %s66, %s68
    %p75 = scmp.eq.s32.totalorder %s16, 3
    %p76 = por %p74, %p75
    %p77 = scmp.ne.s32.totalorder %s68, %s69
    %p78 = scmp.eq.s32.totalorder %s16, 0
    %p79 = por %p77, %p78
    %p80 = scmp.ne.s32.totalorder %s68, %s69
    %p81 = scmp.eq.s32.totalorder %s17, 3
    %p82 = por %p80, %p81
    %p84 = scmp.ne.s32.totalorder %s69, %s83
    %p85 = scmp.eq.s32.totalorder %s17, 0
    %p86 = por %p84, %p85
    %s88 = sadd.s32 %s87, 1
    %p91 = scmp.eq.s32.totalorder %s11, 3
    %p92 = scmp.ne.s32.totalorder %s87, %s89
    %p93 = scmp.eq.s32.totalorder %s11, 0
    %p94 = por %p92, %p93
    %p95 = scmp.ne.s32.totalorder %s87, %s89
    %p96 = scmp.eq.s32.totalorder %s16, 3
    %p97 = por %p95, %p96
    %p98 = scmp.ne.s32.totalorder %s89, %s90
    %p99 = scmp.eq.s32.totalorder %s16, 0
    %p100 = por %p98, %p99
    %p101 = scmp.ne.s32.totalorder %s89, %s90
    %p102 = scmp.eq.s32.totalorder %s17, 3
    %p103 = por %p101, %p102
    %p105 = scmp.ne.s32.totalorder %s90, %s104
    %p106 = scmp.eq.s32.totalorder %s17, 0
    %p107 = por %p105, %p106
    %s109 = sadd.s32 %s108, 1
    %p112 = scmp.eq.s32.totalorder %s11, 3
    %p113 = scmp.ne.s32.totalorder %s108, %s110
    %p114 = scmp.eq.s32.totalorder %s11, 0
    %p115 = por %p113, %p114
    %p116 = scmp.ne.s32.totalorder %s108, %s110
    %p117 = scmp.eq.s32.totalorder %s16, 3
    %p118 = por %p116, %p117
    %p119 = scmp.ne.s32.totalorder %s110, %s111
    %p120 = scmp.eq.s32.totalorder %s16, 0
    %p121 = por %p119, %p120
    %p122 = scmp.ne.s32.totalorder %s110, %s111
    %p123 = scmp.eq.s32.totalorder %s17, 3
    %p124 = por %p122, %p123
    %p126 = scmp.ne.s32.totalorder %s111, %s125
    %p127 = scmp.eq.s32.totalorder %s17, 0
    %p128 = por %p126, %p127
    %s129 = ssub.s32 %s11, %s18
    %p130 = scmp.eq.s32.totalorder %s129, 0
    %s132 = sadd.s32 %s131, 1
    %s133 = scalar_select %p130, %s131, %s132
    %p136 = pneg %p130
    %p137 = scmp.eq.s32.totalorder %s11, 3
    %p138 = por %p136, %p137
    %p139 = scmp.ne.s32.totalorder %s131, %s134
    %p140 = scmp.eq.s32.totalorder %s11, 0
    %p141 = por %p139, %p140
    %p142 = scmp.ne.s32.totalorder %s131, %s134
    %p143 = scmp.eq.s32.totalorder %s16, 3
    %p144 = por %p142, %p143
    %p145 = scmp.ne.s32.totalorder %s134, %s135
    %p146 = scmp.eq.s32.totalorder %s16, 0
    %p147 = por %p145, %p146
    %p148 = scmp.ne.s32.totalorder %s134, %s135
    %p149 = scmp.eq.s32.totalorder %s17, 3
    %p150 = por %p148, %p149
    %p152 = scmp.ne.s32.totalorder %s135, %s151
    %p153 = scmp.eq.s32.totalorder %s17, 0
    %p154 = por %p152, %p153
    %p155 = scmp.le.s32.totalorder 1, %s11
    %p156 = scmp.lt.s32.totalorder %s11, 5
    %p157 = pnand %p155, %p156
    %p158 = pneg %p157
    // Predicated region
    $region9: #{tpu_custom_call.1} parent=5 // pred_check
      _
    $region10: #{tpu_custom_call.1} parent=5 // pred_check_branch
      %160 = sbr.rel (%p157) target = $region12
    $region11: #{tpu_custom_call.1} parent=5 // pred_region
      %s161 = ssub.s32 %s11, 1
      // Predicated region
      $region13: #{tpu_custom_call.1} parent=11 // pred_check
        %p162 = pneg %p58
      $region14: #{tpu_custom_call.1} parent=11 // pred_check_branch
        %164 = sbr.rel (%p162) target = $region16
      $region15: #{tpu_custom_call.1} parent=11 // pred_region
        _
      $region16: #{tpu_custom_call.1} parent=11 // pred_fallthru
        _
      // Predicated region
      $region17: #{tpu_custom_call.1} parent=11 // pred_check
        %p165 = pneg %p79
      $region18: #{tpu_custom_call.1} parent=11 // pred_check_branch
        %167 = sbr.rel (%p165) target = $region20
      $region19: #{tpu_custom_call.1} parent=11 // pred_region
        _
      $region20: #{tpu_custom_call.1} parent=11 // pred_fallthru
        _
      // Predicated region
      $region21: #{tpu_custom_call.1} parent=11 // pred_check
        %p168 = pneg %p100
      $region22: #{tpu_custom_call.1} parent=11 // pred_check_branch
        %170 = sbr.rel (%p168) target = $region24
      $region23: #{tpu_custom_call.1} parent=11 // pred_region
        _
      $region24: #{tpu_custom_call.1} parent=11 // pred_fallthru
        _
      // Predicated region
      $region25: #{tpu_custom_call.1} parent=11 // pred_check
        %p171 = pneg %p121
      $region26: #{tpu_custom_call.1} parent=11 // pred_check_branch
        %173 = sbr.rel (%p171) target = $region28
      $region27: #{tpu_custom_call.1} parent=11 // pred_region
        _
      $region28: #{tpu_custom_call.1} parent=11 // pred_fallthru
        _
    $region12: #{tpu_custom_call.1} parent=5 // pred_fallthru
      _
    %p174 = scmp.lt.s32.totalorder %s11, 4
    // Predicated region
    $region29: #{tpu_custom_call.1} parent=5 // pred_check
      %p175 = pneg %p174
    $region30: #{tpu_custom_call.1} parent=5 // pred_check_branch
      %177 = sbr.rel (%p175) target = $region32
    $region31: #{tpu_custom_call.1} parent=5 // pred_region
      // Predicated region
      $region33: #{tpu_custom_call.1} parent=31 // pred_check
        %p178 = pneg %p31
      $region34: #{tpu_custom_call.1} parent=31 // pred_check_branch
        %180 = sbr.rel (%p178) target = $region36
      $region35: #{tpu_custom_call.1} parent=31 // pred_region
        %s181 = smul.u32 16, %s11
        %p182 = scmp.lt.s32.totalorder %s181, 63
        %s183 = scalar_select %p182, %s181, 63
        %s184 = smul.addr %s183, 8
        %s185 = scalar_lea.vmem %s0, %s184
        %s186 = smul.u32 16, %s11
      $region36: #{tpu_custom_call.1} parent=31 // pred_fallthru
        _
    $region32: #{tpu_custom_call.1} parent=5 // pred_fallthru
      _
    %p187 = scmp.le.s32.totalorder 1, %s11
    %p188 = scmp.lt.s32.totalorder %s11, 5
    %p189 = pnand %p187, %p188
    %p190 = pneg %p189
    // Predicated region
    $region37: #{tpu_custom_call.1} parent=5 // pred_check
      _
    $region38: #{tpu_custom_call.1} parent=5 // pred_check_branch
      %192 = sbr.rel (%p189) target = $region40
    $region39: #{tpu_custom_call.1} parent=5 // pred_region
      %s193 = ssub.s32 %s11, 1
      %s194 = smul.u32 16, %s16
      %p195 = scmp.lt.s32.totalorder %s194, 63
      %s196 = scalar_select %p195, %s194, 63
      %s197 = smul.addr %s196, 8
      %s198 = scalar_lea.vmem %s0, %s197
      %p199 = pneg %p37
      %p200 = pneg %p34
      %p201 = pneg %p58
      %p202 = pneg %p55
      %p203 = pneg %p79
      %p204 = pneg %p76
      %p205 = pneg %p100
      %p206 = pneg %p97
      %p207 = pneg %p121
      %p208 = pneg %p118
      %p209 = pneg %p147
      %p210 = pneg %p144
      %s211 = smul.u32 16, %s16
      %p212 = scmp.lt.s32.totalorder %s211, 63
      %s213 = scalar_select %p212, %s211, 63
      %s214 = smul.addr %s213, 8
      %s215 = scalar_lea.vmem %s5, %s214
      %s216 = smul.u32 16, %s16
      %p217 = scmp.lt.s32.totalorder %s216, 63
      %s218 = scalar_select %p217, %s216, 63
      %s219 = smul.addr %s218, 8
      %s220 = scalar_lea.vmem %s0, %s219
      %s221 = smul.u32 16, %s16
      %s222 = smul.u32 16, %s16
      %p223 = scmp.lt.s32.totalorder %s222, 63
      %s224 = scalar_select %p223, %s222, 63
      %s225 = smul.addr %s224, 8
      %s226 = scalar_lea.vmem %s5, %s225
      %s227 = smul.u32 16, %s16
      %v228 = vld [vmem:[%s220] sm:$0xff]
      %v229 = vld [vmem:[%s220 + $0x8] sm:$0xff]
      %v230 = vld [vmem:[%s220 + $0x10] sm:$0xff]
      %v231 = vld [vmem:[%s220 + $0x18] sm:$0xff]
      %v232 = vld [vmem:[%s220 + $0x20] sm:$0xff]
      %v233 = vld [vmem:[%s220 + $0x28] sm:$0xff]
      %v234 = vld [vmem:[%s220 + $0x30] sm:$0xff]
      %v235 = vld [vmem:[%s220 + $0x38] sm:$0xff]
      %v236 = vld [vmem:[%s220 + $0x40] sm:$0xff]
      %v237 = vld [vmem:[%s220 + $0x48] sm:$0xff]
      %v238 = vld [vmem:[%s220 + $0x50] sm:$0xff]
      %v239 = vld [vmem:[%s220 + $0x58] sm:$0xff]
      %v240 = vld [vmem:[%s220 + $0x60] sm:$0xff]
      %v241 = vld [vmem:[%s220 + $0x68] sm:$0xff]
      %v242 = vld [vmem:[%s220 + $0x70] sm:$0xff]
      %v243 = vld [vmem:[%s220 + $0x78] sm:$0xff]
      %v244 = vld [vmem:[%s1] sm:$0xff]
      %v245 = vld [vmem:[%s1 + $0x8] sm:$0xff]
      %v246 = vld [vmem:[%s1 + $0x10] sm:$0xff]
      %v247 = vld [vmem:[%s1 + $0x18] sm:$0xff]
      %vm248 = vcmask 261120
      %v250 = vsel %vm248, %v228, 0
      %v253 = vsel %vm248, %v229, 0
      %v256 = vsel %vm248, %v230, 0
      %v259 = vsel %vm248, %v231, 0
      %v262 = vsel %vm248, %v232, 0
      %v265 = vsel %vm248, %v233, 0
      %v268 = vsel %vm248, %v234, 0
      %v271 = vsel %vm248, %v235, 0
      %v274 = vsel %vm248, %v236, 0
      %v277 = vsel %vm248, %v237, 0
      %v280 = vsel %vm248, %v238, 0
      %v283 = vsel %vm248, %v239, 0
      %v286 = vsel %vm248, %v240, 0
      %v289 = vsel %vm248, %v241, 0
      %v292 = vsel %vm248, %v242, 0
      %v295 = vsel %vm248, %v243, 0
      %297 = vmatpush.msra.mxu0 0.0
      %298 = vmatpush.msra.mxu0 0.0
      %299 = vmatpush.msra.mxu0 0.0
      %300 = vmatpush.msra.mxu0 0.0
      %301 = vmatpush.msra.mxu0 0.0
      %302 = vmatpush.msra.mxu0 0.0
      %303 = vmatpush.msra.mxu0 0.0
      %304 = vmatpush.msra.mxu0 0.0
      %305 = vmatpush.msra.mxu0 0.0
      %306 = vmatpush.msra.mxu0 0.0
      %307 = vmatpush.msra.mxu0 0.0
      %308 = vmatpush.msra.mxu0 0.0
      %309 = vmatpush.msra.mxu0 %v247
      %310 = vmatpush.msra.mxu0 %v246
      %311 = vmatpush.msra.mxu0 %v245
      %312 = vmatpush.msra.mxu0 %v244
      %313 = vmatmul.f32.gmra.mxu0 %v250
      %v314 = vpop.f32.mrf.mxu0
      %v315 = vadd.f32 0.0, %v314
      %316 = vmatmul.f32.gmra.mxu0 %v253
      %v317 = vpop.f32.mrf.mxu0
      %v318 = vadd.f32 0.0, %v317
      %319 = vmatmul.f32.gmra.mxu0 %v256
      %v320 = vpop.f32.mrf.mxu0
      %v321 = vadd.f32 0.0, %v320
      %322 = vmatmul.f32.gmra.mxu0 %v259
      %v323 = vpop.f32.mrf.mxu0
      %v324 = vadd.f32 0.0, %v323
      %325 = vmatmul.f32.gmra.mxu0 %v262
      %v326 = vpop.f32.mrf.mxu0
      %v327 = vadd.f32 0.0, %v326
      %328 = vmatmul.f32.gmra.mxu0 %v265
      %v329 = vpop.f32.mrf.mxu0
      %v330 = vadd.f32 0.0, %v329
      %331 = vmatmul.f32.gmra.mxu0 %v268
      %v332 = vpop.f32.mrf.mxu0
      %v333 = vadd.f32 0.0, %v332
      %334 = vmatmul.f32.gmra.mxu0 %v271
      %v335 = vpop.f32.mrf.mxu0
      %v336 = vadd.f32 0.0, %v335
      %337 = vmatmul.f32.gmra.mxu0 %v274
      %v338 = vpop.f32.mrf.mxu0
      %v339 = vadd.f32 0.0, %v338
      %340 = vmatmul.f32.gmra.mxu0 %v277
      %v341 = vpop.f32.mrf.mxu0
      %v342 = vadd.f32 0.0, %v341
      %343 = vmatmul.f32.gmra.mxu0 %v280
      %v344 = vpop.f32.mrf.mxu0
      %v345 = vadd.f32 0.0, %v344
      %346 = vmatmul.f32.gmra.mxu0 %v283
      %v347 = vpop.f32.mrf.mxu0
      %v348 = vadd.f32 0.0, %v347
      %349 = vmatmul.f32.gmra.mxu0 %v286
      %v350 = vpop.f32.mrf.mxu0
      %v351 = vadd.f32 0.0, %v350
      %352 = vmatmul.f32.gmra.mxu0 %v289
      %v353 = vpop.f32.mrf.mxu0
      %v354 = vadd.f32 0.0, %v353
      %355 = vmatmul.f32.gmra.mxu0 %v292
      %v356 = vpop.f32.mrf.mxu0
      %v357 = vadd.f32 0.0, %v356
      %358 = vmatmul.f32.gmra.mxu0 %v295
      %v359 = vpop.f32.mrf.mxu0
      %v360 = vadd.f32 0.0, %v359
      %361 = vdwg.mxu0
      %v362 = vld [vmem:[%s2] sm:$0xff]
      %v363 = vld [vmem:[%s2 + $0x8] sm:$0xff]
      %v364 = vld [vmem:[%s2 + $0x10] sm:$0xff]
      %v365 = vld [vmem:[%s2 + $0x18] sm:$0xff]
      %366 = vmatpush.msra.mxu0 0.0
      %367 = vmatpush.msra.mxu0 0.0
      %368 = vmatpush.msra.mxu0 0.0
      %369 = vmatpush.msra.mxu0 0.0
      %370 = vmatpush.msra.mxu0 0.0
      %371 = vmatpush.msra.mxu0 0.0
      %372 = vmatpush.msra.mxu0 0.0
      %373 = vmatpush.msra.mxu0 0.0
      %374 = vmatpush.msra.mxu0 0.0
      %375 = vmatpush.msra.mxu0 0.0
      %376 = vmatpush.msra.mxu0 0.0
      %377 = vmatpush.msra.mxu0 0.0
      %378 = vmatpush.msra.mxu0 %v365
      %379 = vmatpush.msra.mxu0 %v364
      %380 = vmatpush.msra.mxu0 %v363
      %381 = vmatpush.msra.mxu0 %v362
      %382 = vmatmul.f32.gmra.mxu0 %v250
      %v383 = vpop.f32.mrf.mxu0
      %v384 = vadd.f32 0.0, %v383
      %385 = vmatmul.f32.gmra.mxu0 %v253
      %v386 = vpop.f32.mrf.mxu0
      %v387 = vadd.f32 0.0, %v386
      %388 = vmatmul.f32.gmra.mxu0 %v256
      %v389 = vpop.f32.mrf.mxu0
      %v390 = vadd.f32 0.0, %v389
      %391 = vmatmul.f32.gmra.mxu0 %v259
      %v392 = vpop.f32.mrf.mxu0
      %v393 = vadd.f32 0.0, %v392
      %394 = vmatmul.f32.gmra.mxu0 %v262
      %v395 = vpop.f32.mrf.mxu0
      %v396 = vadd.f32 0.0, %v395
      %397 = vmatmul.f32.gmra.mxu0 %v265
      %v398 = vpop.f32.mrf.mxu0
      %v399 = vadd.f32 0.0, %v398
      %400 = vmatmul.f32.gmra.mxu0 %v268
      %v401 = vpop.f32.mrf.mxu0
      %v402 = vadd.f32 0.0, %v401
      %403 = vmatmul.f32.gmra.mxu0 %v271
      %v404 = vpop.f32.mrf.mxu0
      %v405 = vadd.f32 0.0, %v404
      %406 = vmatmul.f32.gmra.mxu0 %v274
      %v407 = vpop.f32.mrf.mxu0
      %v408 = vadd.f32 0.0, %v407
      %409 = vmatmul.f32.gmra.mxu0 %v277
      %v410 = vpop.f32.mrf.mxu0
      %v411 = vadd.f32 0.0, %v410
      %412 = vmatmul.f32.gmra.mxu0 %v280
      %v413 = vpop.f32.mrf.mxu0
      %v414 = vadd.f32 0.0, %v413
      %415 = vmatmul.f32.gmra.mxu0 %v283
      %v416 = vpop.f32.mrf.mxu0
      %v417 = vadd.f32 0.0, %v416
      %418 = vmatmul.f32.gmra.mxu0 %v286
      %v419 = vpop.f32.mrf.mxu0
      %v420 = vadd.f32 0.0, %v419
      %421 = vmatmul.f32.gmra.mxu0 %v289
      %v422 = vpop.f32.mrf.mxu0
      %v423 = vadd.f32 0.0, %v422
      %424 = vmatmul.f32.gmra.mxu0 %v292
      %v425 = vpop.f32.mrf.mxu0
      %v426 = vadd.f32 0.0, %v425
      %427 = vmatmul.f32.gmra.mxu0 %v295
      %v428 = vpop.f32.mrf.mxu0
      %v429 = vadd.f32 0.0, %v428
      %430 = vdwg.mxu0
      %v431 = vld [vmem:[%s3] sm:$0xff]
      %v432 = vld [vmem:[%s3 + $0x8] sm:$0xff]
      %v433 = vld [vmem:[%s3 + $0x10] sm:$0xff]
      %v434 = vld [vmem:[%s3 + $0x18] sm:$0xff]
      %435 = vmatpush.msra.mxu0 0.0
      %436 = vmatpush.msra.mxu0 0.0
      %437 = vmatpush.msra.mxu0 0.0
      %438 = vmatpush.msra.mxu0 0.0
      %439 = vmatpush.msra.mxu0 0.0
      %440 = vmatpush.msra.mxu0 0.0
      %441 = vmatpush.msra.mxu0 0.0
      %442 = vmatpush.msra.mxu0 0.0
      %443 = vmatpush.msra.mxu0 0.0
      %444 = vmatpush.msra.mxu0 0.0
      %445 = vmatpush.msra.mxu0 0.0
      %446 = vmatpush.msra.mxu0 0.0
      %447 = vmatpush.msra.mxu0 %v434
      %448 = vmatpush.msra.mxu0 %v433
      %449 = vmatpush.msra.mxu0 %v432
      %450 = vmatpush.msra.mxu0 %v431
      %451 = vmatmul.f32.gmra.mxu0 %v250
      %v452 = vpop.f32.mrf.mxu0
      %v453 = vadd.f32 0.0, %v452
      %454 = vmatmul.f32.gmra.mxu0 %v253
      %v455 = vpop.f32.mrf.mxu0
      %v456 = vadd.f32 0.0, %v455
      %457 = vmatmul.f32.gmra.mxu0 %v256
      %v458 = vpop.f32.mrf.mxu0
      %v459 = vadd.f32 0.0, %v458
      %460 = vmatmul.f32.gmra.mxu0 %v259
      %v461 = vpop.f32.mrf.mxu0
      %v462 = vadd.f32 0.0, %v461
      %463 = vmatmul.f32.gmra.mxu0 %v262
      %v464 = vpop.f32.mrf.mxu0
      %v465 = vadd.f32 0.0, %v464
      %466 = vmatmul.f32.gmra.mxu0 %v265
      %v467 = vpop.f32.mrf.mxu0
      %v468 = vadd.f32 0.0, %v467
      %469 = vmatmul.f32.gmra.mxu0 %v268
      %v470 = vpop.f32.mrf.mxu0
      %v471 = vadd.f32 0.0, %v470
      %472 = vmatmul.f32.gmra.mxu0 %v271
      %v473 = vpop.f32.mrf.mxu0
      %v474 = vadd.f32 0.0, %v473
      %475 = vmatmul.f32.gmra.mxu0 %v274
      %v476 = vpop.f32.mrf.mxu0
      %v477 = vadd.f32 0.0, %v476
      %478 = vmatmul.f32.gmra.mxu0 %v277
      %v479 = vpop.f32.mrf.mxu0
      %v480 = vadd.f32 0.0, %v479
      %481 = vmatmul.f32.gmra.mxu0 %v280
      %v482 = vpop.f32.mrf.mxu0
      %v483 = vadd.f32 0.0, %v482
      %484 = vmatmul.f32.gmra.mxu0 %v283
      %v485 = vpop.f32.mrf.mxu0
      %v486 = vadd.f32 0.0, %v485
      %487 = vmatmul.f32.gmra.mxu0 %v286
      %v488 = vpop.f32.mrf.mxu0
      %v489 = vadd.f32 0.0, %v488
      %490 = vmatmul.f32.gmra.mxu0 %v289
      %v491 = vpop.f32.mrf.mxu0
      %v492 = vadd.f32 0.0, %v491
      %493 = vmatmul.f32.gmra.mxu0 %v292
      %v494 = vpop.f32.mrf.mxu0
      %v495 = vadd.f32 0.0, %v494
      %496 = vmatmul.f32.gmra.mxu0 %v295
      %v497 = vpop.f32.mrf.mxu0
      %v498 = vadd.f32 0.0, %v497
      %499 = vdwg.mxu0
      %vm500 = vcmask 130048
      %v502 = vsel %vm500, %v315, 0
      %v505 = vsel %vm500, %v384, 0
      %507 = vmatpush.xpose.msra.mxu0 0.0
      %508 = vmatpush.xpose.msra.mxu0 0.0
      %509 = vmatpush.xpose.msra.mxu0 0.0
      %510 = vmatpush.xpose.msra.mxu0 0.0
      %511 = vmatpush.xpose.msra.mxu0 0.0
      %512 = vmatpush.xpose.msra.mxu0 0.0
      %513 = vmatpush.xpose.msra.mxu0 0.0
      %514 = vmatpush.xpose.msra.mxu0 0.0
      %515 = vmatpush.xpose.msra.mxu0 0.0
      %516 = vmatpush.xpose.msra.mxu0 0.0
      %517 = vmatpush.xpose.msra.mxu0 0.0
      %518 = vmatpush.xpose.msra.mxu0 0.0
      %519 = vmatpush.xpose.msra.mxu0 0.0
      %520 = vmatpush.xpose.msra.mxu0 0.0
      %521 = vmatpush.xpose.msra.mxu0 0.0
      %522 = vmatpush.xpose.msra.mxu0 %v505
      %523 = vmatmul.f32.gmra.mxu0 %v502
      %v524 = vpop.f32.mrf.mxu0
      %v525 = vadd.f32 0.0, %v524
      %526 = vdwg.mxu0
      %v528 = vsel %vm500, %v318, 0
      %v531 = vsel %vm500, %v387, 0
      %533 = vmatpush.xpose.msra.mxu0 0.0
      %534 = vmatpush.xpose.msra.mxu0 0.0
      %535 = vmatpush.xpose.msra.mxu0 0.0
      %536 = vmatpush.xpose.msra.mxu0 0.0
      %537 = vmatpush.xpose.msra.mxu0 0.0
      %538 = vmatpush.xpose.msra.mxu0 0.0
      %539 = vmatpush.xpose.msra.mxu0 0.0
      %540 = vmatpush.xpose.msra.mxu0 0.0
      %541 = vmatpush.xpose.msra.mxu0 0.0
      %542 = vmatpush.xpose.msra.mxu0 0.0
      %543 = vmatpush.xpose.msra.mxu0 0.0
      %544 = vmatpush.xpose.msra.mxu0 0.0
      %545 = vmatpush.xpose.msra.mxu0 0.0
      %546 = vmatpush.xpose.msra.mxu0 0.0
      %547 = vmatpush.xpose.msra.mxu0 0.0
      %548 = vmatpush.xpose.msra.mxu0 %v531
      %549 = vmatmul.f32.gmra.mxu0 %v528
      %v550 = vpop.f32.mrf.mxu0
      %v551 = vadd.f32 0.0, %v550
      %552 = vdwg.mxu0
      %v554 = vsel %vm500, %v321, 0
      %v557 = vsel %vm500, %v390, 0
      %559 = vmatpush.xpose.msra.mxu0 0.0
      %560 = vmatpush.xpose.msra.mxu0 0.0
      %561 = vmatpush.xpose.msra.mxu0 0.0
      %562 = vmatpush.xpose.msra.mxu0 0.0
      %563 = vmatpush.xpose.msra.mxu0 0.0
      %564 = vmatpush.xpose.msra.mxu0 0.0
      %565 = vmatpush.xpose.msra.mxu0 0.0
      %566 = vmatpush.xpose.msra.mxu0 0.0
      %567 = vmatpush.xpose.msra.mxu0 0.0
      %568 = vmatpush.xpose.msra.mxu0 0.0
      %569 = vmatpush.xpose.msra.mxu0 0.0
      %570 = vmatpush.xpose.msra.mxu0 0.0
      %571 = vmatpush.xpose.msra.mxu0 0.0
      %572 = vmatpush.xpose.msra.mxu0 0.0
      %573 = vmatpush.xpose.msra.mxu0 0.0
      %574 = vmatpush.xpose.msra.mxu0 %v557
      %575 = vmatmul.f32.gmra.mxu0 %v554
      %v576 = vpop.f32.mrf.mxu0
      %v577 = vadd.f32 0.0, %v576
      %578 = vdwg.mxu0
      %v580 = vsel %vm500, %v324, 0
      %v583 = vsel %vm500, %v393, 0
      %585 = vmatpush.xpose.msra.mxu0 0.0
      %586 = vmatpush.xpose.msra.mxu0 0.0
      %587 = vmatpush.xpose.msra.mxu0 0.0
      %588 = vmatpush.xpose.msra.mxu0 0.0
      %589 = vmatpush.xpose.msra.mxu0 0.0
      %590 = vmatpush.xpose.msra.mxu0 0.0
      %591 = vmatpush.xpose.msra.mxu0 0.0
      %592 = vmatpush.xpose.msra.mxu0 0.0
      %593 = vmatpush.xpose.msra.mxu0 0.0
      %594 = vmatpush.xpose.msra.mxu0 0.0
      %595 = vmatpush.xpose.msra.mxu0 0.0
      %596 = vmatpush.xpose.msra.mxu0 0.0
      %597 = vmatpush.xpose.msra.mxu0 0.0
      %598 = vmatpush.xpose.msra.mxu0 0.0
      %599 = vmatpush.xpose.msra.mxu0 0.0
      %600 = vmatpush.xpose.msra.mxu0 %v583
      %601 = vmatmul.f32.gmra.mxu0 %v580
      %v602 = vpop.f32.mrf.mxu0
      %v603 = vadd.f32 0.0, %v602
      %604 = vdwg.mxu0
      %v606 = vsel %vm500, %v327, 0
      %v609 = vsel %vm500, %v396, 0
      %611 = vmatpush.xpose.msra.mxu0 0.0
      %612 = vmatpush.xpose.msra.mxu0 0.0
      %613 = vmatpush.xpose.msra.mxu0 0.0
      %614 = vmatpush.xpose.msra.mxu0 0.0
      %615 = vmatpush.xpose.msra.mxu0 0.0
      %616 = vmatpush.xpose.msra.mxu0 0.0
      %617 = vmatpush.xpose.msra.mxu0 0.0
      %618 = vmatpush.xpose.msra.mxu0 0.0
      %619 = vmatpush.xpose.msra.mxu0 0.0
      %620 = vmatpush.xpose.msra.mxu0 0.0
      %621 = vmatpush.xpose.msra.mxu0 0.0
      %622 = vmatpush.xpose.msra.mxu0 0.0
      %623 = vmatpush.xpose.msra.mxu0 0.0
      %624 = vmatpush.xpose.msra.mxu0 0.0
      %625 = vmatpush.xpose.msra.mxu0 0.0
      %626 = vmatpush.xpose.msra.mxu0 %v609
      %627 = vmatmul.f32.gmra.mxu0 %v606
      %v628 = vpop.f32.mrf.mxu0
      %v629 = vadd.f32 0.0, %v628
      %630 = vdwg.mxu0
      %v632 = vsel %vm500, %v330, 0
      %v635 = vsel %vm500, %v399, 0
      %637 = vmatpush.xpose.msra.mxu0 0.0
      %638 = vmatpush.xpose.msra.mxu0 0.0
      %639 = vmatpush.xpose.msra.mxu0 0.0
      %640 = vmatpush.xpose.msra.mxu0 0.0
      %641 = vmatpush.xpose.msra.mxu0 0.0
      %642 = vmatpush.xpose.msra.mxu0 0.0
      %643 = vmatpush.xpose.msra.mxu0 0.0
      %644 = vmatpush.xpose.msra.mxu0 0.0
      %645 = vmatpush.xpose.msra.mxu0 0.0
      %646 = vmatpush.xpose.msra.mxu0 0.0
      %647 = vmatpush.xpose.msra.mxu0 0.0
      %648 = vmatpush.xpose.msra.mxu0 0.0
      %649 = vmatpush.xpose.msra.mxu0 0.0
      %650 = vmatpush.xpose.msra.mxu0 0.0
      %651 = vmatpush.xpose.msra.mxu0 0.0
      %652 = vmatpush.xpose.msra.mxu0 %v635
      %653 = vmatmul.f32.gmra.mxu0 %v632
      %v654 = vpop.f32.mrf.mxu0
      %v655 = vadd.f32 0.0, %v654
      %656 = vdwg.mxu0
      %v658 = vsel %vm500, %v333, 0
      %v661 = vsel %vm500, %v402, 0
      %663 = vmatpush.xpose.msra.mxu0 0.0
      %664 = vmatpush.xpose.msra.mxu0 0.0
      %665 = vmatpush.xpose.msra.mxu0 0.0
      %666 = vmatpush.xpose.msra.mxu0 0.0
      %667 = vmatpush.xpose.msra.mxu0 0.0
      %668 = vmatpush.xpose.msra.mxu0 0.0
      %669 = vmatpush.xpose.msra.mxu0 0.0
      %670 = vmatpush.xpose.msra.mxu0 0.0
      %671 = vmatpush.xpose.msra.mxu0 0.0
      %672 = vmatpush.xpose.msra.mxu0 0.0
      %673 = vmatpush.xpose.msra.mxu0 0.0
      %674 = vmatpush.xpose.msra.mxu0 0.0
      %675 = vmatpush.xpose.msra.mxu0 0.0
      %676 = vmatpush.xpose.msra.mxu0 0.0
      %677 = vmatpush.xpose.msra.mxu0 0.0
      %678 = vmatpush.xpose.msra.mxu0 %v661
      %679 = vmatmul.f32.gmra.mxu0 %v658
      %v680 = vpop.f32.mrf.mxu0
      %v681 = vadd.f32 0.0, %v680
      %682 = vdwg.mxu0
      %v684 = vsel %vm500, %v336, 0
      %v687 = vsel %vm500, %v405, 0
      %689 = vmatpush.xpose.msra.mxu0 0.0
      %690 = vmatpush.xpose.msra.mxu0 0.0
      %691 = vmatpush.xpose.msra.mxu0 0.0
      %692 = vmatpush.xpose.msra.mxu0 0.0
      %693 = vmatpush.xpose.msra.mxu0 0.0
      %694 = vmatpush.xpose.msra.mxu0 0.0
      %695 = vmatpush.xpose.msra.mxu0 0.0
      %696 = vmatpush.xpose.msra.mxu0 0.0
      %697 = vmatpush.xpose.msra.mxu0 0.0
      %698 = vmatpush.xpose.msra.mxu0 0.0
      %699 = vmatpush.xpose.msra.mxu0 0.0
      %700 = vmatpush.xpose.msra.mxu0 0.0
      %701 = vmatpush.xpose.msra.mxu0 0.0
      %702 = vmatpush.xpose.msra.mxu0 0.0
      %703 = vmatpush.xpose.msra.mxu0 0.0
      %704 = vmatpush.xpose.msra.mxu0 %v687
      %705 = vmatmul.f32.gmra.mxu0 %v684
      %v706 = vpop.f32.mrf.mxu0
      %v707 = vadd.f32 0.0, %v706
      %708 = vdwg.mxu0
      %v710 = vsel %vm500, %v339, 0
      %v713 = vsel %vm500, %v408, 0
      %715 = vmatpush.xpose.msra.mxu0 0.0
      %716 = vmatpush.xpose.msra.mxu0 0.0
      %717 = vmatpush.xpose.msra.mxu0 0.0
      %718 = vmatpush.xpose.msra.mxu0 0.0
      %719 = vmatpush.xpose.msra.mxu0 0.0
      %720 = vmatpush.xpose.msra.mxu0 0.0
      %721 = vmatpush.xpose.msra.mxu0 0.0
      %722 = vmatpush.xpose.msra.mxu0 0.0
      %723 = vmatpush.xpose.msra.mxu0 0.0
      %724 = vmatpush.xpose.msra.mxu0 0.0
      %725 = vmatpush.xpose.msra.mxu0 0.0
      %726 = vmatpush.xpose.msra.mxu0 0.0
      %727 = vmatpush.xpose.msra.mxu0 0.0
      %728 = vmatpush.xpose.msra.mxu0 0.0
      %729 = vmatpush.xpose.msra.mxu0 0.0
      %730 = vmatpush.xpose.msra.mxu0 %v713
      %731 = vmatmul.f32.gmra.mxu0 %v710
      %v732 = vpop.f32.mrf.mxu0
      %v733 = vadd.f32 0.0, %v732
      %734 = vdwg.mxu0
      %v736 = vsel %vm500, %v342, 0
      %v739 = vsel %vm500, %v411, 0
      %741 = vmatpush.xpose.msra.mxu0 0.0
      %742 = vmatpush.xpose.msra.mxu0 0.0
      %743 = vmatpush.xpose.msra.mxu0 0.0
      %744 = vmatpush.xpose.msra.mxu0 0.0
      %745 = vmatpush.xpose.msra.mxu0 0.0
      %746 = vmatpush.xpose.msra.mxu0 0.0
      %747 = vmatpush.xpose.msra.mxu0 0.0
      %748 = vmatpush.xpose.msra.mxu0 0.0
      %749 = vmatpush.xpose.msra.mxu0 0.0
      %750 = vmatpush.xpose.msra.mxu0 0.0
      %751 = vmatpush.xpose.msra.mxu0 0.0
      %752 = vmatpush.xpose.msra.mxu0 0.0
      %753 = vmatpush.xpose.msra.mxu0 0.0
      %754 = vmatpush.xpose.msra.mxu0 0.0
      %755 = vmatpush.xpose.msra.mxu0 0.0
      %756 = vmatpush.xpose.msra.mxu0 %v739
      %757 = vmatmul.f32.gmra.mxu0 %v736
      %v758 = vpop.f32.mrf.mxu0
      %v759 = vadd.f32 0.0, %v758
      %760 = vdwg.mxu0
      %v762 = vsel %vm500, %v345, 0
      %v765 = vsel %vm500, %v414, 0
      %767 = vmatpush.xpose.msra.mxu0 0.0
      %768 = vmatpush.xpose.msra.mxu0 0.0
      %769 = vmatpush.xpose.msra.mxu0 0.0
      %770 = vmatpush.xpose.msra.mxu0 0.0
      %771 = vmatpush.xpose.msra.mxu0 0.0
      %772 = vmatpush.xpose.msra.mxu0 0.0
      %773 = vmatpush.xpose.msra.mxu0 0.0
      %774 = vmatpush.xpose.msra.mxu0 0.0
      %775 = vmatpush.xpose.msra.mxu0 0.0
      %776 = vmatpush.xpose.msra.mxu0 0.0
      %777 = vmatpush.xpose.msra.mxu0 0.0
      %778 = vmatpush.xpose.msra.mxu0 0.0
      %779 = vmatpush.xpose.msra.mxu0 0.0
      %780 = vmatpush.xpose.msra.mxu0 0.0
      %781 = vmatpush.xpose.msra.mxu0 0.0
      %782 = vmatpush.xpose.msra.mxu0 %v765
      %783 = vmatmul.f32.gmra.mxu0 %v762
      %v784 = vpop.f32.mrf.mxu0
      %v785 = vadd.f32 0.0, %v784
      %786 = vdwg.mxu0
      %v788 = vsel %vm500, %v348, 0
      %v791 = vsel %vm500, %v417, 0
      %793 = vmatpush.xpose.msra.mxu0 0.0
      %794 = vmatpush.xpose.msra.mxu0 0.0
      %795 = vmatpush.xpose.msra.mxu0 0.0
      %796 = vmatpush.xpose.msra.mxu0 0.0
      %797 = vmatpush.xpose.msra.mxu0 0.0
      %798 = vmatpush.xpose.msra.mxu0 0.0
      %799 = vmatpush.xpose.msra.mxu0 0.0
      %800 = vmatpush.xpose.msra.mxu0 0.0
      %801 = vmatpush.xpose.msra.mxu0 0.0
      %802 = vmatpush.xpose.msra.mxu0 0.0
      %803 = vmatpush.xpose.msra.mxu0 0.0
      %804 = vmatpush.xpose.msra.mxu0 0.0
      %805 = vmatpush.xpose.msra.mxu0 0.0
      %806 = vmatpush.xpose.msra.mxu0 0.0
      %807 = vmatpush.xpose.msra.mxu0 0.0
      %808 = vmatpush.xpose.msra.mxu0 %v791
      %809 = vmatmul.f32.gmra.mxu0 %v788
      %v810 = vpop.f32.mrf.mxu0
      %v811 = vadd.f32 0.0, %v810
      %812 = vdwg.mxu0
      %v814 = vsel %vm500, %v351, 0
      %v817 = vsel %vm500, %v420, 0
      %819 = vmatpush.xpose.msra.mxu0 0.0
      %820 = vmatpush.xpose.msra.mxu0 0.0
      %821 = vmatpush.xpose.msra.mxu0 0.0
      %822 = vmatpush.xpose.msra.mxu0 0.0
      %823 = vmatpush.xpose.msra.mxu0 0.0
      %824 = vmatpush.xpose.msra.mxu0 0.0
      %825 = vmatpush.xpose.msra.mxu0 0.0
      %826 = vmatpush.xpose.msra.mxu0 0.0
      %827 = vmatpush.xpose.msra.mxu0 0.0
      %828 = vmatpush.xpose.msra.mxu0 0.0
      %829 = vmatpush.xpose.msra.mxu0 0.0
      %830 = vmatpush.xpose.msra.mxu0 0.0
      %831 = vmatpush.xpose.msra.mxu0 0.0
      %832 = vmatpush.xpose.msra.mxu0 0.0
      %833 = vmatpush.xpose.msra.mxu0 0.0
      %834 = vmatpush.xpose.msra.mxu0 %v817
      %835 = vmatmul.f32.gmra.mxu0 %v814
      %v836 = vpop.f32.mrf.mxu0
      %v837 = vadd.f32 0.0, %v836
      %838 = vdwg.mxu0
      %v840 = vsel %vm500, %v354, 0
      %v843 = vsel %vm500, %v423, 0
      %845 = vmatpush.xpose.msra.mxu0 0.0
      %846 = vmatpush.xpose.msra.mxu0 0.0
      %847 = vmatpush.xpose.msra.mxu0 0.0
      %848 = vmatpush.xpose.msra.mxu0 0.0
      %849 = vmatpush.xpose.msra.mxu0 0.0
      %850 = vmatpush.xpose.msra.mxu0 0.0
      %851 = vmatpush.xpose.msra.mxu0 0.0
      %852 = vmatpush.xpose.msra.mxu0 0.0
      %853 = vmatpush.xpose.msra.mxu0 0.0
      %854 = vmatpush.xpose.msra.mxu0 0.0
      %855 = vmatpush.xpose.msra.mxu0 0.0
      %856 = vmatpush.xpose.msra.mxu0 0.0
      %857 = vmatpush.xpose.msra.mxu0 0.0
      %858 = vmatpush.xpose.msra.mxu0 0.0
      %859 = vmatpush.xpose.msra.mxu0 0.0
      %860 = vmatpush.xpose.msra.mxu0 %v843
      %861 = vmatmul.f32.gmra.mxu0 %v840
      %v862 = vpop.f32.mrf.mxu0
      %v863 = vadd.f32 0.0, %v862
      %864 = vdwg.mxu0
      %v866 = vsel %vm500, %v357, 0
      %v869 = vsel %vm500, %v426, 0
      %871 = vmatpush.xpose.msra.mxu0 0.0
      %872 = vmatpush.xpose.msra.mxu0 0.0
      %873 = vmatpush.xpose.msra.mxu0 0.0
      %874 = vmatpush.xpose.msra.mxu0 0.0
      %875 = vmatpush.xpose.msra.mxu0 0.0
      %876 = vmatpush.xpose.msra.mxu0 0.0
      %877 = vmatpush.xpose.msra.mxu0 0.0
      %878 = vmatpush.xpose.msra.mxu0 0.0
      %879 = vmatpush.xpose.msra.mxu0 0.0
      %880 = vmatpush.xpose.msra.mxu0 0.0
      %881 = vmatpush.xpose.msra.mxu0 0.0
      %882 = vmatpush.xpose.msra.mxu0 0.0
      %883 = vmatpush.xpose.msra.mxu0 0.0
      %884 = vmatpush.xpose.msra.mxu0 0.0
      %885 = vmatpush.xpose.msra.mxu0 0.0
      %886 = vmatpush.xpose.msra.mxu0 %v869
      %887 = vmatmul.f32.gmra.mxu0 %v866
      %v888 = vpop.f32.mrf.mxu0
      %v889 = vadd.f32 0.0, %v888
      %890 = vdwg.mxu0
      %v892 = vsel %vm500, %v360, 0
      %v895 = vsel %vm500, %v429, 0
      %897 = vmatpush.xpose.msra.mxu0 0.0
      %898 = vmatpush.xpose.msra.mxu0 0.0
      %899 = vmatpush.xpose.msra.mxu0 0.0
      %900 = vmatpush.xpose.msra.mxu0 0.0
      %901 = vmatpush.xpose.msra.mxu0 0.0
      %902 = vmatpush.xpose.msra.mxu0 0.0
      %903 = vmatpush.xpose.msra.mxu0 0.0
      %904 = vmatpush.xpose.msra.mxu0 0.0
      %905 = vmatpush.xpose.msra.mxu0 0.0
      %906 = vmatpush.xpose.msra.mxu0 0.0
      %907 = vmatpush.xpose.msra.mxu0 0.0
      %908 = vmatpush.xpose.msra.mxu0 0.0
      %909 = vmatpush.xpose.msra.mxu0 0.0
      %910 = vmatpush.xpose.msra.mxu0 0.0
      %911 = vmatpush.xpose.msra.mxu0 0.0
      %912 = vmatpush.xpose.msra.mxu0 %v895
      %913 = vmatmul.f32.gmra.mxu0 %v892
      %v914 = vpop.f32.mrf.mxu0
      %v915 = vadd.f32 0.0, %v914
      %916 = vdwg.mxu0
      %vm917 = vcmask 64512
      %v918 = vsel %vm917, %v525, -inf
      %919 = vmax.xlane.f32.xlu0 %v918
      %v920 = vpop.xlane.xlu0 %919
      %v921 = vsel %vm917, %v551, -inf
      %922 = vmax.xlane.f32.xlu0 %v921
      %v923 = vpop.xlane.xlu0 %922
      %v924 = vsel %vm917, %v577, -inf
      %925 = vmax.xlane.f32.xlu0 %v924
      %v926 = vpop.xlane.xlu0 %925
      %v927 = vsel %vm917, %v603, -inf
      %928 = vmax.xlane.f32.xlu0 %v927
      %v929 = vpop.xlane.xlu0 %928
      %v930 = vsel %vm917, %v629, -inf
      %931 = vmax.xlane.f32.xlu0 %v930
      %v932 = vpop.xlane.xlu0 %931
      %v933 = vsel %vm917, %v655, -inf
      %934 = vmax.xlane.f32.xlu0 %v933
      %v935 = vpop.xlane.xlu0 %934
      %v936 = vsel %vm917, %v681, -inf
      %937 = vmax.xlane.f32.xlu0 %v936
      %v938 = vpop.xlane.xlu0 %937
      %v939 = vsel %vm917, %v707, -inf
      %940 = vmax.xlane.f32.xlu0 %v939
      %v941 = vpop.xlane.xlu0 %940
      %v942 = vsel %vm917, %v733, -inf
      %943 = vmax.xlane.f32.xlu0 %v942
      %v944 = vpop.xlane.xlu0 %943
      %v945 = vsel %vm917, %v759, -inf
      %946 = vmax.xlane.f32.xlu0 %v945
      %v947 = vpop.xlane.xlu0 %946
      %v948 = vsel %vm917, %v785, -inf
      %949 = vmax.xlane.f32.xlu0 %v948
      %v950 = vpop.xlane.xlu0 %949
      %v951 = vsel %vm917, %v811, -inf
      %952 = vmax.xlane.f32.xlu0 %v951
      %v953 = vpop.xlane.xlu0 %952
      %v954 = vsel %vm917, %v837, -inf
      %955 = vmax.xlane.f32.xlu0 %v954
      %v956 = vpop.xlane.xlu0 %955
      %v957 = vsel %vm917, %v863, -inf
      %958 = vmax.xlane.f32.xlu0 %v957
      %v959 = vpop.xlane.xlu0 %958
      %v960 = vsel %vm917, %v889, -inf
      %961 = vmax.xlane.f32.xlu0 %v960
      %v962 = vpop.xlane.xlu0 %961
      %v963 = vsel %vm917, %v915, -inf
      %964 = vmax.xlane.f32.xlu0 %v963
      %v965 = vpop.xlane.xlu0 %964
      %v966 = vsub.f32 %v525, %v920
      %v967 = vsub.f32 %v551, %v923
      %v968 = vsub.f32 %v577, %v926
      %v969 = vsub.f32 %v603, %v929
      %v970 = vsub.f32 %v629, %v932
      %v971 = vsub.f32 %v655, %v935
      %v972 = vsub.f32 %v681, %v938
      %v973 = vsub.f32 %v707, %v941
      %v974 = vsub.f32 %v733, %v944
      %v975 = vsub.f32 %v759, %v947
      %v976 = vsub.f32 %v785, %v950
      %v977 = vsub.f32 %v811, %v953
      %v978 = vsub.f32 %v837, %v956
      %v979 = vsub.f32 %v863, %v959
      %v980 = vsub.f32 %v889, %v962
      %v981 = vsub.f32 %v915, %v965
      %v982 = vmul.f32 %v966, 1.442695
      %v983 = vpow.pop %v982
      %v984 = vmul.f32 %v967, 1.442695
      %v985 = vpow.pop %v984
      %v986 = vmul.f32 %v968, 1.442695
      %v987 = vpow.pop %v986
      %v988 = vmul.f32 %v969, 1.442695
      %v989 = vpow.pop %v988
      %v990 = vmul.f32 %v970, 1.442695
      %v991 = vpow.pop %v990
      %v992 = vmul.f32 %v971, 1.442695
      %v993 = vpow.pop %v992
      %v994 = vmul.f32 %v972, 1.442695
      %v995 = vpow.pop %v994
      %v996 = vmul.f32 %v973, 1.442695
      %v997 = vpow.pop %v996
      %v998 = vmul.f32 %v974, 1.442695
      %v999 = vpow.pop %v998
      %v1000 = vmul.f32 %v975, 1.442695
      %v1001 = vpow.pop %v1000
      %v1002 = vmul.f32 %v976, 1.442695
      %v1003 = vpow.pop %v1002
      %v1004 = vmul.f32 %v977, 1.442695
      %v1005 = vpow.pop %v1004
      %v1006 = vmul.f32 %v978, 1.442695
      %v1007 = vpow.pop %v1006
      %v1008 = vmul.f32 %v979, 1.442695
      %v1009 = vpow.pop %v1008
      %v1010 = vmul.f32 %v980, 1.442695
      %v1011 = vpow.pop %v1010
      %v1012 = vmul.f32 %v981, 1.442695
      %v1013 = vpow.pop %v1012
      %v1014 = vsel %vm917, %v983, 0.0
      %1015 = vadd.xlane.f32.xlu0 %v1014
      %v1016 = vpop.xlane.xlu0 %1015
      %v1017 = vsel %vm917, %v985, 0.0
      %1018 = vadd.xlane.f32.xlu0 %v1017
      %v1019 = vpop.xlane.xlu0 %1018
      %v1020 = vsel %vm917, %v987, 0.0
      %1021 = vadd.xlane.f32.xlu0 %v1020
      %v1022 = vpop.xlane.xlu0 %1021
      %v1023 = vsel %vm917, %v989, 0.0
      %1024 = vadd.xlane.f32.xlu0 %v1023
      %v1025 = vpop.xlane.xlu0 %1024
      %v1026 = vsel %vm917, %v991, 0.0
      %1027 = vadd.xlane.f32.xlu0 %v1026
      %v1028 = vpop.xlane.xlu0 %1027
      %v1029 = vsel %vm917, %v993, 0.0
      %1030 = vadd.xlane.f32.xlu0 %v1029
      %v1031 = vpop.xlane.xlu0 %1030
      %v1032 = vsel %vm917, %v995, 0.0
      %1033 = vadd.xlane.f32.xlu0 %v1032
      %v1034 = vpop.xlane.xlu0 %1033
      %v1035 = vsel %vm917, %v997, 0.0
      %1036 = vadd.xlane.f32.xlu0 %v1035
      %v1037 = vpop.xlane.xlu0 %1036
      %v1038 = vsel %vm917, %v999, 0.0
      %1039 = vadd.xlane.f32.xlu0 %v1038
      %v1040 = vpop.xlane.xlu0 %1039
      %v1041 = vsel %vm917, %v1001, 0.0
      %1042 = vadd.xlane.f32.xlu0 %v1041
      %v1043 = vpop.xlane.xlu0 %1042
      %v1044 = vsel %vm917, %v1003, 0.0
      %1045 = vadd.xlane.f32.xlu0 %v1044
      %v1046 = vpop.xlane.xlu0 %1045
      %v1047 = vsel %vm917, %v1005, 0.0
      %1048 = vadd.xlane.f32.xlu0 %v1047
      %v1049 = vpop.xlane.xlu0 %1048
      %v1050 = vsel %vm917, %v1007, 0.0
      %1051 = vadd.xlane.f32.xlu0 %v1050
      %v1052 = vpop.xlane.xlu0 %1051
      %v1053 = vsel %vm917, %v1009, 0.0
      %1054 = vadd.xlane.f32.xlu0 %v1053
      %v1055 = vpop.xlane.xlu0 %1054
      %v1056 = vsel %vm917, %v1011, 0.0
      %1057 = vadd.xlane.f32.xlu0 %v1056
      %v1058 = vpop.xlane.xlu0 %1057
      %v1059 = vsel %vm917, %v1013, 0.0
      %1060 = vadd.xlane.f32.xlu0 %v1059
      %v1061 = vpop.xlane.xlu0 %1060
      %v1062 = vrcp.pop %v1016
      %v1063 = vrcp.pop %v1019
      %v1064 = vrcp.pop %v1022
      %v1065 = vrcp.pop %v1025
      %v1066 = vrcp.pop %v1028
      %v1067 = vrcp.pop %v1031
      %v1068 = vrcp.pop %v1034
      %v1069 = vrcp.pop %v1037
      %v1070 = vrcp.pop %v1040
      %v1071 = vrcp.pop %v1043
      %v1072 = vrcp.pop %v1046
      %v1073 = vrcp.pop %v1049
      %v1074 = vrcp.pop %v1052
      %v1075 = vrcp.pop %v1055
      %v1076 = vrcp.pop %v1058
      %v1077 = vrcp.pop %v1061
      %v1078 = vmul.f32 %v983, %v1062
      %v1079 = vmul.f32 %v985, %v1063
      %v1080 = vmul.f32 %v987, %v1064
      %v1081 = vmul.f32 %v989, %v1065
      %v1082 = vmul.f32 %v991, %v1066
      %v1083 = vmul.f32 %v993, %v1067
      %v1084 = vmul.f32 %v995, %v1068
      %v1085 = vmul.f32 %v997, %v1069
      %v1086 = vmul.f32 %v999, %v1070
      %v1087 = vmul.f32 %v1001, %v1071
      %v1088 = vmul.f32 %v1003, %v1072
      %v1089 = vmul.f32 %v1005, %v1073
      %v1090 = vmul.f32 %v1007, %v1074
      %v1091 = vmul.f32 %v1009, %v1075
      %v1092 = vmul.f32 %v1011, %v1076
      %v1093 = vmul.f32 %v1013, %v1077
      %v1095 = vsel %vm917, %v1078, 0
      %1097 = vmatpush.msra.mxu0 0.0
      %1098 = vmatpush.msra.mxu0 0.0
      %1099 = vmatpush.msra.mxu0 0.0
      %1100 = vmatpush.msra.mxu0 0.0
      %1101 = vmatpush.msra.mxu0 0.0
      %1102 = vmatpush.msra.mxu0 0.0
      %1103 = vmatpush.msra.mxu0 0.0
      %1104 = vmatpush.msra.mxu0 0.0
      %1105 = vmatpush.msra.mxu0 0.0
      %1106 = vmatpush.msra.mxu0 0.0
      %1107 = vmatpush.msra.mxu0 0.0
      %1108 = vmatpush.msra.mxu0 0.0
      %1109 = vmatpush.msra.mxu0 0.0
      %1110 = vmatpush.msra.mxu0 0.0
      %1111 = vmatpush.msra.mxu0 0.0
      %1112 = vmatpush.msra.mxu0 %v453
      %1113 = vmatmul.f32.gmra.mxu0 %v1095
      %v1114 = vpop.f32.mrf.mxu0
      %v1115 = vadd.f32 0.0, %v1114
      %1116 = vdwg.mxu0
      %v1118 = vsel %vm917, %v1079, 0
      %1120 = vmatpush.msra.mxu0 0.0
      %1121 = vmatpush.msra.mxu0 0.0
      %1122 = vmatpush.msra.mxu0 0.0
      %1123 = vmatpush.msra.mxu0 0.0
      %1124 = vmatpush.msra.mxu0 0.0
      %1125 = vmatpush.msra.mxu0 0.0
      %1126 = vmatpush.msra.mxu0 0.0
      %1127 = vmatpush.msra.mxu0 0.0
      %1128 = vmatpush.msra.mxu0 0.0
      %1129 = vmatpush.msra.mxu0 0.0
      %1130 = vmatpush.msra.mxu0 0.0
      %1131 = vmatpush.msra.mxu0 0.0
      %1132 = vmatpush.msra.mxu0 0.0
      %1133 = vmatpush.msra.mxu0 0.0
      %1134 = vmatpush.msra.mxu0 0.0
      %1135 = vmatpush.msra.mxu0 %v456
      %1136 = vmatmul.f32.gmra.mxu0 %v1118
      %v1137 = vpop.f32.mrf.mxu0
      %v1138 = vadd.f32 0.0, %v1137
      %1139 = vdwg.mxu0
      %v1141 = vsel %vm917, %v1080, 0
      %1143 = vmatpush.msra.mxu0 0.0
      %1144 = vmatpush.msra.mxu0 0.0
      %1145 = vmatpush.msra.mxu0 0.0
      %1146 = vmatpush.msra.mxu0 0.0
      %1147 = vmatpush.msra.mxu0 0.0
      %1148 = vmatpush.msra.mxu0 0.0
      %1149 = vmatpush.msra.mxu0 0.0
      %1150 = vmatpush.msra.mxu0 0.0
      %1151 = vmatpush.msra.mxu0 0.0
      %1152 = vmatpush.msra.mxu0 0.0
      %1153 = vmatpush.msra.mxu0 0.0
      %1154 = vmatpush.msra.mxu0 0.0
      %1155 = vmatpush.msra.mxu0 0.0
      %1156 = vmatpush.msra.mxu0 0.0
      %1157 = vmatpush.msra.mxu0 0.0
      %1158 = vmatpush.msra.mxu0 %v459
      %1159 = vmatmul.f32.gmra.mxu0 %v1141
      %v1160 = vpop.f32.mrf.mxu0
      %v1161 = vadd.f32 0.0, %v1160
      %1162 = vdwg.mxu0
      %v1164 = vsel %vm917, %v1081, 0
      %1166 = vmatpush.msra.mxu0 0.0
      %1167 = vmatpush.msra.mxu0 0.0
      %1168 = vmatpush.msra.mxu0 0.0
      %1169 = vmatpush.msra.mxu0 0.0
      %1170 = vmatpush.msra.mxu0 0.0
      %1171 = vmatpush.msra.mxu0 0.0
      %1172 = vmatpush.msra.mxu0 0.0
      %1173 = vmatpush.msra.mxu0 0.0
      %1174 = vmatpush.msra.mxu0 0.0
      %1175 = vmatpush.msra.mxu0 0.0
      %1176 = vmatpush.msra.mxu0 0.0
      %1177 = vmatpush.msra.mxu0 0.0
      %1178 = vmatpush.msra.mxu0 0.0
      %1179 = vmatpush.msra.mxu0 0.0
      %1180 = vmatpush.msra.mxu0 0.0
      %1181 = vmatpush.msra.mxu0 %v462
      %1182 = vmatmul.f32.gmra.mxu0 %v1164
      %v1183 = vpop.f32.mrf.mxu0
      %v1184 = vadd.f32 0.0, %v1183
      %1185 = vdwg.mxu0
      %v1187 = vsel %vm917, %v1082, 0
      %1189 = vmatpush.msra.mxu0 0.0
      %1190 = vmatpush.msra.mxu0 0.0
      %1191 = vmatpush.msra.mxu0 0.0
      %1192 = vmatpush.msra.mxu0 0.0
      %1193 = vmatpush.msra.mxu0 0.0
      %1194 = vmatpush.msra.mxu0 0.0
      %1195 = vmatpush.msra.mxu0 0.0
      %1196 = vmatpush.msra.mxu0 0.0
      %1197 = vmatpush.msra.mxu0 0.0
      %1198 = vmatpush.msra.mxu0 0.0
      %1199 = vmatpush.msra.mxu0 0.0
      %1200 = vmatpush.msra.mxu0 0.0
      %1201 = vmatpush.msra.mxu0 0.0
      %1202 = vmatpush.msra.mxu0 0.0
      %1203 = vmatpush.msra.mxu0 0.0
      %1204 = vmatpush.msra.mxu0 %v465
      %1205 = vmatmul.f32.gmra.mxu0 %v1187
      %v1206 = vpop.f32.mrf.mxu0
      %v1207 = vadd.f32 0.0, %v1206
      %1208 = vdwg.mxu0
      %v1210 = vsel %vm917, %v1083, 0
      %1212 = vmatpush.msra.mxu0 0.0
      %1213 = vmatpush.msra.mxu0 0.0
      %1214 = vmatpush.msra.mxu0 0.0
      %1215 = vmatpush.msra.mxu0 0.0
      %1216 = vmatpush.msra.mxu0 0.0
      %1217 = vmatpush.msra.mxu0 0.0
      %1218 = vmatpush.msra.mxu0 0.0
      %1219 = vmatpush.msra.mxu0 0.0
      %1220 = vmatpush.msra.mxu0 0.0
      %1221 = vmatpush.msra.mxu0 0.0
      %1222 = vmatpush.msra.mxu0 0.0
      %1223 = vmatpush.msra.mxu0 0.0
      %1224 = vmatpush.msra.mxu0 0.0
      %1225 = vmatpush.msra.mxu0 0.0
      %1226 = vmatpush.msra.mxu0 0.0
      %1227 = vmatpush.msra.mxu0 %v468
      %1228 = vmatmul.f32.gmra.mxu0 %v1210
      %v1229 = vpop.f32.mrf.mxu0
      %v1230 = vadd.f32 0.0, %v1229
      %1231 = vdwg.mxu0
      %v1233 = vsel %vm917, %v1084, 0
      %1235 = vmatpush.msra.mxu0 0.0
      %1236 = vmatpush.msra.mxu0 0.0
      %1237 = vmatpush.msra.mxu0 0.0
      %1238 = vmatpush.msra.mxu0 0.0
      %1239 = vmatpush.msra.mxu0 0.0
      %1240 = vmatpush.msra.mxu0 0.0
      %1241 = vmatpush.msra.mxu0 0.0
      %1242 = vmatpush.msra.mxu0 0.0
      %1243 = vmatpush.msra.mxu0 0.0
      %1244 = vmatpush.msra.mxu0 0.0
      %1245 = vmatpush.msra.mxu0 0.0
      %1246 = vmatpush.msra.mxu0 0.0
      %1247 = vmatpush.msra.mxu0 0.0
      %1248 = vmatpush.msra.mxu0 0.0
      %1249 = vmatpush.msra.mxu0 0.0
      %1250 = vmatpush.msra.mxu0 %v471
      %1251 = vmatmul.f32.gmra.mxu0 %v1233
      %v1252 = vpop.f32.mrf.mxu0
      %v1253 = vadd.f32 0.0, %v1252
      %1254 = vdwg.mxu0
      %v1256 = vsel %vm917, %v1085, 0
      %1258 = vmatpush.msra.mxu0 0.0
      %1259 = vmatpush.msra.mxu0 0.0
      %1260 = vmatpush.msra.mxu0 0.0
      %1261 = vmatpush.msra.mxu0 0.0
      %1262 = vmatpush.msra.mxu0 0.0
      %1263 = vmatpush.msra.mxu0 0.0
      %1264 = vmatpush.msra.mxu0 0.0
      %1265 = vmatpush.msra.mxu0 0.0
      %1266 = vmatpush.msra.mxu0 0.0
      %1267 = vmatpush.msra.mxu0 0.0
      %1268 = vmatpush.msra.mxu0 0.0
      %1269 = vmatpush.msra.mxu0 0.0
      %1270 = vmatpush.msra.mxu0 0.0
      %1271 = vmatpush.msra.mxu0 0.0
      %1272 = vmatpush.msra.mxu0 0.0
      %1273 = vmatpush.msra.mxu0 %v474
      %1274 = vmatmul.f32.gmra.mxu0 %v1256
      %v1275 = vpop.f32.mrf.mxu0
      %v1276 = vadd.f32 0.0, %v1275
      %1277 = vdwg.mxu0
      %v1279 = vsel %vm917, %v1086, 0
      %1281 = vmatpush.msra.mxu0 0.0
      %1282 = vmatpush.msra.mxu0 0.0
      %1283 = vmatpush.msra.mxu0 0.0
      %1284 = vmatpush.msra.mxu0 0.0
      %1285 = vmatpush.msra.mxu0 0.0
      %1286 = vmatpush.msra.mxu0 0.0
      %1287 = vmatpush.msra.mxu0 0.0
      %1288 = vmatpush.msra.mxu0 0.0
      %1289 = vmatpush.msra.mxu0 0.0
      %1290 = vmatpush.msra.mxu0 0.0
      %1291 = vmatpush.msra.mxu0 0.0
      %1292 = vmatpush.msra.mxu0 0.0
      %1293 = vmatpush.msra.mxu0 0.0
      %1294 = vmatpush.msra.mxu0 0.0
      %1295 = vmatpush.msra.mxu0 0.0
      %1296 = vmatpush.msra.mxu0 %v477
      %1297 = vmatmul.f32.gmra.mxu0 %v1279
      %v1298 = vpop.f32.mrf.mxu0
      %v1299 = vadd.f32 0.0, %v1298
      %1300 = vdwg.mxu0
      %v1302 = vsel %vm917, %v1087, 0
      %1304 = vmatpush.msra.mxu0 0.0
      %1305 = vmatpush.msra.mxu0 0.0
      %1306 = vmatpush.msra.mxu0 0.0
      %1307 = vmatpush.msra.mxu0 0.0
      %1308 = vmatpush.msra.mxu0 0.0
      %1309 = vmatpush.msra.mxu0 0.0
      %1310 = vmatpush.msra.mxu0 0.0
      %1311 = vmatpush.msra.mxu0 0.0
      %1312 = vmatpush.msra.mxu0 0.0
      %1313 = vmatpush.msra.mxu0 0.0
      %1314 = vmatpush.msra.mxu0 0.0
      %1315 = vmatpush.msra.mxu0 0.0
      %1316 = vmatpush.msra.mxu0 0.0
      %1317 = vmatpush.msra.mxu0 0.0
      %1318 = vmatpush.msra.mxu0 0.0
      %1319 = vmatpush.msra.mxu0 %v480
      %1320 = vmatmul.f32.gmra.mxu0 %v1302
      %v1321 = vpop.f32.mrf.mxu0
      %v1322 = vadd.f32 0.0, %v1321
      %1323 = vdwg.mxu0
      %v1325 = vsel %vm917, %v1088, 0
      %1327 = vmatpush.msra.mxu0 0.0
      %1328 = vmatpush.msra.mxu0 0.0
      %1329 = vmatpush.msra.mxu0 0.0
      %1330 = vmatpush.msra.mxu0 0.0
      %1331 = vmatpush.msra.mxu0 0.0
      %1332 = vmatpush.msra.mxu0 0.0
      %1333 = vmatpush.msra.mxu0 0.0
      %1334 = vmatpush.msra.mxu0 0.0
      %1335 = vmatpush.msra.mxu0 0.0
      %1336 = vmatpush.msra.mxu0 0.0
      %1337 = vmatpush.msra.mxu0 0.0
      %1338 = vmatpush.msra.mxu0 0.0
      %1339 = vmatpush.msra.mxu0 0.0
      %1340 = vmatpush.msra.mxu0 0.0
      %1341 = vmatpush.msra.mxu0 0.0
      %1342 = vmatpush.msra.mxu0 %v483
      %1343 = vmatmul.f32.gmra.mxu0 %v1325
      %v1344 = vpop.f32.mrf.mxu0
      %v1345 = vadd.f32 0.0, %v1344
      %1346 = vdwg.mxu0
      %v1348 = vsel %vm917, %v1089, 0
      %1350 = vmatpush.msra.mxu0 0.0
      %1351 = vmatpush.msra.mxu0 0.0
      %1352 = vmatpush.msra.mxu0 0.0
      %1353 = vmatpush.msra.mxu0 0.0
      %1354 = vmatpush.msra.mxu0 0.0
      %1355 = vmatpush.msra.mxu0 0.0
      %1356 = vmatpush.msra.mxu0 0.0
      %1357 = vmatpush.msra.mxu0 0.0
      %1358 = vmatpush.msra.mxu0 0.0
      %1359 = vmatpush.msra.mxu0 0.0
      %1360 = vmatpush.msra.mxu0 0.0
      %1361 = vmatpush.msra.mxu0 0.0
      %1362 = vmatpush.msra.mxu0 0.0
      %1363 = vmatpush.msra.mxu0 0.0
      %1364 = vmatpush.msra.mxu0 0.0
      %1365 = vmatpush.msra.mxu0 %v486
      %1366 = vmatmul.f32.gmra.mxu0 %v1348
      %v1367 = vpop.f32.mrf.mxu0
      %v1368 = vadd.f32 0.0, %v1367
      %1369 = vdwg.mxu0
      %v1371 = vsel %vm917, %v1090, 0
      %1373 = vmatpush.msra.mxu0 0.0
      %1374 = vmatpush.msra.mxu0 0.0
      %1375 = vmatpush.msra.mxu0 0.0
      %1376 = vmatpush.msra.mxu0 0.0
      %1377 = vmatpush.msra.mxu0 0.0
      %1378 = vmatpush.msra.mxu0 0.0
      %1379 = vmatpush.msra.mxu0 0.0
      %1380 = vmatpush.msra.mxu0 0.0
      %1381 = vmatpush.msra.mxu0 0.0
      %1382 = vmatpush.msra.mxu0 0.0
      %1383 = vmatpush.msra.mxu0 0.0
      %1384 = vmatpush.msra.mxu0 0.0
      %1385 = vmatpush.msra.mxu0 0.0
      %1386 = vmatpush.msra.mxu0 0.0
      %1387 = vmatpush.msra.mxu0 0.0
      %1388 = vmatpush.msra.mxu0 %v489
      %1389 = vmatmul.f32.gmra.mxu0 %v1371
      %v1390 = vpop.f32.mrf.mxu0
      %v1391 = vadd.f32 0.0, %v1390
      %1392 = vdwg.mxu0
      %v1394 = vsel %vm917, %v1091, 0
      %1396 = vmatpush.msra.mxu0 0.0
      %1397 = vmatpush.msra.mxu0 0.0
      %1398 = vmatpush.msra.mxu0 0.0
      %1399 = vmatpush.msra.mxu0 0.0
      %1400 = vmatpush.msra.mxu0 0.0
      %1401 = vmatpush.msra.mxu0 0.0
      %1402 = vmatpush.msra.mxu0 0.0
      %1403 = vmatpush.msra.mxu0 0.0
      %1404 = vmatpush.msra.mxu0 0.0
      %1405 = vmatpush.msra.mxu0 0.0
      %1406 = vmatpush.msra.mxu0 0.0
      %1407 = vmatpush.msra.mxu0 0.0
      %1408 = vmatpush.msra.mxu0 0.0
      %1409 = vmatpush.msra.mxu0 0.0
      %1410 = vmatpush.msra.mxu0 0.0
      %1411 = vmatpush.msra.mxu0 %v492
      %1412 = vmatmul.f32.gmra.mxu0 %v1394
      %v1413 = vpop.f32.mrf.mxu0
      %v1414 = vadd.f32 0.0, %v1413
      %1415 = vdwg.mxu0
      %v1417 = vsel %vm917, %v1092, 0
      %1419 = vmatpush.msra.mxu0 0.0
      %1420 = vmatpush.msra.mxu0 0.0
      %1421 = vmatpush.msra.mxu0 0.0
      %1422 = vmatpush.msra.mxu0 0.0
      %1423 = vmatpush.msra.mxu0 0.0
      %1424 = vmatpush.msra.mxu0 0.0
      %1425 = vmatpush.msra.mxu0 0.0
      %1426 = vmatpush.msra.mxu0 0.0
      %1427 = vmatpush.msra.mxu0 0.0
      %1428 = vmatpush.msra.mxu0 0.0
      %1429 = vmatpush.msra.mxu0 0.0
      %1430 = vmatpush.msra.mxu0 0.0
      %1431 = vmatpush.msra.mxu0 0.0
      %1432 = vmatpush.msra.mxu0 0.0
      %1433 = vmatpush.msra.mxu0 0.0
      %1434 = vmatpush.msra.mxu0 %v495
      %1435 = vmatmul.f32.gmra.mxu0 %v1417
      %v1436 = vpop.f32.mrf.mxu0
      %v1437 = vadd.f32 0.0, %v1436
      %1438 = vdwg.mxu0
      %v1440 = vsel %vm917, %v1093, 0
      %1442 = vmatpush.msra.mxu0 0.0
      %1443 = vmatpush.msra.mxu0 0.0
      %1444 = vmatpush.msra.mxu0 0.0
      %1445 = vmatpush.msra.mxu0 0.0
      %1446 = vmatpush.msra.mxu0 0.0
      %1447 = vmatpush.msra.mxu0 0.0
      %1448 = vmatpush.msra.mxu0 0.0
      %1449 = vmatpush.msra.mxu0 0.0
      %1450 = vmatpush.msra.mxu0 0.0
      %1451 = vmatpush.msra.mxu0 0.0
      %1452 = vmatpush.msra.mxu0 0.0
      %1453 = vmatpush.msra.mxu0 0.0
      %1454 = vmatpush.msra.mxu0 0.0
      %1455 = vmatpush.msra.mxu0 0.0
      %1456 = vmatpush.msra.mxu0 0.0
      %1457 = vmatpush.msra.mxu0 %v498
      %1458 = vmatmul.f32.gmra.mxu0 %v1440
      %v1459 = vpop.f32.mrf.mxu0
      %v1460 = vadd.f32 0.0, %v1459
      %1461 = vdwg.mxu0
      %v1462 = vld [vmem:[%s4] sm:$0xff]
      %v1463 = vld [vmem:[%s4 + $0x8] sm:$0xff]
      %s1464 = scalar_lea.vmem %s1, 32
      %v1465 = vld [vmem:[%s1464] sm:$0xff]
      %v1466 = vld [vmem:[%s1464 + $0x8] sm:$0xff]
      %v1467 = vld [vmem:[%s1464 + $0x10] sm:$0xff]
      %v1468 = vld [vmem:[%s1464 + $0x18] sm:$0xff]
      %1469 = vmatpush.msra.mxu0 0.0
      %1470 = vmatpush.msra.mxu0 0.0
      %1471 = vmatpush.msra.mxu0 0.0
      %1472 = vmatpush.msra.mxu0 0.0
      %1473 = vmatpush.msra.mxu0 0.0
      %1474 = vmatpush.msra.mxu0 0.0
      %1475 = vmatpush.msra.mxu0 0.0
      %1476 = vmatpush.msra.mxu0 0.0
      %1477 = vmatpush.msra.mxu0 0.0
      %1478 = vmatpush.msra.mxu0 0.0
      %1479 = vmatpush.msra.mxu0 0.0
      %1480 = vmatpush.msra.mxu0 0.0
      %1481 = vmatpush.msra.mxu0 %v1468
      %1482 = vmatpush.msra.mxu0 %v1467
      %1483 = vmatpush.msra.mxu0 %v1466
      %1484 = vmatpush.msra.mxu0 %v1465
      %1485 = vmatmul.f32.gmra.mxu0 %v250
      %v1486 = vpop.f32.mrf.mxu0
      %v1487 = vadd.f32 0.0, %v1486
      %1488 = vmatmul.f32.gmra.mxu0 %v253
      %v1489 = vpop.f32.mrf.mxu0
      %v1490 = vadd.f32 0.0, %v1489
      %1491 = vmatmul.f32.gmra.mxu0 %v256
      %v1492 = vpop.f32.mrf.mxu0
      %v1493 = vadd.f32 0.0, %v1492
      %1494 = vmatmul.f32.gmra.mxu0 %v259
      %v1495 = vpop.f32.mrf.mxu0
      %v1496 = vadd.f32 0.0, %v1495
      %1497 = vmatmul.f32.gmra.mxu0 %v262
      %v1498 = vpop.f32.mrf.mxu0
      %v1499 = vadd.f32 0.0, %v1498
      %1500 = vmatmul.f32.gmra.mxu0 %v265
      %v1501 = vpop.f32.mrf.mxu0
      %v1502 = vadd.f32 0.0, %v1501
      %1503 = vmatmul.f32.gmra.mxu0 %v268
      %v1504 = vpop.f32.mrf.mxu0
      %v1505 = vadd.f32 0.0, %v1504
      %1506 = vmatmul.f32.gmra.mxu0 %v271
      %v1507 = vpop.f32.mrf.mxu0
      %v1508 = vadd.f32 0.0, %v1507
      %1509 = vmatmul.f32.gmra.mxu0 %v274
      %v1510 = vpop.f32.mrf.mxu0
      %v1511 = vadd.f32 0.0, %v1510
      %1512 = vmatmul.f32.gmra.mxu0 %v277
      %v1513 = vpop.f32.mrf.mxu0
      %v1514 = vadd.f32 0.0, %v1513
      %1515 = vmatmul.f32.gmra.mxu0 %v280
      %v1516 = vpop.f32.mrf.mxu0
      %v1517 = vadd.f32 0.0, %v1516
      %1518 = vmatmul.f32.gmra.mxu0 %v283
      %v1519 = vpop.f32.mrf.mxu0
      %v1520 = vadd.f32 0.0, %v1519
      %1521 = vmatmul.f32.gmra.mxu0 %v286
      %v1522 = vpop.f32.mrf.mxu0
      %v1523 = vadd.f32 0.0, %v1522
      %1524 = vmatmul.f32.gmra.mxu0 %v289
      %v1525 = vpop.f32.mrf.mxu0
      %v1526 = vadd.f32 0.0, %v1525
      %1527 = vmatmul.f32.gmra.mxu0 %v292
      %v1528 = vpop.f32.mrf.mxu0
      %v1529 = vadd.f32 0.0, %v1528
      %1530 = vmatmul.f32.gmra.mxu0 %v295
      %v1531 = vpop.f32.mrf.mxu0
      %v1532 = vadd.f32 0.0, %v1531
      %1533 = vdwg.mxu0
      %s1534 = scalar_lea.vmem %s2, 32
      %v1535 = vld [vmem:[%s1534] sm:$0xff]
      %v1536 = vld [vmem:[%s1534 + $0x8] sm:$0xff]
      %v1537 = vld [vmem:[%s1534 + $0x10] sm:$0xff]
      %v1538 = vld [vmem:[%s1534 + $0x18] sm:$0xff]
      %1539 = vmatpush.msra.mxu0 0.0
      %1540 = vmatpush.msra.mxu0 0.0
      %1541 = vmatpush.msra.mxu0 0.0
      %1542 = vmatpush.msra.mxu0 0.0
      %1543 = vmatpush.msra.mxu0 0.0
      %1544 = vmatpush.msra.mxu0 0.0
      %1545 = vmatpush.msra.mxu0 0.0
      %1546 = vmatpush.msra.mxu0 0.0
      %1547 = vmatpush.msra.mxu0 0.0
      %1548 = vmatpush.msra.mxu0 0.0
      %1549 = vmatpush.msra.mxu0 0.0
      %1550 = vmatpush.msra.mxu0 0.0
      %1551 = vmatpush.msra.mxu0 %v1538
      %1552 = vmatpush.msra.mxu0 %v1537
      %1553 = vmatpush.msra.mxu0 %v1536
      %1554 = vmatpush.msra.mxu0 %v1535
      %1555 = vmatmul.f32.gmra.mxu0 %v250
      %v1556 = vpop.f32.mrf.mxu0
      %v1557 = vadd.f32 0.0, %v1556
      %1558 = vmatmul.f32.gmra.mxu0 %v253
      %v1559 = vpop.f32.mrf.mxu0
      %v1560 = vadd.f32 0.0, %v1559
      %1561 = vmatmul.f32.gmra.mxu0 %v256
      %v1562 = vpop.f32.mrf.mxu0
      %v1563 = vadd.f32 0.0, %v1562
      %1564 = vmatmul.f32.gmra.mxu0 %v259
      %v1565 = vpop.f32.mrf.mxu0
      %v1566 = vadd.f32 0.0, %v1565
      %1567 = vmatmul.f32.gmra.mxu0 %v262
      %v1568 = vpop.f32.mrf.mxu0
      %v1569 = vadd.f32 0.0, %v1568
      %1570 = vmatmul.f32.gmra.mxu0 %v265
      %v1571 = vpop.f32.mrf.mxu0
      %v1572 = vadd.f32 0.0, %v1571
      %1573 = vmatmul.f32.gmra.mxu0 %v268
      %v1574 = vpop.f32.mrf.mxu0
      %v1575 = vadd.f32 0.0, %v1574
      %1576 = vmatmul.f32.gmra.mxu0 %v271
      %v1577 = vpop.f32.mrf.mxu0
      %v1578 = vadd.f32 0.0, %v1577
      %1579 = vmatmul.f32.gmra.mxu0 %v274
      %v1580 = vpop.f32.mrf.mxu0
      %v1581 = vadd.f32 0.0, %v1580
      %1582 = vmatmul.f32.gmra.mxu0 %v277
      %v1583 = vpop.f32.mrf.mxu0
      %v1584 = vadd.f32 0.0, %v1583
      %1585 = vmatmul.f32.gmra.mxu0 %v280
      %v1586 = vpop.f32.mrf.mxu0
      %v1587 = vadd.f32 0.0, %v1586
      %1588 = vmatmul.f32.gmra.mxu0 %v283
      %v1589 = vpop.f32.mrf.mxu0
      %v1590 = vadd.f32 0.0, %v1589
      %1591 = vmatmul.f32.gmra.mxu0 %v286
      %v1592 = vpop.f32.mrf.mxu0
      %v1593 = vadd.f32 0.0, %v1592
      %1594 = vmatmul.f32.gmra.mxu0 %v289
      %v1595 = vpop.f32.mrf.mxu0
      %v1596 = vadd.f32 0.0, %v1595
      %1597 = vmatmul.f32.gmra.mxu0 %v292
      %v1598 = vpop.f32.mrf.mxu0
      %v1599 = vadd.f32 0.0, %v1598
      %1600 = vmatmul.f32.gmra.mxu0 %v295
      %v1601 = vpop.f32.mrf.mxu0
      %v1602 = vadd.f32 0.0, %v1601
      %1603 = vdwg.mxu0
      %s1604 = scalar_lea.vmem %s3, 32
      %v1605 = vld [vmem:[%s1604] sm:$0xff]
      %v1606 = vld [vmem:[%s1604 + $0x8] sm:$0xff]
      %v1607 = vld [vmem:[%s1604 + $0x10] sm:$0xff]
      %v1608 = vld [vmem:[%s1604 + $0x18] sm:$0xff]
      %1609 = vmatpush.msra.mxu0 0.0
      %1610 = vmatpush.msra.mxu0 0.0
      %1611 = vmatpush.msra.mxu0 0.0
      %1612 = vmatpush.msra.mxu0 0.0
      %1613 = vmatpush.msra.mxu0 0.0
      %1614 = vmatpush.msra.mxu0 0.0
      %1615 = vmatpush.msra.mxu0 0.0
      %1616 = vmatpush.msra.mxu0 0.0
      %1617 = vmatpush.msra.mxu0 0.0
      %1618 = vmatpush.msra.mxu0 0.0
      %1619 = vmatpush.msra.mxu0 0.0
      %1620 = vmatpush.msra.mxu0 0.0
      %1621 = vmatpush.msra.mxu0 %v1608
      %1622 = vmatpush.msra.mxu0 %v1607
      %1623 = vmatpush.msra.mxu0 %v1606
      %1624 = vmatpush.msra.mxu0 %v1605
      %1625 = vmatmul.f32.gmra.mxu0 %v250
      %v1626 = vpop.f32.mrf.mxu0
      %v1627 = vadd.f32 0.0, %v1626
      %1628 = vmatmul.f32.gmra.mxu0 %v253
      %v1629 = vpop.f32.mrf.mxu0
      %v1630 = vadd.f32 0.0, %v1629
      %1631 = vmatmul.f32.gmra.mxu0 %v256
      %v1632 = vpop.f32.mrf.mxu0
      %v1633 = vadd.f32 0.0, %v1632
      %1634 = vmatmul.f32.gmra.mxu0 %v259
      %v1635 = vpop.f32.mrf.mxu0
      %v1636 = vadd.f32 0.0, %v1635
      %1637 = vmatmul.f32.gmra.mxu0 %v262
      %v1638 = vpop.f32.mrf.mxu0
      %v1639 = vadd.f32 0.0, %v1638
      %1640 = vmatmul.f32.gmra.mxu0 %v265
      %v1641 = vpop.f32.mrf.mxu0
      %v1642 = vadd.f32 0.0, %v1641
      %1643 = vmatmul.f32.gmra.mxu0 %v268
      %v1644 = vpop.f32.mrf.mxu0
      %v1645 = vadd.f32 0.0, %v1644
      %1646 = vmatmul.f32.gmra.mxu0 %v271
      %v1647 = vpop.f32.mrf.mxu0
      %v1648 = vadd.f32 0.0, %v1647
      %1649 = vmatmul.f32.gmra.mxu0 %v274
      %v1650 = vpop.f32.mrf.mxu0
      %v1651 = vadd.f32 0.0, %v1650
      %1652 = vmatmul.f32.gmra.mxu0 %v277
      %v1653 = vpop.f32.mrf.mxu0
      %v1654 = vadd.f32 0.0, %v1653
      %1655 = vmatmul.f32.gmra.mxu0 %v280
      %v1656 = vpop.f32.mrf.mxu0
      %v1657 = vadd.f32 0.0, %v1656
      %1658 = vmatmul.f32.gmra.mxu0 %v283
      %v1659 = vpop.f32.mrf.mxu0
      %v1660 = vadd.f32 0.0, %v1659
      %1661 = vmatmul.f32.gmra.mxu0 %v286
      %v1662 = vpop.f32.mrf.mxu0
      %v1663 = vadd.f32 0.0, %v1662
      %1664 = vmatmul.f32.gmra.mxu0 %v289
      %v1665 = vpop.f32.mrf.mxu0
      %v1666 = vadd.f32 0.0, %v1665
      %1667 = vmatmul.f32.gmra.mxu0 %v292
      %v1668 = vpop.f32.mrf.mxu0
      %v1669 = vadd.f32 0.0, %v1668
      %1670 = vmatmul.f32.gmra.mxu0 %v295
      %v1671 = vpop.f32.mrf.mxu0
      %v1672 = vadd.f32 0.0, %v1671
      %1673 = vdwg.mxu0
      %v1675 = vsel %vm500, %v1487, 0
      %v1678 = vsel %vm500, %v1557, 0
      %1680 = vmatpush.xpose.msra.mxu0 0.0
      %1681 = vmatpush.xpose.msra.mxu0 0.0
      %1682 = vmatpush.xpose.msra.mxu0 0.0
      %1683 = vmatpush.xpose.msra.mxu0 0.0
      %1684 = vmatpush.xpose.msra.mxu0 0.0
      %1685 = vmatpush.xpose.msra.mxu0 0.0
      %1686 = vmatpush.xpose.msra.mxu0 0.0
      %1687 = vmatpush.xpose.msra.mxu0 0.0
      %1688 = vmatpush.xpose.msra.mxu0 0.0
      %1689 = vmatpush.xpose.msra.mxu0 0.0
      %1690 = vmatpush.xpose.msra.mxu0 0.0
      %1691 = vmatpush.xpose.msra.mxu0 0.0
      %1692 = vmatpush.xpose.msra.mxu0 0.0
      %1693 = vmatpush.xpose.msra.mxu0 0.0
      %1694 = vmatpush.xpose.msra.mxu0 0.0
      %1695 = vmatpush.xpose.msra.mxu0 %v1678
      %1696 = vmatmul.f32.gmra.mxu0 %v1675
      %v1697 = vpop.f32.mrf.mxu0
      %v1698 = vadd.f32 0.0, %v1697
      %1699 = vdwg.mxu0
      %v1701 = vsel %vm500, %v1490, 0
      %v1704 = vsel %vm500, %v1560, 0
      %1706 = vmatpush.xpose.msra.mxu0 0.0
      %1707 = vmatpush.xpose.msra.mxu0 0.0
      %1708 = vmatpush.xpose.msra.mxu0 0.0
      %1709 = vmatpush.xpose.msra.mxu0 0.0
      %1710 = vmatpush.xpose.msra.mxu0 0.0
      %1711 = vmatpush.xpose.msra.mxu0 0.0
      %1712 = vmatpush.xpose.msra.mxu0 0.0
      %1713 = vmatpush.xpose.msra.mxu0 0.0
      %1714 = vmatpush.xpose.msra.mxu0 0.0
      %1715 = vmatpush.xpose.msra.mxu0 0.0
      %1716 = vmatpush.xpose.msra.mxu0 0.0
      %1717 = vmatpush.xpose.msra.mxu0 0.0
      %1718 = vmatpush.xpose.msra.mxu0 0.0
      %1719 = vmatpush.xpose.msra.mxu0 0.0
      %1720 = vmatpush.xpose.msra.mxu0 0.0
      %1721 = vmatpush.xpose.msra.mxu0 %v1704
      %1722 = vmatmul.f32.gmra.mxu0 %v1701
      %v1723 = vpop.f32.mrf.mxu0
      %v1724 = vadd.f32 0.0, %v1723
      %1725 = vdwg.mxu0
      %v1727 = vsel %vm500, %v1493, 0
      %v1730 = vsel %vm500, %v1563, 0
      %1732 = vmatpush.xpose.msra.mxu0 0.0
      %1733 = vmatpush.xpose.msra.mxu0 0.0
      %1734 = vmatpush.xpose.msra.mxu0 0.0
      %1735 = vmatpush.xpose.msra.mxu0 0.0
      %1736 = vmatpush.xpose.msra.mxu0 0.0
      %1737 = vmatpush.xpose.msra.mxu0 0.0
      %1738 = vmatpush.xpose.msra.mxu0 0.0
      %1739 = vmatpush.xpose.msra.mxu0 0.0
      %1740 = vmatpush.xpose.msra.mxu0 0.0
      %1741 = vmatpush.xpose.msra.mxu0 0.0
      %1742 = vmatpush.xpose.msra.mxu0 0.0
      %1743 = vmatpush.xpose.msra.mxu0 0.0
      %1744 = vmatpush.xpose.msra.mxu0 0.0
      %1745 = vmatpush.xpose.msra.mxu0 0.0
      %1746 = vmatpush.xpose.msra.mxu0 0.0
      %1747 = vmatpush.xpose.msra.mxu0 %v1730
      %1748 = vmatmul.f32.gmra.mxu0 %v1727
      %v1749 = vpop.f32.mrf.mxu0
      %v1750 = vadd.f32 0.0, %v1749
      %1751 = vdwg.mxu0
      %v1753 = vsel %vm500, %v1496, 0
      %v1756 = vsel %vm500, %v1566, 0
      %1758 = vmatpush.xpose.msra.mxu0 0.0
      %1759 = vmatpush.xpose.msra.mxu0 0.0
      %1760 = vmatpush.xpose.msra.mxu0 0.0
      %1761 = vmatpush.xpose.msra.mxu0 0.0
      %1762 = vmatpush.xpose.msra.mxu0 0.0
      %1763 = vmatpush.xpose.msra.mxu0 0.0
      %1764 = vmatpush.xpose.msra.mxu0 0.0
      %1765 = vmatpush.xpose.msra.mxu0 0.0
      %1766 = vmatpush.xpose.msra.mxu0 0.0
      %1767 = vmatpush.xpose.msra.mxu0 0.0
      %1768 = vmatpush.xpose.msra.mxu0 0.0
      %1769 = vmatpush.xpose.msra.mxu0 0.0
      %1770 = vmatpush.xpose.msra.mxu0 0.0
      %1771 = vmatpush.xpose.msra.mxu0 0.0
      %1772 = vmatpush.xpose.msra.mxu0 0.0
      %1773 = vmatpush.xpose.msra.mxu0 %v1756
      %1774 = vmatmul.f32.gmra.mxu0 %v1753
      %v1775 = vpop.f32.mrf.mxu0
      %v1776 = vadd.f32 0.0, %v1775
      %1777 = vdwg.mxu0
      %v1779 = vsel %vm500, %v1499, 0
      %v1782 = vsel %vm500, %v1569, 0
      %1784 = vmatpush.xpose.msra.mxu0 0.0
      %1785 = vmatpush.xpose.msra.mxu0 0.0
      %1786 = vmatpush.xpose.msra.mxu0 0.0
      %1787 = vmatpush.xpose.msra.mxu0 0.0
      %1788 = vmatpush.xpose.msra.mxu0 0.0
      %1789 = vmatpush.xpose.msra.mxu0 0.0
      %1790 = vmatpush.xpose.msra.mxu0 0.0
      %1791 = vmatpush.xpose.msra.mxu0 0.0
      %1792 = vmatpush.xpose.msra.mxu0 0.0
      %1793 = vmatpush.xpose.msra.mxu0 0.0
      %1794 = vmatpush.xpose.msra.mxu0 0.0
      %1795 = vmatpush.xpose.msra.mxu0 0.0
      %1796 = vmatpush.xpose.msra.mxu0 0.0
      %1797 = vmatpush.xpose.msra.mxu0 0.0
      %1798 = vmatpush.xpose.msra.mxu0 0.0
      %1799 = vmatpush.xpose.msra.mxu0 %v1782
      %1800 = vmatmul.f32.gmra.mxu0 %v1779
      %v1801 = vpop.f32.mrf.mxu0
      %v1802 = vadd.f32 0.0, %v1801
      %1803 = vdwg.mxu0
      %v1805 = vsel %vm500, %v1502, 0
      %v1808 = vsel %vm500, %v1572, 0
      %1810 = vmatpush.xpose.msra.mxu0 0.0
      %1811 = vmatpush.xpose.msra.mxu0 0.0
      %1812 = vmatpush.xpose.msra.mxu0 0.0
      %1813 = vmatpush.xpose.msra.mxu0 0.0
      %1814 = vmatpush.xpose.msra.mxu0 0.0
      %1815 = vmatpush.xpose.msra.mxu0 0.0
      %1816 = vmatpush.xpose.msra.mxu0 0.0
      %1817 = vmatpush.xpose.msra.mxu0 0.0
      %1818 = vmatpush.xpose.msra.mxu0 0.0
      %1819 = vmatpush.xpose.msra.mxu0 0.0
      %1820 = vmatpush.xpose.msra.mxu0 0.0
      %1821 = vmatpush.xpose.msra.mxu0 0.0
      %1822 = vmatpush.xpose.msra.mxu0 0.0
      %1823 = vmatpush.xpose.msra.mxu0 0.0
      %1824 = vmatpush.xpose.msra.mxu0 0.0
      %1825 = vmatpush.xpose.msra.mxu0 %v1808
      %1826 = vmatmul.f32.gmra.mxu0 %v1805
      %v1827 = vpop.f32.mrf.mxu0
      %v1828 = vadd.f32 0.0, %v1827
      %1829 = vdwg.mxu0
      %v1831 = vsel %vm500, %v1505, 0
      %v1834 = vsel %vm500, %v1575, 0
      %1836 = vmatpush.xpose.msra.mxu0 0.0
      %1837 = vmatpush.xpose.msra.mxu0 0.0
      %1838 = vmatpush.xpose.msra.mxu0 0.0
      %1839 = vmatpush.xpose.msra.mxu0 0.0
      %1840 = vmatpush.xpose.msra.mxu0 0.0
      %1841 = vmatpush.xpose.msra.mxu0 0.0
      %1842 = vmatpush.xpose.msra.mxu0 0.0
      %1843 = vmatpush.xpose.msra.mxu0 0.0
      %1844 = vmatpush.xpose.msra.mxu0 0.0
      %1845 = vmatpush.xpose.msra.mxu0 0.0
      %1846 = vmatpush.xpose.msra.mxu0 0.0
      %1847 = vmatpush.xpose.msra.mxu0 0.0
      %1848 = vmatpush.xpose.msra.mxu0 0.0
      %1849 = vmatpush.xpose.msra.mxu0 0.0
      %1850 = vmatpush.xpose.msra.mxu0 0.0
      %1851 = vmatpush.xpose.msra.mxu0 %v1834
      %1852 = vmatmul.f32.gmra.mxu0 %v1831
      %v1853 = vpop.f32.mrf.mxu0
      %v1854 = vadd.f32 0.0, %v1853
      %1855 = vdwg.mxu0
      %v1857 = vsel %vm500, %v1508, 0
      %v1860 = vsel %vm500, %v1578, 0
      %1862 = vmatpush.xpose.msra.mxu0 0.0
      %1863 = vmatpush.xpose.msra.mxu0 0.0
      %1864 = vmatpush.xpose.msra.mxu0 0.0
      %1865 = vmatpush.xpose.msra.mxu0 0.0
      %1866 = vmatpush.xpose.msra.mxu0 0.0
      %1867 = vmatpush.xpose.msra.mxu0 0.0
      %1868 = vmatpush.xpose.msra.mxu0 0.0
      %1869 = vmatpush.xpose.msra.mxu0 0.0
      %1870 = vmatpush.xpose.msra.mxu0 0.0
      %1871 = vmatpush.xpose.msra.mxu0 0.0
      %1872 = vmatpush.xpose.msra.mxu0 0.0
      %1873 = vmatpush.xpose.msra.mxu0 0.0
      %1874 = vmatpush.xpose.msra.mxu0 0.0
      %1875 = vmatpush.xpose.msra.mxu0 0.0
      %1876 = vmatpush.xpose.msra.mxu0 0.0
      %1877 = vmatpush.xpose.msra.mxu0 %v1860
      %1878 = vmatmul.f32.gmra.mxu0 %v1857
      %v1879 = vpop.f32.mrf.mxu0
      %v1880 = vadd.f32 0.0, %v1879
      %1881 = vdwg.mxu0
      %v1883 = vsel %vm500, %v1511, 0
      %v1886 = vsel %vm500, %v1581, 0
      %1888 = vmatpush.xpose.msra.mxu0 0.0
      %1889 = vmatpush.xpose.msra.mxu0 0.0
      %1890 = vmatpush.xpose.msra.mxu0 0.0
      %1891 = vmatpush.xpose.msra.mxu0 0.0
      %1892 = vmatpush.xpose.msra.mxu0 0.0
      %1893 = vmatpush.xpose.msra.mxu0 0.0
      %1894 = vmatpush.xpose.msra.mxu0 0.0
      %1895 = vmatpush.xpose.msra.mxu0 0.0
      %1896 = vmatpush.xpose.msra.mxu0 0.0
      %1897 = vmatpush.xpose.msra.mxu0 0.0
      %1898 = vmatpush.xpose.msra.mxu0 0.0
      %1899 = vmatpush.xpose.msra.mxu0 0.0
      %1900 = vmatpush.xpose.msra.mxu0 0.0
      %1901 = vmatpush.xpose.msra.mxu0 0.0
      %1902 = vmatpush.xpose.msra.mxu0 0.0
      %1903 = vmatpush.xpose.msra.mxu0 %v1886
      %1904 = vmatmul.f32.gmra.mxu0 %v1883
      %v1905 = vpop.f32.mrf.mxu0
      %v1906 = vadd.f32 0.0, %v1905
      %1907 = vdwg.mxu0
      %v1909 = vsel %vm500, %v1514, 0
      %v1912 = vsel %vm500, %v1584, 0
      %1914 = vmatpush.xpose.msra.mxu0 0.0
      %1915 = vmatpush.xpose.msra.mxu0 0.0
      %1916 = vmatpush.xpose.msra.mxu0 0.0
      %1917 = vmatpush.xpose.msra.mxu0 0.0
      %1918 = vmatpush.xpose.msra.mxu0 0.0
      %1919 = vmatpush.xpose.msra.mxu0 0.0
      %1920 = vmatpush.xpose.msra.mxu0 0.0
      %1921 = vmatpush.xpose.msra.mxu0 0.0
      %1922 = vmatpush.xpose.msra.mxu0 0.0
      %1923 = vmatpush.xpose.msra.mxu0 0.0
      %1924 = vmatpush.xpose.msra.mxu0 0.0
      %1925 = vmatpush.xpose.msra.mxu0 0.0
      %1926 = vmatpush.xpose.msra.mxu0 0.0
      %1927 = vmatpush.xpose.msra.mxu0 0.0
      %1928 = vmatpush.xpose.msra.mxu0 0.0
      %1929 = vmatpush.xpose.msra.mxu0 %v1912
      %1930 = vmatmul.f32.gmra.mxu0 %v1909
      %v1931 = vpop.f32.mrf.mxu0
      %v1932 = vadd.f32 0.0, %v1931
      %1933 = vdwg.mxu0
      %v1935 = vsel %vm500, %v1517, 0
      %v1938 = vsel %vm500, %v1587, 0
      %1940 = vmatpush.xpose.msra.mxu0 0.0
      %1941 = vmatpush.xpose.msra.mxu0 0.0
      %1942 = vmatpush.xpose.msra.mxu0 0.0
      %1943 = vmatpush.xpose.msra.mxu0 0.0
      %1944 = vmatpush.xpose.msra.mxu0 0.0
      %1945 = vmatpush.xpose.msra.mxu0 0.0
      %1946 = vmatpush.xpose.msra.mxu0 0.0
      %1947 = vmatpush.xpose.msra.mxu0 0.0
      %1948 = vmatpush.xpose.msra.mxu0 0.0
      %1949 = vmatpush.xpose.msra.mxu0 0.0
      %1950 = vmatpush.xpose.msra.mxu0 0.0
      %1951 = vmatpush.xpose.msra.mxu0 0.0
      %1952 = vmatpush.xpose.msra.mxu0 0.0
      %1953 = vmatpush.xpose.msra.mxu0 0.0
      %1954 = vmatpush.xpose.msra.mxu0 0.0
      %1955 = vmatpush.xpose.msra.mxu0 %v1938
      %1956 = vmatmul.f32.gmra.mxu0 %v1935
      %v1957 = vpop.f32.mrf.mxu0
      %v1958 = vadd.f32 0.0, %v1957
      %1959 = vdwg.mxu0
      %v1961 = vsel %vm500, %v1520, 0
      %v1964 = vsel %vm500, %v1590, 0
      %1966 = vmatpush.xpose.msra.mxu0 0.0
      %1967 = vmatpush.xpose.msra.mxu0 0.0
      %1968 = vmatpush.xpose.msra.mxu0 0.0
      %1969 = vmatpush.xpose.msra.mxu0 0.0
      %1970 = vmatpush.xpose.msra.mxu0 0.0
      %1971 = vmatpush.xpose.msra.mxu0 0.0
      %1972 = vmatpush.xpose.msra.mxu0 0.0
      %1973 = vmatpush.xpose.msra.mxu0 0.0
      %1974 = vmatpush.xpose.msra.mxu0 0.0
      %1975 = vmatpush.xpose.msra.mxu0 0.0
      %1976 = vmatpush.xpose.msra.mxu0 0.0
      %1977 = vmatpush.xpose.msra.mxu0 0.0
      %1978 = vmatpush.xpose.msra.mxu0 0.0
      %1979 = vmatpush.xpose.msra.mxu0 0.0
      %1980 = vmatpush.xpose.msra.mxu0 0.0
      %1981 = vmatpush.xpose.msra.mxu0 %v1964
      %1982 = vmatmul.f32.gmra.mxu0 %v1961
      %v1983 = vpop.f32.mrf.mxu0
      %v1984 = vadd.f32 0.0, %v1983
      %1985 = vdwg.mxu0
      %v1987 = vsel %vm500, %v1523, 0
      %v1990 = vsel %vm500, %v1593, 0
      %1992 = vmatpush.xpose.msra.mxu0 0.0
      %1993 = vmatpush.xpose.msra.mxu0 0.0
      %1994 = vmatpush.xpose.msra.mxu0 0.0
      %1995 = vmatpush.xpose.msra.mxu0 0.0
      %1996 = vmatpush.xpose.msra.mxu0 0.0
      %1997 = vmatpush.xpose.msra.mxu0 0.0
      %1998 = vmatpush.xpose.msra.mxu0 0.0
      %1999 = vmatpush.xpose.msra.mxu0 0.0
      %2000 = vmatpush.xpose.msra.mxu0 0.0
      %2001 = vmatpush.xpose.msra.mxu0 0.0
      %2002 = vmatpush.xpose.msra.mxu0 0.0
      %2003 = vmatpush.xpose.msra.mxu0 0.0
      %2004 = vmatpush.xpose.msra.mxu0 0.0
      %2005 = vmatpush.xpose.msra.mxu0 0.0
      %2006 = vmatpush.xpose.msra.mxu0 0.0
      %2007 = vmatpush.xpose.msra.mxu0 %v1990
      %2008 = vmatmul.f32.gmra.mxu0 %v1987
      %v2009 = vpop.f32.mrf.mxu0
      %v2010 = vadd.f32 0.0, %v2009
      %2011 = vdwg.mxu0
      %v2013 = vsel %vm500, %v1526, 0
      %v2016 = vsel %vm500, %v1596, 0
      %2018 = vmatpush.xpose.msra.mxu0 0.0
      %2019 = vmatpush.xpose.msra.mxu0 0.0
      %2020 = vmatpush.xpose.msra.mxu0 0.0
      %2021 = vmatpush.xpose.msra.mxu0 0.0
      %2022 = vmatpush.xpose.msra.mxu0 0.0
      %2023 = vmatpush.xpose.msra.mxu0 0.0
      %2024 = vmatpush.xpose.msra.mxu0 0.0
      %2025 = vmatpush.xpose.msra.mxu0 0.0
      %2026 = vmatpush.xpose.msra.mxu0 0.0
      %2027 = vmatpush.xpose.msra.mxu0 0.0
      %2028 = vmatpush.xpose.msra.mxu0 0.0
      %2029 = vmatpush.xpose.msra.mxu0 0.0
      %2030 = vmatpush.xpose.msra.mxu0 0.0
      %2031 = vmatpush.xpose.msra.mxu0 0.0
      %2032 = vmatpush.xpose.msra.mxu0 0.0
      %2033 = vmatpush.xpose.msra.mxu0 %v2016
      %2034 = vmatmul.f32.gmra.mxu0 %v2013
      %v2035 = vpop.f32.mrf.mxu0
      %v2036 = vadd.f32 0.0, %v2035
      %2037 = vdwg.mxu0
      %v2039 = vsel %vm500, %v1529, 0
      %v2042 = vsel %vm500, %v1599, 0
      %2044 = vmatpush.xpose.msra.mxu0 0.0
      %2045 = vmatpush.xpose.msra.mxu0 0.0
      %2046 = vmatpush.xpose.msra.mxu0 0.0
      %2047 = vmatpush.xpose.msra.mxu0 0.0
      %2048 = vmatpush.xpose.msra.mxu0 0.0
      %2049 = vmatpush.xpose.msra.mxu0 0.0
      %2050 = vmatpush.xpose.msra.mxu0 0.0
      %2051 = vmatpush.xpose.msra.mxu0 0.0
      %2052 = vmatpush.xpose.msra.mxu0 0.0
      %2053 = vmatpush.xpose.msra.mxu0 0.0
      %2054 = vmatpush.xpose.msra.mxu0 0.0
      %2055 = vmatpush.xpose.msra.mxu0 0.0
      %2056 = vmatpush.xpose.msra.mxu0 0.0
      %2057 = vmatpush.xpose.msra.mxu0 0.0
      %2058 = vmatpush.xpose.msra.mxu0 0.0
      %2059 = vmatpush.xpose.msra.mxu0 %v2042
      %2060 = vmatmul.f32.gmra.mxu0 %v2039
      %v2061 = vpop.f32.mrf.mxu0
      %v2062 = vadd.f32 0.0, %v2061
      %2063 = vdwg.mxu0
      %v2065 = vsel %vm500, %v1532, 0
      %v2068 = vsel %vm500, %v1602, 0
      %2070 = vmatpush.xpose.msra.mxu0 0.0
      %2071 = vmatpush.xpose.msra.mxu0 0.0
      %2072 = vmatpush.xpose.msra.mxu0 0.0
      %2073 = vmatpush.xpose.msra.mxu0 0.0
      %2074 = vmatpush.xpose.msra.mxu0 0.0
      %2075 = vmatpush.xpose.msra.mxu0 0.0
      %2076 = vmatpush.xpose.msra.mxu0 0.0
      %2077 = vmatpush.xpose.msra.mxu0 0.0
      %2078 = vmatpush.xpose.msra.mxu0 0.0
      %2079 = vmatpush.xpose.msra.mxu0 0.0
      %2080 = vmatpush.xpose.msra.mxu0 0.0
      %2081 = vmatpush.xpose.msra.mxu0 0.0
      %2082 = vmatpush.xpose.msra.mxu0 0.0
      %2083 = vmatpush.xpose.msra.mxu0 0.0
      %2084 = vmatpush.xpose.msra.mxu0 0.0
      %2085 = vmatpush.xpose.msra.mxu0 %v2068
      %2086 = vmatmul.f32.gmra.mxu0 %v2065
      %v2087 = vpop.f32.mrf.mxu0
      %v2088 = vadd.f32 0.0, %v2087
      %2089 = vdwg.mxu0
      %v2090 = vsel %vm917, %v1698, -inf
      %2091 = vmax.xlane.f32.xlu0 %v2090
      %v2092 = vpop.xlane.xlu0 %2091
      %v2093 = vsel %vm917, %v1724, -inf
      %2094 = vmax.xlane.f32.xlu0 %v2093
      %v2095 = vpop.xlane.xlu0 %2094
      %v2096 = vsel %vm917, %v1750, -inf
      %2097 = vmax.xlane.f32.xlu0 %v2096
      %v2098 = vpop.xlane.xlu0 %2097
      %v2099 = vsel %vm917, %v1776, -inf
      %2100 = vmax.xlane.f32.xlu0 %v2099
      %v2101 = vpop.xlane.xlu0 %2100
      %v2102 = vsel %vm917, %v1802, -inf
      %2103 = vmax.xlane.f32.xlu0 %v2102
      %v2104 = vpop.xlane.xlu0 %2103
      %v2105 = vsel %vm917, %v1828, -inf
      %2106 = vmax.xlane.f32.xlu0 %v2105
      %v2107 = vpop.xlane.xlu0 %2106
      %v2108 = vsel %vm917, %v1854, -inf
      %2109 = vmax.xlane.f32.xlu0 %v2108
      %v2110 = vpop.xlane.xlu0 %2109
      %v2111 = vsel %vm917, %v1880, -inf
      %2112 = vmax.xlane.f32.xlu0 %v2111
      %v2113 = vpop.xlane.xlu0 %2112
      %v2114 = vsel %vm917, %v1906, -inf
      %2115 = vmax.xlane.f32.xlu0 %v2114
      %v2116 = vpop.xlane.xlu0 %2115
      %v2117 = vsel %vm917, %v1932, -inf
      %2118 = vmax.xlane.f32.xlu0 %v2117
      %v2119 = vpop.xlane.xlu0 %2118
      %v2120 = vsel %vm917, %v1958, -inf
      %2121 = vmax.xlane.f32.xlu0 %v2120
      %v2122 = vpop.xlane.xlu0 %2121
      %v2123 = vsel %vm917, %v1984, -inf
      %2124 = vmax.xlane.f32.xlu0 %v2123
      %v2125 = vpop.xlane.xlu0 %2124
      %v2126 = vsel %vm917, %v2010, -inf
      %2127 = vmax.xlane.f32.xlu0 %v2126
      %v2128 = vpop.xlane.xlu0 %2127
      %v2129 = vsel %vm917, %v2036, -inf
      %2130 = vmax.xlane.f32.xlu0 %v2129
      %v2131 = vpop.xlane.xlu0 %2130
      %v2132 = vsel %vm917, %v2062, -inf
      %2133 = vmax.xlane.f32.xlu0 %v2132
      %v2134 = vpop.xlane.xlu0 %2133
      %v2135 = vsel %vm917, %v2088, -inf
      %2136 = vmax.xlane.f32.xlu0 %v2135
      %v2137 = vpop.xlane.xlu0 %2136
      %v2138 = vsub.f32 %v1698, %v2092
      %v2139 = vsub.f32 %v1724, %v2095
      %v2140 = vsub.f32 %v1750, %v2098
      %v2141 = vsub.f32 %v1776, %v2101
      %v2142 = vsub.f32 %v1802, %v2104
      %v2143 = vsub.f32 %v1828, %v2107
      %v2144 = vsub.f32 %v1854, %v2110
      %v2145 = vsub.f32 %v1880, %v2113
      %v2146 = vsub.f32 %v1906, %v2116
      %v2147 = vsub.f32 %v1932, %v2119
      %v2148 = vsub.f32 %v1958, %v2122
      %v2149 = vsub.f32 %v1984, %v2125
      %v2150 = vsub.f32 %v2010, %v2128
      %v2151 = vsub.f32 %v2036, %v2131
      %v2152 = vsub.f32 %v2062, %v2134
      %v2153 = vsub.f32 %v2088, %v2137
      %v2154 = vmul.f32 %v2138, 1.442695
      %v2155 = vpow.pop %v2154
      %v2156 = vmul.f32 %v2139, 1.442695
      %v2157 = vpow.pop %v2156
      %v2158 = vmul.f32 %v2140, 1.442695
      %v2159 = vpow.pop %v2158
      %v2160 = vmul.f32 %v2141, 1.442695
      %v2161 = vpow.pop %v2160
      %v2162 = vmul.f32 %v2142, 1.442695
      %v2163 = vpow.pop %v2162
      %v2164 = vmul.f32 %v2143, 1.442695
      %v2165 = vpow.pop %v2164
      %v2166 = vmul.f32 %v2144, 1.442695
      %v2167 = vpow.pop %v2166
      %v2168 = vmul.f32 %v2145, 1.442695
      %v2169 = vpow.pop %v2168
      %v2170 = vmul.f32 %v2146, 1.442695
      %v2171 = vpow.pop %v2170
      %v2172 = vmul.f32 %v2147, 1.442695
      %v2173 = vpow.pop %v2172
      %v2174 = vmul.f32 %v2148, 1.442695
      %v2175 = vpow.pop %v2174
      %v2176 = vmul.f32 %v2149, 1.442695
      %v2177 = vpow.pop %v2176
      %v2178 = vmul.f32 %v2150, 1.442695
      %v2179 = vpow.pop %v2178
      %v2180 = vmul.f32 %v2151, 1.442695
      %v2181 = vpow.pop %v2180
      %v2182 = vmul.f32 %v2152, 1.442695
      %v2183 = vpow.pop %v2182
      %v2184 = vmul.f32 %v2153, 1.442695
      %v2185 = vpow.pop %v2184
      %v2186 = vsel %vm917, %v2155, 0.0
      %2187 = vadd.xlane.f32.xlu0 %v2186
      %v2188 = vpop.xlane.xlu0 %2187
      %v2189 = vsel %vm917, %v2157, 0.0
      %2190 = vadd.xlane.f32.xlu0 %v2189
      %v2191 = vpop.xlane.xlu0 %2190
      %v2192 = vsel %vm917, %v2159, 0.0
      %2193 = vadd.xlane.f32.xlu0 %v2192
      %v2194 = vpop.xlane.xlu0 %2193
      %v2195 = vsel %vm917, %v2161, 0.0
      %2196 = vadd.xlane.f32.xlu0 %v2195
      %v2197 = vpop.xlane.xlu0 %2196
      %v2198 = vsel %vm917, %v2163, 0.0
      %2199 = vadd.xlane.f32.xlu0 %v2198
      %v2200 = vpop.xlane.xlu0 %2199
      %v2201 = vsel %vm917, %v2165, 0.0
      %2202 = vadd.xlane.f32.xlu0 %v2201
      %v2203 = vpop.xlane.xlu0 %2202
      %v2204 = vsel %vm917, %v2167, 0.0
      %2205 = vadd.xlane.f32.xlu0 %v2204
      %v2206 = vpop.xlane.xlu0 %2205
      %v2207 = vsel %vm917, %v2169, 0.0
      %2208 = vadd.xlane.f32.xlu0 %v2207
      %v2209 = vpop.xlane.xlu0 %2208
      %v2210 = vsel %vm917, %v2171, 0.0
      %2211 = vadd.xlane.f32.xlu0 %v2210
      %v2212 = vpop.xlane.xlu0 %2211
      %v2213 = vsel %vm917, %v2173, 0.0
      %2214 = vadd.xlane.f32.xlu0 %v2213
      %v2215 = vpop.xlane.xlu0 %2214
      %v2216 = vsel %vm917, %v2175, 0.0
      %2217 = vadd.xlane.f32.xlu0 %v2216
      %v2218 = vpop.xlane.xlu0 %2217
      %v2219 = vsel %vm917, %v2177, 0.0
      %2220 = vadd.xlane.f32.xlu0 %v2219
      %v2221 = vpop.xlane.xlu0 %2220
      %v2222 = vsel %vm917, %v2179, 0.0
      %2223 = vadd.xlane.f32.xlu0 %v2222
      %v2224 = vpop.xlane.xlu0 %2223
      %v2225 = vsel %vm917, %v2181, 0.0
      %2226 = vadd.xlane.f32.xlu0 %v2225
      %v2227 = vpop.xlane.xlu0 %2226
      %v2228 = vsel %vm917, %v2183, 0.0
      %2229 = vadd.xlane.f32.xlu0 %v2228
      %v2230 = vpop.xlane.xlu0 %2229
      %v2231 = vsel %vm917, %v2185, 0.0
      %2232 = vadd.xlane.f32.xlu0 %v2231
      %v2233 = vpop.xlane.xlu0 %2232
      %v2234 = vrcp.pop %v2188
      %v2235 = vrcp.pop %v2191
      %v2236 = vrcp.pop %v2194
      %v2237 = vrcp.pop %v2197
      %v2238 = vrcp.pop %v2200
      %v2239 = vrcp.pop %v2203
      %v2240 = vrcp.pop %v2206
      %v2241 = vrcp.pop %v2209
      %v2242 = vrcp.pop %v2212
      %v2243 = vrcp.pop %v2215
      %v2244 = vrcp.pop %v2218
      %v2245 = vrcp.pop %v2221
      %v2246 = vrcp.pop %v2224
      %v2247 = vrcp.pop %v2227
      %v2248 = vrcp.pop %v2230
      %v2249 = vrcp.pop %v2233
      %v2250 = vmul.f32 %v2155, %v2234
      %v2251 = vmul.f32 %v2157, %v2235
      %v2252 = vmul.f32 %v2159, %v2236
      %v2253 = vmul.f32 %v2161, %v2237
      %v2254 = vmul.f32 %v2163, %v2238
      %v2255 = vmul.f32 %v2165, %v2239
      %v2256 = vmul.f32 %v2167, %v2240
      %v2257 = vmul.f32 %v2169, %v2241
      %v2258 = vmul.f32 %v2171, %v2242
      %v2259 = vmul.f32 %v2173, %v2243
      %v2260 = vmul.f32 %v2175, %v2244
      %v2261 = vmul.f32 %v2177, %v2245
      %v2262 = vmul.f32 %v2179, %v2246
      %v2263 = vmul.f32 %v2181, %v2247
      %v2264 = vmul.f32 %v2183, %v2248
      %v2265 = vmul.f32 %v2185, %v2249
      %v2267 = vsel %vm917, %v2250, 0
      %2269 = vmatpush.msra.mxu0 0.0
      %2270 = vmatpush.msra.mxu0 0.0
      %2271 = vmatpush.msra.mxu0 0.0
      %2272 = vmatpush.msra.mxu0 0.0
      %2273 = vmatpush.msra.mxu0 0.0
      %2274 = vmatpush.msra.mxu0 0.0
      %2275 = vmatpush.msra.mxu0 0.0
      %2276 = vmatpush.msra.mxu0 0.0
      %2277 = vmatpush.msra.mxu0 0.0
      %2278 = vmatpush.msra.mxu0 0.0
      %2279 = vmatpush.msra.mxu0 0.0
      %2280 = vmatpush.msra.mxu0 0.0
      %2281 = vmatpush.msra.mxu0 0.0
      %2282 = vmatpush.msra.mxu0 0.0
      %2283 = vmatpush.msra.mxu0 0.0
      %2284 = vmatpush.msra.mxu0 %v1627
      %2285 = vmatmul.f32.gmra.mxu0 %v2267
      %v2286 = vpop.f32.mrf.mxu0
      %v2287 = vadd.f32 0.0, %v2286
      %2288 = vdwg.mxu0
      %v2290 = vsel %vm917, %v2251, 0
      %2292 = vmatpush.msra.mxu0 0.0
      %2293 = vmatpush.msra.mxu0 0.0
      %2294 = vmatpush.msra.mxu0 0.0
      %2295 = vmatpush.msra.mxu0 0.0
      %2296 = vmatpush.msra.mxu0 0.0
      %2297 = vmatpush.msra.mxu0 0.0
      %2298 = vmatpush.msra.mxu0 0.0
      %2299 = vmatpush.msra.mxu0 0.0
      %2300 = vmatpush.msra.mxu0 0.0
      %2301 = vmatpush.msra.mxu0 0.0
      %2302 = vmatpush.msra.mxu0 0.0
      %2303 = vmatpush.msra.mxu0 0.0
      %2304 = vmatpush.msra.mxu0 0.0
      %2305 = vmatpush.msra.mxu0 0.0
      %2306 = vmatpush.msra.mxu0 0.0
      %2307 = vmatpush.msra.mxu0 %v1630
      %2308 = vmatmul.f32.gmra.mxu0 %v2290
      %v2309 = vpop.f32.mrf.mxu0
      %v2310 = vadd.f32 0.0, %v2309
      %2311 = vdwg.mxu0
      %v2313 = vsel %vm917, %v2252, 0
      %2315 = vmatpush.msra.mxu0 0.0
      %2316 = vmatpush.msra.mxu0 0.0
      %2317 = vmatpush.msra.mxu0 0.0
      %2318 = vmatpush.msra.mxu0 0.0
      %2319 = vmatpush.msra.mxu0 0.0
      %2320 = vmatpush.msra.mxu0 0.0
      %2321 = vmatpush.msra.mxu0 0.0
      %2322 = vmatpush.msra.mxu0 0.0
      %2323 = vmatpush.msra.mxu0 0.0
      %2324 = vmatpush.msra.mxu0 0.0
      %2325 = vmatpush.msra.mxu0 0.0
      %2326 = vmatpush.msra.mxu0 0.0
      %2327 = vmatpush.msra.mxu0 0.0
      %2328 = vmatpush.msra.mxu0 0.0
      %2329 = vmatpush.msra.mxu0 0.0
      %2330 = vmatpush.msra.mxu0 %v1633
      %2331 = vmatmul.f32.gmra.mxu0 %v2313
      %v2332 = vpop.f32.mrf.mxu0
      %v2333 = vadd.f32 0.0, %v2332
      %2334 = vdwg.mxu0
      %v2336 = vsel %vm917, %v2253, 0
      %2338 = vmatpush.msra.mxu0 0.0
      %2339 = vmatpush.msra.mxu0 0.0
      %2340 = vmatpush.msra.mxu0 0.0
      %2341 = vmatpush.msra.mxu0 0.0
      %2342 = vmatpush.msra.mxu0 0.0
      %2343 = vmatpush.msra.mxu0 0.0
      %2344 = vmatpush.msra.mxu0 0.0
      %2345 = vmatpush.msra.mxu0 0.0
      %2346 = vmatpush.msra.mxu0 0.0
      %2347 = vmatpush.msra.mxu0 0.0
      %2348 = vmatpush.msra.mxu0 0.0
      %2349 = vmatpush.msra.mxu0 0.0
      %2350 = vmatpush.msra.mxu0 0.0
      %2351 = vmatpush.msra.mxu0 0.0
      %2352 = vmatpush.msra.mxu0 0.0
      %2353 = vmatpush.msra.mxu0 %v1636
      %2354 = vmatmul.f32.gmra.mxu0 %v2336
      %v2355 = vpop.f32.mrf.mxu0
      %v2356 = vadd.f32 0.0, %v2355
      %2357 = vdwg.mxu0
      %v2359 = vsel %vm917, %v2254, 0
      %2361 = vmatpush.msra.mxu0 0.0
      %2362 = vmatpush.msra.mxu0 0.0
      %2363 = vmatpush.msra.mxu0 0.0
      %2364 = vmatpush.msra.mxu0 0.0
      %2365 = vmatpush.msra.mxu0 0.0
      %2366 = vmatpush.msra.mxu0 0.0
      %2367 = vmatpush.msra.mxu0 0.0
      %2368 = vmatpush.msra.mxu0 0.0
      %2369 = vmatpush.msra.mxu0 0.0
      %2370 = vmatpush.msra.mxu0 0.0
      %2371 = vmatpush.msra.mxu0 0.0
      %2372 = vmatpush.msra.mxu0 0.0
      %2373 = vmatpush.msra.mxu0 0.0
      %2374 = vmatpush.msra.mxu0 0.0
      %2375 = vmatpush.msra.mxu0 0.0
      %2376 = vmatpush.msra.mxu0 %v1639
      %2377 = vmatmul.f32.gmra.mxu0 %v2359
      %v2378 = vpop.f32.mrf.mxu0
      %v2379 = vadd.f32 0.0, %v2378
      %2380 = vdwg.mxu0
      %v2382 = vsel %vm917, %v2255, 0
      %2384 = vmatpush.msra.mxu0 0.0
      %2385 = vmatpush.msra.mxu0 0.0
      %2386 = vmatpush.msra.mxu0 0.0
      %2387 = vmatpush.msra.mxu0 0.0
      %2388 = vmatpush.msra.mxu0 0.0
      %2389 = vmatpush.msra.mxu0 0.0
      %2390 = vmatpush.msra.mxu0 0.0
      %2391 = vmatpush.msra.mxu0 0.0
      %2392 = vmatpush.msra.mxu0 0.0
      %2393 = vmatpush.msra.mxu0 0.0
      %2394 = vmatpush.msra.mxu0 0.0
      %2395 = vmatpush.msra.mxu0 0.0
      %2396 = vmatpush.msra.mxu0 0.0
      %2397 = vmatpush.msra.mxu0 0.0
      %2398 = vmatpush.msra.mxu0 0.0
      %2399 = vmatpush.msra.mxu0 %v1642
      %2400 = vmatmul.f32.gmra.mxu0 %v2382
      %v2401 = vpop.f32.mrf.mxu0
      %v2402 = vadd.f32 0.0, %v2401
      %2403 = vdwg.mxu0
      %v2405 = vsel %vm917, %v2256, 0
      %2407 = vmatpush.msra.mxu0 0.0
      %2408 = vmatpush.msra.mxu0 0.0
      %2409 = vmatpush.msra.mxu0 0.0
      %2410 = vmatpush.msra.mxu0 0.0
      %2411 = vmatpush.msra.mxu0 0.0
      %2412 = vmatpush.msra.mxu0 0.0
      %2413 = vmatpush.msra.mxu0 0.0
      %2414 = vmatpush.msra.mxu0 0.0
      %2415 = vmatpush.msra.mxu0 0.0
      %2416 = vmatpush.msra.mxu0 0.0
      %2417 = vmatpush.msra.mxu0 0.0
      %2418 = vmatpush.msra.mxu0 0.0
      %2419 = vmatpush.msra.mxu0 0.0
      %2420 = vmatpush.msra.mxu0 0.0
      %2421 = vmatpush.msra.mxu0 0.0
      %2422 = vmatpush.msra.mxu0 %v1645
      %2423 = vmatmul.f32.gmra.mxu0 %v2405
      %v2424 = vpop.f32.mrf.mxu0
      %v2425 = vadd.f32 0.0, %v2424
      %2426 = vdwg.mxu0
      %v2428 = vsel %vm917, %v2257, 0
      %2430 = vmatpush.msra.mxu0 0.0
      %2431 = vmatpush.msra.mxu0 0.0
      %2432 = vmatpush.msra.mxu0 0.0
      %2433 = vmatpush.msra.mxu0 0.0
      %2434 = vmatpush.msra.mxu0 0.0
      %2435 = vmatpush.msra.mxu0 0.0
      %2436 = vmatpush.msra.mxu0 0.0
      %2437 = vmatpush.msra.mxu0 0.0
      %2438 = vmatpush.msra.mxu0 0.0
      %2439 = vmatpush.msra.mxu0 0.0
      %2440 = vmatpush.msra.mxu0 0.0
      %2441 = vmatpush.msra.mxu0 0.0
      %2442 = vmatpush.msra.mxu0 0.0
      %2443 = vmatpush.msra.mxu0 0.0
      %2444 = vmatpush.msra.mxu0 0.0
      %2445 = vmatpush.msra.mxu0 %v1648
      %2446 = vmatmul.f32.gmra.mxu0 %v2428
      %v2447 = vpop.f32.mrf.mxu0
      %v2448 = vadd.f32 0.0, %v2447
      %2449 = vdwg.mxu0
      %v2451 = vsel %vm917, %v2258, 0
      %2453 = vmatpush.msra.mxu0 0.0
      %2454 = vmatpush.msra.mxu0 0.0
      %2455 = vmatpush.msra.mxu0 0.0
      %2456 = vmatpush.msra.mxu0 0.0
      %2457 = vmatpush.msra.mxu0 0.0
      %2458 = vmatpush.msra.mxu0 0.0
      %2459 = vmatpush.msra.mxu0 0.0
      %2460 = vmatpush.msra.mxu0 0.0
      %2461 = vmatpush.msra.mxu0 0.0
      %2462 = vmatpush.msra.mxu0 0.0
      %2463 = vmatpush.msra.mxu0 0.0
      %2464 = vmatpush.msra.mxu0 0.0
      %2465 = vmatpush.msra.mxu0 0.0
      %2466 = vmatpush.msra.mxu0 0.0
      %2467 = vmatpush.msra.mxu0 0.0
      %2468 = vmatpush.msra.mxu0 %v1651
      %2469 = vmatmul.f32.gmra.mxu0 %v2451
      %v2470 = vpop.f32.mrf.mxu0
      %v2471 = vadd.f32 0.0, %v2470
      %2472 = vdwg.mxu0
      %v2474 = vsel %vm917, %v2259, 0
      %2476 = vmatpush.msra.mxu0 0.0
      %2477 = vmatpush.msra.mxu0 0.0
      %2478 = vmatpush.msra.mxu0 0.0
      %2479 = vmatpush.msra.mxu0 0.0
      %2480 = vmatpush.msra.mxu0 0.0
      %2481 = vmatpush.msra.mxu0 0.0
      %2482 = vmatpush.msra.mxu0 0.0
      %2483 = vmatpush.msra.mxu0 0.0
      %2484 = vmatpush.msra.mxu0 0.0
      %2485 = vmatpush.msra.mxu0 0.0
      %2486 = vmatpush.msra.mxu0 0.0
      %2487 = vmatpush.msra.mxu0 0.0
      %2488 = vmatpush.msra.mxu0 0.0
      %2489 = vmatpush.msra.mxu0 0.0
      %2490 = vmatpush.msra.mxu0 0.0
      %2491 = vmatpush.msra.mxu0 %v1654
      %2492 = vmatmul.f32.gmra.mxu0 %v2474
      %v2493 = vpop.f32.mrf.mxu0
      %v2494 = vadd.f32 0.0, %v2493
      %2495 = vdwg.mxu0
      %v2497 = vsel %vm917, %v2260, 0
      %2499 = vmatpush.msra.mxu0 0.0
      %2500 = vmatpush.msra.mxu0 0.0
      %2501 = vmatpush.msra.mxu0 0.0
      %2502 = vmatpush.msra.mxu0 0.0
      %2503 = vmatpush.msra.mxu0 0.0
      %2504 = vmatpush.msra.mxu0 0.0
      %2505 = vmatpush.msra.mxu0 0.0
      %2506 = vmatpush.msra.mxu0 0.0
      %2507 = vmatpush.msra.mxu0 0.0
      %2508 = vmatpush.msra.mxu0 0.0
      %2509 = vmatpush.msra.mxu0 0.0
      %2510 = vmatpush.msra.mxu0 0.0
      %2511 = vmatpush.msra.mxu0 0.0
      %2512 = vmatpush.msra.mxu0 0.0
      %2513 = vmatpush.msra.mxu0 0.0
      %2514 = vmatpush.msra.mxu0 %v1657
      %2515 = vmatmul.f32.gmra.mxu0 %v2497
      %v2516 = vpop.f32.mrf.mxu0
      %v2517 = vadd.f32 0.0, %v2516
      %2518 = vdwg.mxu0
      %v2520 = vsel %vm917, %v2261, 0
      %2522 = vmatpush.msra.mxu0 0.0
      %2523 = vmatpush.msra.mxu0 0.0
      %2524 = vmatpush.msra.mxu0 0.0
      %2525 = vmatpush.msra.mxu0 0.0
      %2526 = vmatpush.msra.mxu0 0.0
      %2527 = vmatpush.msra.mxu0 0.0
      %2528 = vmatpush.msra.mxu0 0.0
      %2529 = vmatpush.msra.mxu0 0.0
      %2530 = vmatpush.msra.mxu0 0.0
      %2531 = vmatpush.msra.mxu0 0.0
      %2532 = vmatpush.msra.mxu0 0.0
      %2533 = vmatpush.msra.mxu0 0.0
      %2534 = vmatpush.msra.mxu0 0.0
      %2535 = vmatpush.msra.mxu0 0.0
      %2536 = vmatpush.msra.mxu0 0.0
      %2537 = vmatpush.msra.mxu0 %v1660
      %2538 = vmatmul.f32.gmra.mxu0 %v2520
      %v2539 = vpop.f32.mrf.mxu0
      %v2540 = vadd.f32 0.0, %v2539
      %2541 = vdwg.mxu0
      %v2543 = vsel %vm917, %v2262, 0
      %2545 = vmatpush.msra.mxu0 0.0
      %2546 = vmatpush.msra.mxu0 0.0
      %2547 = vmatpush.msra.mxu0 0.0
      %2548 = vmatpush.msra.mxu0 0.0
      %2549 = vmatpush.msra.mxu0 0.0
      %2550 = vmatpush.msra.mxu0 0.0
      %2551 = vmatpush.msra.mxu0 0.0
      %2552 = vmatpush.msra.mxu0 0.0
      %2553 = vmatpush.msra.mxu0 0.0
      %2554 = vmatpush.msra.mxu0 0.0
      %2555 = vmatpush.msra.mxu0 0.0
      %2556 = vmatpush.msra.mxu0 0.0
      %2557 = vmatpush.msra.mxu0 0.0
      %2558 = vmatpush.msra.mxu0 0.0
      %2559 = vmatpush.msra.mxu0 0.0
      %2560 = vmatpush.msra.mxu0 %v1663
      %2561 = vmatmul.f32.gmra.mxu0 %v2543
      %v2562 = vpop.f32.mrf.mxu0
      %v2563 = vadd.f32 0.0, %v2562
      %2564 = vdwg.mxu0
      %v2566 = vsel %vm917, %v2263, 0
      %2568 = vmatpush.msra.mxu0 0.0
      %2569 = vmatpush.msra.mxu0 0.0
      %2570 = vmatpush.msra.mxu0 0.0
      %2571 = vmatpush.msra.mxu0 0.0
      %2572 = vmatpush.msra.mxu0 0.0
      %2573 = vmatpush.msra.mxu0 0.0
      %2574 = vmatpush.msra.mxu0 0.0
      %2575 = vmatpush.msra.mxu0 0.0
      %2576 = vmatpush.msra.mxu0 0.0
      %2577 = vmatpush.msra.mxu0 0.0
      %2578 = vmatpush.msra.mxu0 0.0
      %2579 = vmatpush.msra.mxu0 0.0
      %2580 = vmatpush.msra.mxu0 0.0
      %2581 = vmatpush.msra.mxu0 0.0
      %2582 = vmatpush.msra.mxu0 0.0
      %2583 = vmatpush.msra.mxu0 %v1666
      %2584 = vmatmul.f32.gmra.mxu0 %v2566
      %v2585 = vpop.f32.mrf.mxu0
      %v2586 = vadd.f32 0.0, %v2585
      %2587 = vdwg.mxu0
      %v2589 = vsel %vm917, %v2264, 0
      %2591 = vmatpush.msra.mxu0 0.0
      %2592 = vmatpush.msra.mxu0 0.0
      %2593 = vmatpush.msra.mxu0 0.0
      %2594 = vmatpush.msra.mxu0 0.0
      %2595 = vmatpush.msra.mxu0 0.0
      %2596 = vmatpush.msra.mxu0 0.0
      %2597 = vmatpush.msra.mxu0 0.0
      %2598 = vmatpush.msra.mxu0 0.0
      %2599 = vmatpush.msra.mxu0 0.0
      %2600 = vmatpush.msra.mxu0 0.0
      %2601 = vmatpush.msra.mxu0 0.0
      %2602 = vmatpush.msra.mxu0 0.0
      %2603 = vmatpush.msra.mxu0 0.0
      %2604 = vmatpush.msra.mxu0 0.0
      %2605 = vmatpush.msra.mxu0 0.0
      %2606 = vmatpush.msra.mxu0 %v1669
      %2607 = vmatmul.f32.gmra.mxu0 %v2589
      %v2608 = vpop.f32.mrf.mxu0
      %v2609 = vadd.f32 0.0, %v2608
      %2610 = vdwg.mxu0
      %v2612 = vsel %vm917, %v2265, 0
      %2614 = vmatpush.msra.mxu0 0.0
      %2615 = vmatpush.msra.mxu0 0.0
      %2616 = vmatpush.msra.mxu0 0.0
      %2617 = vmatpush.msra.mxu0 0.0
      %2618 = vmatpush.msra.mxu0 0.0
      %2619 = vmatpush.msra.mxu0 0.0
      %2620 = vmatpush.msra.mxu0 0.0
      %2621 = vmatpush.msra.mxu0 0.0
      %2622 = vmatpush.msra.mxu0 0.0
      %2623 = vmatpush.msra.mxu0 0.0
      %2624 = vmatpush.msra.mxu0 0.0
      %2625 = vmatpush.msra.mxu0 0.0
      %2626 = vmatpush.msra.mxu0 0.0
      %2627 = vmatpush.msra.mxu0 0.0
      %2628 = vmatpush.msra.mxu0 0.0
      %2629 = vmatpush.msra.mxu0 %v1672
      %2630 = vmatmul.f32.gmra.mxu0 %v2612
      %v2631 = vpop.f32.mrf.mxu0
      %v2632 = vadd.f32 0.0, %v2631
      %2633 = vdwg.mxu0
      %s2634 = scalar_lea.vmem %s4, 16
      %v2635 = vld [vmem:[%s2634] sm:$0xff]
      %v2636 = vld [vmem:[%s2634 + $0x8] sm:$0xff]
      %v2638 = vsel %vm500, %v2287, 0
      %v2641 = vsel %vm500, %v2310, 0
      %v2644 = vsel %vm500, %v2333, 0
      %v2647 = vsel %vm500, %v2356, 0
      %v2650 = vsel %vm500, %v2379, 0
      %v2653 = vsel %vm500, %v2402, 0
      %v2656 = vsel %vm500, %v2425, 0
      %v2659 = vsel %vm500, %v2448, 0
      %v2662 = vsel %vm500, %v2471, 0
      %v2665 = vsel %vm500, %v2494, 0
      %v2668 = vsel %vm500, %v2517, 0
      %v2671 = vsel %vm500, %v2540, 0
      %v2674 = vsel %vm500, %v2563, 0
      %v2677 = vsel %vm500, %v2586, 0
      %v2680 = vsel %vm500, %v2609, 0
      %v2683 = vsel %vm500, %v2632, 0
      %2685 = vmatpush.msra.mxu0 0.0
      %2686 = vmatpush.msra.mxu0 0.0
      %2687 = vmatpush.msra.mxu0 0.0
      %2688 = vmatpush.msra.mxu0 0.0
      %2689 = vmatpush.msra.mxu0 0.0
      %2690 = vmatpush.msra.mxu0 0.0
      %2691 = vmatpush.msra.mxu0 0.0
      %2692 = vmatpush.msra.mxu0 0.0
      %2693 = vmatpush.msra.mxu0 0.0
      %2694 = vmatpush.msra.mxu0 0.0
      %2695 = vmatpush.msra.mxu0 0.0
      %2696 = vmatpush.msra.mxu0 0.0
      %2697 = vmatpush.msra.mxu0 0.0
      %2698 = vmatpush.msra.mxu0 0.0
      %2699 = vmatpush.msra.mxu0 %v2636
      %2700 = vmatpush.msra.mxu0 %v2635
      %2701 = vmatmul.f32.gmra.mxu0 %v2638
      %v2702 = vpop.f32.mrf.mxu0
      %v2703 = vadd.f32 0.0, %v2702
      %2704 = vmatmul.f32.gmra.mxu0 %v2641
      %v2705 = vpop.f32.mrf.mxu0
      %v2706 = vadd.f32 0.0, %v2705
      %2707 = vmatmul.f32.gmra.mxu0 %v2644
      %v2708 = vpop.f32.mrf.mxu0
      %v2709 = vadd.f32 0.0, %v2708
      %2710 = vmatmul.f32.gmra.mxu0 %v2647
      %v2711 = vpop.f32.mrf.mxu0
      %v2712 = vadd.f32 0.0, %v2711
      %2713 = vmatmul.f32.gmra.mxu0 %v2650
      %v2714 = vpop.f32.mrf.mxu0
      %v2715 = vadd.f32 0.0, %v2714
      %2716 = vmatmul.f32.gmra.mxu0 %v2653
      %v2717 = vpop.f32.mrf.mxu0
      %v2718 = vadd.f32 0.0, %v2717
      %2719 = vmatmul.f32.gmra.mxu0 %v2656
      %v2720 = vpop.f32.mrf.mxu0
      %v2721 = vadd.f32 0.0, %v2720
      %2722 = vmatmul.f32.gmra.mxu0 %v2659
      %v2723 = vpop.f32.mrf.mxu0
      %v2724 = vadd.f32 0.0, %v2723
      %2725 = vmatmul.f32.gmra.mxu0 %v2662
      %v2726 = vpop.f32.mrf.mxu0
      %v2727 = vadd.f32 0.0, %v2726
      %2728 = vmatmul.f32.gmra.mxu0 %v2665
      %v2729 = vpop.f32.mrf.mxu0
      %v2730 = vadd.f32 0.0, %v2729
      %2731 = vmatmul.f32.gmra.mxu0 %v2668
      %v2732 = vpop.f32.mrf.mxu0
      %v2733 = vadd.f32 0.0, %v2732
      %2734 = vmatmul.f32.gmra.mxu0 %v2671
      %v2735 = vpop.f32.mrf.mxu0
      %v2736 = vadd.f32 0.0, %v2735
      %2737 = vmatmul.f32.gmra.mxu0 %v2674
      %v2738 = vpop.f32.mrf.mxu0
      %v2739 = vadd.f32 0.0, %v2738
      %2740 = vmatmul.f32.gmra.mxu0 %v2677
      %v2741 = vpop.f32.mrf.mxu0
      %v2742 = vadd.f32 0.0, %v2741
      %2743 = vmatmul.f32.gmra.mxu0 %v2680
      %v2744 = vpop.f32.mrf.mxu0
      %v2745 = vadd.f32 0.0, %v2744
      %2746 = vmatmul.f32.gmra.mxu0 %v2683
      %v2747 = vpop.f32.mrf.mxu0
      %v2748 = vadd.f32 0.0, %v2747
      %2749 = vdwg.mxu0
      %v2751 = vsel %vm500, %v1115, 0
      %v2754 = vsel %vm500, %v1138, 0
      %v2757 = vsel %vm500, %v1161, 0
      %v2760 = vsel %vm500, %v1184, 0
      %v2763 = vsel %vm500, %v1207, 0
      %v2766 = vsel %vm500, %v1230, 0
      %v2769 = vsel %vm500, %v1253, 0
      %v2772 = vsel %vm500, %v1276, 0
      %v2775 = vsel %vm500, %v1299, 0
      %v2778 = vsel %vm500, %v1322, 0
      %v2781 = vsel %vm500, %v1345, 0
      %v2784 = vsel %vm500, %v1368, 0
      %v2787 = vsel %vm500, %v1391, 0
      %v2790 = vsel %vm500, %v1414, 0
      %v2793 = vsel %vm500, %v1437, 0
      %v2796 = vsel %vm500, %v1460, 0
      %2798 = vmatpush.msra.mxu0 0.0
      %2799 = vmatpush.msra.mxu0 0.0
      %2800 = vmatpush.msra.mxu0 0.0
      %2801 = vmatpush.msra.mxu0 0.0
      %2802 = vmatpush.msra.mxu0 0.0
      %2803 = vmatpush.msra.mxu0 0.0
      %2804 = vmatpush.msra.mxu0 0.0
      %2805 = vmatpush.msra.mxu0 0.0
      %2806 = vmatpush.msra.mxu0 0.0
      %2807 = vmatpush.msra.mxu0 0.0
      %2808 = vmatpush.msra.mxu0 0.0
      %2809 = vmatpush.msra.mxu0 0.0
      %2810 = vmatpush.msra.mxu0 0.0
      %2811 = vmatpush.msra.mxu0 0.0
      %2812 = vmatpush.msra.mxu0 %v1463
      %2813 = vmatpush.msra.mxu0 %v1462
      %2814 = vmatmul.f32.gmra.mxu0 %v2751
      %v2815 = vpop.f32.mrf.mxu0
      %v2816 = vadd.f32 %v2703, %v2815
      %2817 = vmatmul.f32.gmra.mxu0 %v2754
      %v2818 = vpop.f32.mrf.mxu0
      %v2819 = vadd.f32 %v2706, %v2818
      %2820 = vmatmul.f32.gmra.mxu0 %v2757
      %v2821 = vpop.f32.mrf.mxu0
      %v2822 = vadd.f32 %v2709, %v2821
      %2823 = vmatmul.f32.gmra.mxu0 %v2760
      %v2824 = vpop.f32.mrf.mxu0
      %v2825 = vadd.f32 %v2712, %v2824
      %2826 = vmatmul.f32.gmra.mxu0 %v2763
      %v2827 = vpop.f32.mrf.mxu0
      %v2828 = vadd.f32 %v2715, %v2827
      %2829 = vmatmul.f32.gmra.mxu0 %v2766
      %v2830 = vpop.f32.mrf.mxu0
      %v2831 = vadd.f32 %v2718, %v2830
      %2832 = vmatmul.f32.gmra.mxu0 %v2769
      %v2833 = vpop.f32.mrf.mxu0
      %v2834 = vadd.f32 %v2721, %v2833
      %2835 = vmatmul.f32.gmra.mxu0 %v2772
      %v2836 = vpop.f32.mrf.mxu0
      %v2837 = vadd.f32 %v2724, %v2836
      %2838 = vmatmul.f32.gmra.mxu0 %v2775
      %v2839 = vpop.f32.mrf.mxu0
      %v2840 = vadd.f32 %v2727, %v2839
      %2841 = vmatmul.f32.gmra.mxu0 %v2778
      %v2842 = vpop.f32.mrf.mxu0
      %v2843 = vadd.f32 %v2730, %v2842
      %2844 = vmatmul.f32.gmra.mxu0 %v2781
      %v2845 = vpop.f32.mrf.mxu0
      %v2846 = vadd.f32 %v2733, %v2845
      %2847 = vmatmul.f32.gmra.mxu0 %v2784
      %v2848 = vpop.f32.mrf.mxu0
      %v2849 = vadd.f32 %v2736, %v2848
      %2850 = vmatmul.f32.gmra.mxu0 %v2787
      %v2851 = vpop.f32.mrf.mxu0
      %v2852 = vadd.f32 %v2739, %v2851
      %2853 = vmatmul.f32.gmra.mxu0 %v2790
      %v2854 = vpop.f32.mrf.mxu0
      %v2855 = vadd.f32 %v2742, %v2854
      %2856 = vmatmul.f32.gmra.mxu0 %v2793
      %v2857 = vpop.f32.mrf.mxu0
      %v2858 = vadd.f32 %v2745, %v2857
      %2859 = vmatmul.f32.gmra.mxu0 %v2796
      %v2860 = vpop.f32.mrf.mxu0
      %v2861 = vadd.f32 %v2748, %v2860
      %2862 = vdwg.mxu0
      %s2863 = scalar_lea.vmem %s1, 64
      %v2864 = vld [vmem:[%s2863] sm:$0xff]
      %v2865 = vld [vmem:[%s2863 + $0x8] sm:$0xff]
      %v2866 = vld [vmem:[%s2863 + $0x10] sm:$0xff]
      %v2867 = vld [vmem:[%s2863 + $0x18] sm:$0xff]
      %2868 = vmatpush.msra.mxu0 0.0
      %2869 = vmatpush.msra.mxu0 0.0
      %2870 = vmatpush.msra.mxu0 0.0
      %2871 = vmatpush.msra.mxu0 0.0
      %2872 = vmatpush.msra.mxu0 0.0
      %2873 = vmatpush.msra.mxu0 0.0
      %2874 = vmatpush.msra.mxu0 0.0
      %2875 = vmatpush.msra.mxu0 0.0
      %2876 = vmatpush.msra.mxu0 0.0
      %2877 = vmatpush.msra.mxu0 0.0
      %2878 = vmatpush.msra.mxu0 0.0
      %2879 = vmatpush.msra.mxu0 0.0
      %2880 = vmatpush.msra.mxu0 %v2867
      %2881 = vmatpush.msra.mxu0 %v2866
      %2882 = vmatpush.msra.mxu0 %v2865
      %2883 = vmatpush.msra.mxu0 %v2864
      %2884 = vmatmul.f32.gmra.mxu0 %v250
      %v2885 = vpop.f32.mrf.mxu0
      %v2886 = vadd.f32 0.0, %v2885
      %2887 = vmatmul.f32.gmra.mxu0 %v253
      %v2888 = vpop.f32.mrf.mxu0
      %v2889 = vadd.f32 0.0, %v2888
      %2890 = vmatmul.f32.gmra.mxu0 %v256
      %v2891 = vpop.f32.mrf.mxu0
      %v2892 = vadd.f32 0.0, %v2891
      %2893 = vmatmul.f32.gmra.mxu0 %v259
      %v2894 = vpop.f32.mrf.mxu0
      %v2895 = vadd.f32 0.0, %v2894
      %2896 = vmatmul.f32.gmra.mxu0 %v262
      %v2897 = vpop.f32.mrf.mxu0
      %v2898 = vadd.f32 0.0, %v2897
      %2899 = vmatmul.f32.gmra.mxu0 %v265
      %v2900 = vpop.f32.mrf.mxu0
      %v2901 = vadd.f32 0.0, %v2900
      %2902 = vmatmul.f32.gmra.mxu0 %v268
      %v2903 = vpop.f32.mrf.mxu0
      %v2904 = vadd.f32 0.0, %v2903
      %2905 = vmatmul.f32.gmra.mxu0 %v271
      %v2906 = vpop.f32.mrf.mxu0
      %v2907 = vadd.f32 0.0, %v2906
      %2908 = vmatmul.f32.gmra.mxu0 %v274
      %v2909 = vpop.f32.mrf.mxu0
      %v2910 = vadd.f32 0.0, %v2909
      %2911 = vmatmul.f32.gmra.mxu0 %v277
      %v2912 = vpop.f32.mrf.mxu0
      %v2913 = vadd.f32 0.0, %v2912
      %2914 = vmatmul.f32.gmra.mxu0 %v280
      %v2915 = vpop.f32.mrf.mxu0
      %v2916 = vadd.f32 0.0, %v2915
      %2917 = vmatmul.f32.gmra.mxu0 %v283
      %v2918 = vpop.f32.mrf.mxu0
      %v2919 = vadd.f32 0.0, %v2918
      %2920 = vmatmul.f32.gmra.mxu0 %v286
      %v2921 = vpop.f32.mrf.mxu0
      %v2922 = vadd.f32 0.0, %v2921
      %2923 = vmatmul.f32.gmra.mxu0 %v289
      %v2924 = vpop.f32.mrf.mxu0
      %v2925 = vadd.f32 0.0, %v2924
      %2926 = vmatmul.f32.gmra.mxu0 %v292
      %v2927 = vpop.f32.mrf.mxu0
      %v2928 = vadd.f32 0.0, %v2927
      %2929 = vmatmul.f32.gmra.mxu0 %v295
      %v2930 = vpop.f32.mrf.mxu0
      %v2931 = vadd.f32 0.0, %v2930
      %2932 = vdwg.mxu0
      %s2933 = scalar_lea.vmem %s2, 64
      %v2934 = vld [vmem:[%s2933] sm:$0xff]
      %v2935 = vld [vmem:[%s2933 + $0x8] sm:$0xff]
      %v2936 = vld [vmem:[%s2933 + $0x10] sm:$0xff]
      %v2937 = vld [vmem:[%s2933 + $0x18] sm:$0xff]
      %2938 = vmatpush.msra.mxu0 0.0
      %2939 = vmatpush.msra.mxu0 0.0
      %2940 = vmatpush.msra.mxu0 0.0
      %2941 = vmatpush.msra.mxu0 0.0
      %2942 = vmatpush.msra.mxu0 0.0
      %2943 = vmatpush.msra.mxu0 0.0
      %2944 = vmatpush.msra.mxu0 0.0
      %2945 = vmatpush.msra.mxu0 0.0
      %2946 = vmatpush.msra.mxu0 0.0
      %2947 = vmatpush.msra.mxu0 0.0
      %2948 = vmatpush.msra.mxu0 0.0
      %2949 = vmatpush.msra.mxu0 0.0
      %2950 = vmatpush.msra.mxu0 %v2937
      %2951 = vmatpush.msra.mxu0 %v2936
      %2952 = vmatpush.msra.mxu0 %v2935
      %2953 = vmatpush.msra.mxu0 %v2934
      %2954 = vmatmul.f32.gmra.mxu0 %v250
      %v2955 = vpop.f32.mrf.mxu0
      %v2956 = vadd.f32 0.0, %v2955
      %2957 = vmatmul.f32.gmra.mxu0 %v253
      %v2958 = vpop.f32.mrf.mxu0
      %v2959 = vadd.f32 0.0, %v2958
      %2960 = vmatmul.f32.gmra.mxu0 %v256
      %v2961 = vpop.f32.mrf.mxu0
      %v2962 = vadd.f32 0.0, %v2961
      %2963 = vmatmul.f32.gmra.mxu0 %v259
      %v2964 = vpop.f32.mrf.mxu0
      %v2965 = vadd.f32 0.0, %v2964
      %2966 = vmatmul.f32.gmra.mxu0 %v262
      %v2967 = vpop.f32.mrf.mxu0
      %v2968 = vadd.f32 0.0, %v2967
      %2969 = vmatmul.f32.gmra.mxu0 %v265
      %v2970 = vpop.f32.mrf.mxu0
      %v2971 = vadd.f32 0.0, %v2970
      %2972 = vmatmul.f32.gmra.mxu0 %v268
      %v2973 = vpop.f32.mrf.mxu0
      %v2974 = vadd.f32 0.0, %v2973
      %2975 = vmatmul.f32.gmra.mxu0 %v271
      %v2976 = vpop.f32.mrf.mxu0
      %v2977 = vadd.f32 0.0, %v2976
      %2978 = vmatmul.f32.gmra.mxu0 %v274
      %v2979 = vpop.f32.mrf.mxu0
      %v2980 = vadd.f32 0.0, %v2979
      %2981 = vmatmul.f32.gmra.mxu0 %v277
      %v2982 = vpop.f32.mrf.mxu0
      %v2983 = vadd.f32 0.0, %v2982
      %2984 = vmatmul.f32.gmra.mxu0 %v280
      %v2985 = vpop.f32.mrf.mxu0
      %v2986 = vadd.f32 0.0, %v2985
      %2987 = vmatmul.f32.gmra.mxu0 %v283
      %v2988 = vpop.f32.mrf.mxu0
      %v2989 = vadd.f32 0.0, %v2988
      %2990 = vmatmul.f32.gmra.mxu0 %v286
      %v2991 = vpop.f32.mrf.mxu0
      %v2992 = vadd.f32 0.0, %v2991
      %2993 = vmatmul.f32.gmra.mxu0 %v289
      %v2994 = vpop.f32.mrf.mxu0
      %v2995 = vadd.f32 0.0, %v2994
      %2996 = vmatmul.f32.gmra.mxu0 %v292
      %v2997 = vpop.f32.mrf.mxu0
      %v2998 = vadd.f32 0.0, %v2997
      %2999 = vmatmul.f32.gmra.mxu0 %v295
      %v3000 = vpop.f32.mrf.mxu0
      %v3001 = vadd.f32 0.0, %v3000
      %3002 = vdwg.mxu0
      %s3003 = scalar_lea.vmem %s3, 64
      %v3004 = vld [vmem:[%s3003] sm:$0xff]
      %v3005 = vld [vmem:[%s3003 + $0x8] sm:$0xff]
      %v3006 = vld [vmem:[%s3003 + $0x10] sm:$0xff]
      %v3007 = vld [vmem:[%s3003 + $0x18] sm:$0xff]
      %3008 = vmatpush.msra.mxu0 0.0
      %3009 = vmatpush.msra.mxu0 0.0
      %3010 = vmatpush.msra.mxu0 0.0
      %3011 = vmatpush.msra.mxu0 0.0
      %3012 = vmatpush.msra.mxu0 0.0
      %3013 = vmatpush.msra.mxu0 0.0
      %3014 = vmatpush.msra.mxu0 0.0
      %3015 = vmatpush.msra.mxu0 0.0
      %3016 = vmatpush.msra.mxu0 0.0
      %3017 = vmatpush.msra.mxu0 0.0
      %3018 = vmatpush.msra.mxu0 0.0
      %3019 = vmatpush.msra.mxu0 0.0
      %3020 = vmatpush.msra.mxu0 %v3007
      %3021 = vmatpush.msra.mxu0 %v3006
      %3022 = vmatpush.msra.mxu0 %v3005
      %3023 = vmatpush.msra.mxu0 %v3004
      %3024 = vmatmul.f32.gmra.mxu0 %v250
      %v3025 = vpop.f32.mrf.mxu0
      %v3026 = vadd.f32 0.0, %v3025
      %3027 = vmatmul.f32.gmra.mxu0 %v253
      %v3028 = vpop.f32.mrf.mxu0
      %v3029 = vadd.f32 0.0, %v3028
      %3030 = vmatmul.f32.gmra.mxu0 %v256
      %v3031 = vpop.f32.mrf.mxu0
      %v3032 = vadd.f32 0.0, %v3031
      %3033 = vmatmul.f32.gmra.mxu0 %v259
      %v3034 = vpop.f32.mrf.mxu0
      %v3035 = vadd.f32 0.0, %v3034
      %3036 = vmatmul.f32.gmra.mxu0 %v262
      %v3037 = vpop.f32.mrf.mxu0
      %v3038 = vadd.f32 0.0, %v3037
      %3039 = vmatmul.f32.gmra.mxu0 %v265
      %v3040 = vpop.f32.mrf.mxu0
      %v3041 = vadd.f32 0.0, %v3040
      %3042 = vmatmul.f32.gmra.mxu0 %v268
      %v3043 = vpop.f32.mrf.mxu0
      %v3044 = vadd.f32 0.0, %v3043
      %3045 = vmatmul.f32.gmra.mxu0 %v271
      %v3046 = vpop.f32.mrf.mxu0
      %v3047 = vadd.f32 0.0, %v3046
      %3048 = vmatmul.f32.gmra.mxu0 %v274
      %v3049 = vpop.f32.mrf.mxu0
      %v3050 = vadd.f32 0.0, %v3049
      %3051 = vmatmul.f32.gmra.mxu0 %v277
      %v3052 = vpop.f32.mrf.mxu0
      %v3053 = vadd.f32 0.0, %v3052
      %3054 = vmatmul.f32.gmra.mxu0 %v280
      %v3055 = vpop.f32.mrf.mxu0
      %v3056 = vadd.f32 0.0, %v3055
      %3057 = vmatmul.f32.gmra.mxu0 %v283
      %v3058 = vpop.f32.mrf.mxu0
      %v3059 = vadd.f32 0.0, %v3058
      %3060 = vmatmul.f32.gmra.mxu0 %v286
      %v3061 = vpop.f32.mrf.mxu0
      %v3062 = vadd.f32 0.0, %v3061
      %3063 = vmatmul.f32.gmra.mxu0 %v289
      %v3064 = vpop.f32.mrf.mxu0
      %v3065 = vadd.f32 0.0, %v3064
      %3066 = vmatmul.f32.gmra.mxu0 %v292
      %v3067 = vpop.f32.mrf.mxu0
      %v3068 = vadd.f32 0.0, %v3067
      %3069 = vmatmul.f32.gmra.mxu0 %v295
      %v3070 = vpop.f32.mrf.mxu0
      %v3071 = vadd.f32 0.0, %v3070
      %3072 = vdwg.mxu0
      %v3074 = vsel %vm500, %v2886, 0
      %v3077 = vsel %vm500, %v2956, 0
      %3079 = vmatpush.xpose.msra.mxu0 0.0
      %3080 = vmatpush.xpose.msra.mxu0 0.0
      %3081 = vmatpush.xpose.msra.mxu0 0.0
      %3082 = vmatpush.xpose.msra.mxu0 0.0
      %3083 = vmatpush.xpose.msra.mxu0 0.0
      %3084 = vmatpush.xpose.msra.mxu0 0.0
      %3085 = vmatpush.xpose.msra.mxu0 0.0
      %3086 = vmatpush.xpose.msra.mxu0 0.0
      %3087 = vmatpush.xpose.msra.mxu0 0.0
      %3088 = vmatpush.xpose.msra.mxu0 0.0
      %3089 = vmatpush.xpose.msra.mxu0 0.0
      %3090 = vmatpush.xpose.msra.mxu0 0.0
      %3091 = vmatpush.xpose.msra.mxu0 0.0
      %3092 = vmatpush.xpose.msra.mxu0 0.0
      %3093 = vmatpush.xpose.msra.mxu0 0.0
      %3094 = vmatpush.xpose.msra.mxu0 %v3077
      %3095 = vmatmul.f32.gmra.mxu0 %v3074
      %v3096 = vpop.f32.mrf.mxu0
      %v3097 = vadd.f32 0.0, %v3096
      %3098 = vdwg.mxu0
      %v3100 = vsel %vm500, %v2889, 0
      %v3103 = vsel %vm500, %v2959, 0
      %3105 = vmatpush.xpose.msra.mxu0 0.0
      %3106 = vmatpush.xpose.msra.mxu0 0.0
      %3107 = vmatpush.xpose.msra.mxu0 0.0
      %3108 = vmatpush.xpose.msra.mxu0 0.0
      %3109 = vmatpush.xpose.msra.mxu0 0.0
      %3110 = vmatpush.xpose.msra.mxu0 0.0
      %3111 = vmatpush.xpose.msra.mxu0 0.0
      %3112 = vmatpush.xpose.msra.mxu0 0.0
      %3113 = vmatpush.xpose.msra.mxu0 0.0
      %3114 = vmatpush.xpose.msra.mxu0 0.0
      %3115 = vmatpush.xpose.msra.mxu0 0.0
      %3116 = vmatpush.xpose.msra.mxu0 0.0
      %3117 = vmatpush.xpose.msra.mxu0 0.0
      %3118 = vmatpush.xpose.msra.mxu0 0.0
      %3119 = vmatpush.xpose.msra.mxu0 0.0
      %3120 = vmatpush.xpose.msra.mxu0 %v3103
      %3121 = vmatmul.f32.gmra.mxu0 %v3100
      %v3122 = vpop.f32.mrf.mxu0
      %v3123 = vadd.f32 0.0, %v3122
      %3124 = vdwg.mxu0
      %v3126 = vsel %vm500, %v2892, 0
      %v3129 = vsel %vm500, %v2962, 0
      %3131 = vmatpush.xpose.msra.mxu0 0.0
      %3132 = vmatpush.xpose.msra.mxu0 0.0
      %3133 = vmatpush.xpose.msra.mxu0 0.0
      %3134 = vmatpush.xpose.msra.mxu0 0.0
      %3135 = vmatpush.xpose.msra.mxu0 0.0
      %3136 = vmatpush.xpose.msra.mxu0 0.0
      %3137 = vmatpush.xpose.msra.mxu0 0.0
      %3138 = vmatpush.xpose.msra.mxu0 0.0
      %3139 = vmatpush.xpose.msra.mxu0 0.0
      %3140 = vmatpush.xpose.msra.mxu0 0.0
      %3141 = vmatpush.xpose.msra.mxu0 0.0
      %3142 = vmatpush.xpose.msra.mxu0 0.0
      %3143 = vmatpush.xpose.msra.mxu0 0.0
      %3144 = vmatpush.xpose.msra.mxu0 0.0
      %3145 = vmatpush.xpose.msra.mxu0 0.0
      %3146 = vmatpush.xpose.msra.mxu0 %v3129
      %3147 = vmatmul.f32.gmra.mxu0 %v3126
      %v3148 = vpop.f32.mrf.mxu0
      %v3149 = vadd.f32 0.0, %v3148
      %3150 = vdwg.mxu0
      %v3152 = vsel %vm500, %v2895, 0
      %v3155 = vsel %vm500, %v2965, 0
      %3157 = vmatpush.xpose.msra.mxu0 0.0
      %3158 = vmatpush.xpose.msra.mxu0 0.0
      %3159 = vmatpush.xpose.msra.mxu0 0.0
      %3160 = vmatpush.xpose.msra.mxu0 0.0
      %3161 = vmatpush.xpose.msra.mxu0 0.0
      %3162 = vmatpush.xpose.msra.mxu0 0.0
      %3163 = vmatpush.xpose.msra.mxu0 0.0
      %3164 = vmatpush.xpose.msra.mxu0 0.0
      %3165 = vmatpush.xpose.msra.mxu0 0.0
      %3166 = vmatpush.xpose.msra.mxu0 0.0
      %3167 = vmatpush.xpose.msra.mxu0 0.0
      %3168 = vmatpush.xpose.msra.mxu0 0.0
      %3169 = vmatpush.xpose.msra.mxu0 0.0
      %3170 = vmatpush.xpose.msra.mxu0 0.0
      %3171 = vmatpush.xpose.msra.mxu0 0.0
      %3172 = vmatpush.xpose.msra.mxu0 %v3155
      %3173 = vmatmul.f32.gmra.mxu0 %v3152
      %v3174 = vpop.f32.mrf.mxu0
      %v3175 = vadd.f32 0.0, %v3174
      %3176 = vdwg.mxu0
      %v3178 = vsel %vm500, %v2898, 0
      %v3181 = vsel %vm500, %v2968, 0
      %3183 = vmatpush.xpose.msra.mxu0 0.0
      %3184 = vmatpush.xpose.msra.mxu0 0.0
      %3185 = vmatpush.xpose.msra.mxu0 0.0
      %3186 = vmatpush.xpose.msra.mxu0 0.0
      %3187 = vmatpush.xpose.msra.mxu0 0.0
      %3188 = vmatpush.xpose.msra.mxu0 0.0
      %3189 = vmatpush.xpose.msra.mxu0 0.0
      %3190 = vmatpush.xpose.msra.mxu0 0.0
      %3191 = vmatpush.xpose.msra.mxu0 0.0
      %3192 = vmatpush.xpose.msra.mxu0 0.0
      %3193 = vmatpush.xpose.msra.mxu0 0.0
      %3194 = vmatpush.xpose.msra.mxu0 0.0
      %3195 = vmatpush.xpose.msra.mxu0 0.0
      %3196 = vmatpush.xpose.msra.mxu0 0.0
      %3197 = vmatpush.xpose.msra.mxu0 0.0
      %3198 = vmatpush.xpose.msra.mxu0 %v3181
      %3199 = vmatmul.f32.gmra.mxu0 %v3178
      %v3200 = vpop.f32.mrf.mxu0
      %v3201 = vadd.f32 0.0, %v3200
      %3202 = vdwg.mxu0
      %v3204 = vsel %vm500, %v2901, 0
      %v3207 = vsel %vm500, %v2971, 0
      %3209 = vmatpush.xpose.msra.mxu0 0.0
      %3210 = vmatpush.xpose.msra.mxu0 0.0
      %3211 = vmatpush.xpose.msra.mxu0 0.0
      %3212 = vmatpush.xpose.msra.mxu0 0.0
      %3213 = vmatpush.xpose.msra.mxu0 0.0
      %3214 = vmatpush.xpose.msra.mxu0 0.0
      %3215 = vmatpush.xpose.msra.mxu0 0.0
      %3216 = vmatpush.xpose.msra.mxu0 0.0
      %3217 = vmatpush.xpose.msra.mxu0 0.0
      %3218 = vmatpush.xpose.msra.mxu0 0.0
      %3219 = vmatpush.xpose.msra.mxu0 0.0
      %3220 = vmatpush.xpose.msra.mxu0 0.0
      %3221 = vmatpush.xpose.msra.mxu0 0.0
      %3222 = vmatpush.xpose.msra.mxu0 0.0
      %3223 = vmatpush.xpose.msra.mxu0 0.0
      %3224 = vmatpush.xpose.msra.mxu0 %v3207
      %3225 = vmatmul.f32.gmra.mxu0 %v3204
      %v3226 = vpop.f32.mrf.mxu0
      %v3227 = vadd.f32 0.0, %v3226
      %3228 = vdwg.mxu0
      %v3230 = vsel %vm500, %v2904, 0
      %v3233 = vsel %vm500, %v2974, 0
      %3235 = vmatpush.xpose.msra.mxu0 0.0
      %3236 = vmatpush.xpose.msra.mxu0 0.0
      %3237 = vmatpush.xpose.msra.mxu0 0.0
      %3238 = vmatpush.xpose.msra.mxu0 0.0
      %3239 = vmatpush.xpose.msra.mxu0 0.0
      %3240 = vmatpush.xpose.msra.mxu0 0.0
      %3241 = vmatpush.xpose.msra.mxu0 0.0
      %3242 = vmatpush.xpose.msra.mxu0 0.0
      %3243 = vmatpush.xpose.msra.mxu0 0.0
      %3244 = vmatpush.xpose.msra.mxu0 0.0
      %3245 = vmatpush.xpose.msra.mxu0 0.0
      %3246 = vmatpush.xpose.msra.mxu0 0.0
      %3247 = vmatpush.xpose.msra.mxu0 0.0
      %3248 = vmatpush.xpose.msra.mxu0 0.0
      %3249 = vmatpush.xpose.msra.mxu0 0.0
      %3250 = vmatpush.xpose.msra.mxu0 %v3233
      %3251 = vmatmul.f32.gmra.mxu0 %v3230
      %v3252 = vpop.f32.mrf.mxu0
      %v3253 = vadd.f32 0.0, %v3252
      %3254 = vdwg.mxu0
      %v3256 = vsel %vm500, %v2907, 0
      %v3259 = vsel %vm500, %v2977, 0
      %3261 = vmatpush.xpose.msra.mxu0 0.0
      %3262 = vmatpush.xpose.msra.mxu0 0.0
      %3263 = vmatpush.xpose.msra.mxu0 0.0
      %3264 = vmatpush.xpose.msra.mxu0 0.0
      %3265 = vmatpush.xpose.msra.mxu0 0.0
      %3266 = vmatpush.xpose.msra.mxu0 0.0
      %3267 = vmatpush.xpose.msra.mxu0 0.0
      %3268 = vmatpush.xpose.msra.mxu0 0.0
      %3269 = vmatpush.xpose.msra.mxu0 0.0
      %3270 = vmatpush.xpose.msra.mxu0 0.0
      %3271 = vmatpush.xpose.msra.mxu0 0.0
      %3272 = vmatpush.xpose.msra.mxu0 0.0
      %3273 = vmatpush.xpose.msra.mxu0 0.0
      %3274 = vmatpush.xpose.msra.mxu0 0.0
      %3275 = vmatpush.xpose.msra.mxu0 0.0
      %3276 = vmatpush.xpose.msra.mxu0 %v3259
      %3277 = vmatmul.f32.gmra.mxu0 %v3256
      %v3278 = vpop.f32.mrf.mxu0
      %v3279 = vadd.f32 0.0, %v3278
      %3280 = vdwg.mxu0
      %v3282 = vsel %vm500, %v2910, 0
      %v3285 = vsel %vm500, %v2980, 0
      %3287 = vmatpush.xpose.msra.mxu0 0.0
      %3288 = vmatpush.xpose.msra.mxu0 0.0
      %3289 = vmatpush.xpose.msra.mxu0 0.0
      %3290 = vmatpush.xpose.msra.mxu0 0.0
      %3291 = vmatpush.xpose.msra.mxu0 0.0
      %3292 = vmatpush.xpose.msra.mxu0 0.0
      %3293 = vmatpush.xpose.msra.mxu0 0.0
      %3294 = vmatpush.xpose.msra.mxu0 0.0
      %3295 = vmatpush.xpose.msra.mxu0 0.0
      %3296 = vmatpush.xpose.msra.mxu0 0.0
      %3297 = vmatpush.xpose.msra.mxu0 0.0
      %3298 = vmatpush.xpose.msra.mxu0 0.0
      %3299 = vmatpush.xpose.msra.mxu0 0.0
      %3300 = vmatpush.xpose.msra.mxu0 0.0
      %3301 = vmatpush.xpose.msra.mxu0 0.0
      %3302 = vmatpush.xpose.msra.mxu0 %v3285
      %3303 = vmatmul.f32.gmra.mxu0 %v3282
      %v3304 = vpop.f32.mrf.mxu0
      %v3305 = vadd.f32 0.0, %v3304
      %3306 = vdwg.mxu0
      %v3308 = vsel %vm500, %v2913, 0
      %v3311 = vsel %vm500, %v2983, 0
      %3313 = vmatpush.xpose.msra.mxu0 0.0
      %3314 = vmatpush.xpose.msra.mxu0 0.0
      %3315 = vmatpush.xpose.msra.mxu0 0.0
      %3316 = vmatpush.xpose.msra.mxu0 0.0
      %3317 = vmatpush.xpose.msra.mxu0 0.0
      %3318 = vmatpush.xpose.msra.mxu0 0.0
      %3319 = vmatpush.xpose.msra.mxu0 0.0
      %3320 = vmatpush.xpose.msra.mxu0 0.0
      %3321 = vmatpush.xpose.msra.mxu0 0.0
      %3322 = vmatpush.xpose.msra.mxu0 0.0
      %3323 = vmatpush.xpose.msra.mxu0 0.0
      %3324 = vmatpush.xpose.msra.mxu0 0.0
      %3325 = vmatpush.xpose.msra.mxu0 0.0
      %3326 = vmatpush.xpose.msra.mxu0 0.0
      %3327 = vmatpush.xpose.msra.mxu0 0.0
      %3328 = vmatpush.xpose.msra.mxu0 %v3311
      %3329 = vmatmul.f32.gmra.mxu0 %v3308
      %v3330 = vpop.f32.mrf.mxu0
      %v3331 = vadd.f32 0.0, %v3330
      %3332 = vdwg.mxu0
      %v3334 = vsel %vm500, %v2916, 0
      %v3337 = vsel %vm500, %v2986, 0
      %3339 = vmatpush.xpose.msra.mxu0 0.0
      %3340 = vmatpush.xpose.msra.mxu0 0.0
      %3341 = vmatpush.xpose.msra.mxu0 0.0
      %3342 = vmatpush.xpose.msra.mxu0 0.0
      %3343 = vmatpush.xpose.msra.mxu0 0.0
      %3344 = vmatpush.xpose.msra.mxu0 0.0
      %3345 = vmatpush.xpose.msra.mxu0 0.0
      %3346 = vmatpush.xpose.msra.mxu0 0.0
      %3347 = vmatpush.xpose.msra.mxu0 0.0
      %3348 = vmatpush.xpose.msra.mxu0 0.0
      %3349 = vmatpush.xpose.msra.mxu0 0.0
      %3350 = vmatpush.xpose.msra.mxu0 0.0
      %3351 = vmatpush.xpose.msra.mxu0 0.0
      %3352 = vmatpush.xpose.msra.mxu0 0.0
      %3353 = vmatpush.xpose.msra.mxu0 0.0
      %3354 = vmatpush.xpose.msra.mxu0 %v3337
      %3355 = vmatmul.f32.gmra.mxu0 %v3334
      %v3356 = vpop.f32.mrf.mxu0
      %v3357 = vadd.f32 0.0, %v3356
      %3358 = vdwg.mxu0
      %v3360 = vsel %vm500, %v2919, 0
      %v3363 = vsel %vm500, %v2989, 0
      %3365 = vmatpush.xpose.msra.mxu0 0.0
      %3366 = vmatpush.xpose.msra.mxu0 0.0
      %3367 = vmatpush.xpose.msra.mxu0 0.0
      %3368 = vmatpush.xpose.msra.mxu0 0.0
      %3369 = vmatpush.xpose.msra.mxu0 0.0
      %3370 = vmatpush.xpose.msra.mxu0 0.0
      %3371 = vmatpush.xpose.msra.mxu0 0.0
      %3372 = vmatpush.xpose.msra.mxu0 0.0
      %3373 = vmatpush.xpose.msra.mxu0 0.0
      %3374 = vmatpush.xpose.msra.mxu0 0.0
      %3375 = vmatpush.xpose.msra.mxu0 0.0
      %3376 = vmatpush.xpose.msra.mxu0 0.0
      %3377 = vmatpush.xpose.msra.mxu0 0.0
      %3378 = vmatpush.xpose.msra.mxu0 0.0
      %3379 = vmatpush.xpose.msra.mxu0 0.0
      %3380 = vmatpush.xpose.msra.mxu0 %v3363
      %3381 = vmatmul.f32.gmra.mxu0 %v3360
      %v3382 = vpop.f32.mrf.mxu0
      %v3383 = vadd.f32 0.0, %v3382
      %3384 = vdwg.mxu0
      %v3386 = vsel %vm500, %v2922, 0
      %v3389 = vsel %vm500, %v2992, 0
      %3391 = vmatpush.xpose.msra.mxu0 0.0
      %3392 = vmatpush.xpose.msra.mxu0 0.0
      %3393 = vmatpush.xpose.msra.mxu0 0.0
      %3394 = vmatpush.xpose.msra.mxu0 0.0
      %3395 = vmatpush.xpose.msra.mxu0 0.0
      %3396 = vmatpush.xpose.msra.mxu0 0.0
      %3397 = vmatpush.xpose.msra.mxu0 0.0
      %3398 = vmatpush.xpose.msra.mxu0 0.0
      %3399 = vmatpush.xpose.msra.mxu0 0.0
      %3400 = vmatpush.xpose.msra.mxu0 0.0
      %3401 = vmatpush.xpose.msra.mxu0 0.0
      %3402 = vmatpush.xpose.msra.mxu0 0.0
      %3403 = vmatpush.xpose.msra.mxu0 0.0
      %3404 = vmatpush.xpose.msra.mxu0 0.0
      %3405 = vmatpush.xpose.msra.mxu0 0.0
      %3406 = vmatpush.xpose.msra.mxu0 %v3389
      %3407 = vmatmul.f32.gmra.mxu0 %v3386
      %v3408 = vpop.f32.mrf.mxu0
      %v3409 = vadd.f32 0.0, %v3408
      %3410 = vdwg.mxu0
      %v3412 = vsel %vm500, %v2925, 0
      %v3415 = vsel %vm500, %v2995, 0
      %3417 = vmatpush.xpose.msra.mxu0 0.0
      %3418 = vmatpush.xpose.msra.mxu0 0.0
      %3419 = vmatpush.xpose.msra.mxu0 0.0
      %3420 = vmatpush.xpose.msra.mxu0 0.0
      %3421 = vmatpush.xpose.msra.mxu0 0.0
      %3422 = vmatpush.xpose.msra.mxu0 0.0
      %3423 = vmatpush.xpose.msra.mxu0 0.0
      %3424 = vmatpush.xpose.msra.mxu0 0.0
      %3425 = vmatpush.xpose.msra.mxu0 0.0
      %3426 = vmatpush.xpose.msra.mxu0 0.0
      %3427 = vmatpush.xpose.msra.mxu0 0.0
      %3428 = vmatpush.xpose.msra.mxu0 0.0
      %3429 = vmatpush.xpose.msra.mxu0 0.0
      %3430 = vmatpush.xpose.msra.mxu0 0.0
      %3431 = vmatpush.xpose.msra.mxu0 0.0
      %3432 = vmatpush.xpose.msra.mxu0 %v3415
      %3433 = vmatmul.f32.gmra.mxu0 %v3412
      %v3434 = vpop.f32.mrf.mxu0
      %v3435 = vadd.f32 0.0, %v3434
      %3436 = vdwg.mxu0
      %v3438 = vsel %vm500, %v2928, 0
      %v3441 = vsel %vm500, %v2998, 0
      %3443 = vmatpush.xpose.msra.mxu0 0.0
      %3444 = vmatpush.xpose.msra.mxu0 0.0
      %3445 = vmatpush.xpose.msra.mxu0 0.0
      %3446 = vmatpush.xpose.msra.mxu0 0.0
      %3447 = vmatpush.xpose.msra.mxu0 0.0
      %3448 = vmatpush.xpose.msra.mxu0 0.0
      %3449 = vmatpush.xpose.msra.mxu0 0.0
      %3450 = vmatpush.xpose.msra.mxu0 0.0
      %3451 = vmatpush.xpose.msra.mxu0 0.0
      %3452 = vmatpush.xpose.msra.mxu0 0.0
      %3453 = vmatpush.xpose.msra.mxu0 0.0
      %3454 = vmatpush.xpose.msra.mxu0 0.0
      %3455 = vmatpush.xpose.msra.mxu0 0.0
      %3456 = vmatpush.xpose.msra.mxu0 0.0
      %3457 = vmatpush.xpose.msra.mxu0 0.0
      %3458 = vmatpush.xpose.msra.mxu0 %v3441
      %3459 = vmatmul.f32.gmra.mxu0 %v3438
      %v3460 = vpop.f32.mrf.mxu0
      %v3461 = vadd.f32 0.0, %v3460
      %3462 = vdwg.mxu0
      %v3464 = vsel %vm500, %v2931, 0
      %v3467 = vsel %vm500, %v3001, 0
      %3469 = vmatpush.xpose.msra.mxu0 0.0
      %3470 = vmatpush.xpose.msra.mxu0 0.0
      %3471 = vmatpush.xpose.msra.mxu0 0.0
      %3472 = vmatpush.xpose.msra.mxu0 0.0
      %3473 = vmatpush.xpose.msra.mxu0 0.0
      %3474 = vmatpush.xpose.msra.mxu0 0.0
      %3475 = vmatpush.xpose.msra.mxu0 0.0
      %3476 = vmatpush.xpose.msra.mxu0 0.0
      %3477 = vmatpush.xpose.msra.mxu0 0.0
      %3478 = vmatpush.xpose.msra.mxu0 0.0
      %3479 = vmatpush.xpose.msra.mxu0 0.0
      %3480 = vmatpush.xpose.msra.mxu0 0.0
      %3481 = vmatpush.xpose.msra.mxu0 0.0
      %3482 = vmatpush.xpose.msra.mxu0 0.0
      %3483 = vmatpush.xpose.msra.mxu0 0.0
      %3484 = vmatpush.xpose.msra.mxu0 %v3467
      %3485 = vmatmul.f32.gmra.mxu0 %v3464
      %v3486 = vpop.f32.mrf.mxu0
      %v3487 = vadd.f32 0.0, %v3486
      %3488 = vdwg.mxu0
      %v3489 = vsel %vm917, %v3097, -inf
      %3490 = vmax.xlane.f32.xlu0 %v3489
      %v3491 = vpop.xlane.xlu0 %3490
      %v3492 = vsel %vm917, %v3123, -inf
      %3493 = vmax.xlane.f32.xlu0 %v3492
      %v3494 = vpop.xlane.xlu0 %3493
      %v3495 = vsel %vm917, %v3149, -inf
      %3496 = vmax.xlane.f32.xlu0 %v3495
      %v3497 = vpop.xlane.xlu0 %3496
      %v3498 = vsel %vm917, %v3175, -inf
      %3499 = vmax.xlane.f32.xlu0 %v3498
      %v3500 = vpop.xlane.xlu0 %3499
      %v3501 = vsel %vm917, %v3201, -inf
      %3502 = vmax.xlane.f32.xlu0 %v3501
      %v3503 = vpop.xlane.xlu0 %3502
      %v3504 = vsel %vm917, %v3227, -inf
      %3505 = vmax.xlane.f32.xlu0 %v3504
      %v3506 = vpop.xlane.xlu0 %3505
      %v3507 = vsel %vm917, %v3253, -inf
      %3508 = vmax.xlane.f32.xlu0 %v3507
      %v3509 = vpop.xlane.xlu0 %3508
      %v3510 = vsel %vm917, %v3279, -inf
      %3511 = vmax.xlane.f32.xlu0 %v3510
      %v3512 = vpop.xlane.xlu0 %3511
      %v3513 = vsel %vm917, %v3305, -inf
      %3514 = vmax.xlane.f32.xlu0 %v3513
      %v3515 = vpop.xlane.xlu0 %3514
      %v3516 = vsel %vm917, %v3331, -inf
      %3517 = vmax.xlane.f32.xlu0 %v3516
      %v3518 = vpop.xlane.xlu0 %3517
      %v3519 = vsel %vm917, %v3357, -inf
      %3520 = vmax.xlane.f32.xlu0 %v3519
      %v3521 = vpop.xlane.xlu0 %3520
      %v3522 = vsel %vm917, %v3383, -inf
      %3523 = vmax.xlane.f32.xlu0 %v3522
      %v3524 = vpop.xlane.xlu0 %3523
      %v3525 = vsel %vm917, %v3409, -inf
      %3526 = vmax.xlane.f32.xlu0 %v3525
      %v3527 = vpop.xlane.xlu0 %3526
      %v3528 = vsel %vm917, %v3435, -inf
      %3529 = vmax.xlane.f32.xlu0 %v3528
      %v3530 = vpop.xlane.xlu0 %3529
      %v3531 = vsel %vm917, %v3461, -inf
      %3532 = vmax.xlane.f32.xlu0 %v3531
      %v3533 = vpop.xlane.xlu0 %3532
      %v3534 = vsel %vm917, %v3487, -inf
      %3535 = vmax.xlane.f32.xlu0 %v3534
      %v3536 = vpop.xlane.xlu0 %3535
      %v3537 = vsub.f32 %v3097, %v3491
      %v3538 = vsub.f32 %v3123, %v3494
      %v3539 = vsub.f32 %v3149, %v3497
      %v3540 = vsub.f32 %v3175, %v3500
      %v3541 = vsub.f32 %v3201, %v3503
      %v3542 = vsub.f32 %v3227, %v3506
      %v3543 = vsub.f32 %v3253, %v3509
      %v3544 = vsub.f32 %v3279, %v3512
      %v3545 = vsub.f32 %v3305, %v3515
      %v3546 = vsub.f32 %v3331, %v3518
      %v3547 = vsub.f32 %v3357, %v3521
      %v3548 = vsub.f32 %v3383, %v3524
      %v3549 = vsub.f32 %v3409, %v3527
      %v3550 = vsub.f32 %v3435, %v3530
      %v3551 = vsub.f32 %v3461, %v3533
      %v3552 = vsub.f32 %v3487, %v3536
      %v3553 = vmul.f32 %v3537, 1.442695
      %v3554 = vpow.pop %v3553
      %v3555 = vmul.f32 %v3538, 1.442695
      %v3556 = vpow.pop %v3555
      %v3557 = vmul.f32 %v3539, 1.442695
      %v3558 = vpow.pop %v3557
      %v3559 = vmul.f32 %v3540, 1.442695
      %v3560 = vpow.pop %v3559
      %v3561 = vmul.f32 %v3541, 1.442695
      %v3562 = vpow.pop %v3561
      %v3563 = vmul.f32 %v3542, 1.442695
      %v3564 = vpow.pop %v3563
      %v3565 = vmul.f32 %v3543, 1.442695
      %v3566 = vpow.pop %v3565
      %v3567 = vmul.f32 %v3544, 1.442695
      %v3568 = vpow.pop %v3567
      %v3569 = vmul.f32 %v3545, 1.442695
      %v3570 = vpow.pop %v3569
      %v3571 = vmul.f32 %v3546, 1.442695
      %v3572 = vpow.pop %v3571
      %v3573 = vmul.f32 %v3547, 1.442695
      %v3574 = vpow.pop %v3573
      %v3575 = vmul.f32 %v3548, 1.442695
      %v3576 = vpow.pop %v3575
      %v3577 = vmul.f32 %v3549, 1.442695
      %v3578 = vpow.pop %v3577
      %v3579 = vmul.f32 %v3550, 1.442695
      %v3580 = vpow.pop %v3579
      %v3581 = vmul.f32 %v3551, 1.442695
      %v3582 = vpow.pop %v3581
      %v3583 = vmul.f32 %v3552, 1.442695
      %v3584 = vpow.pop %v3583
      %v3585 = vsel %vm917, %v3554, 0.0
      %3586 = vadd.xlane.f32.xlu0 %v3585
      %v3587 = vpop.xlane.xlu0 %3586
      %v3588 = vsel %vm917, %v3556, 0.0
      %3589 = vadd.xlane.f32.xlu0 %v3588
      %v3590 = vpop.xlane.xlu0 %3589
      %v3591 = vsel %vm917, %v3558, 0.0
      %3592 = vadd.xlane.f32.xlu0 %v3591
      %v3593 = vpop.xlane.xlu0 %3592
      %v3594 = vsel %vm917, %v3560, 0.0
      %3595 = vadd.xlane.f32.xlu0 %v3594
      %v3596 = vpop.xlane.xlu0 %3595
      %v3597 = vsel %vm917, %v3562, 0.0
      %3598 = vadd.xlane.f32.xlu0 %v3597
      %v3599 = vpop.xlane.xlu0 %3598
      %v3600 = vsel %vm917, %v3564, 0.0
      %3601 = vadd.xlane.f32.xlu0 %v3600
      %v3602 = vpop.xlane.xlu0 %3601
      %v3603 = vsel %vm917, %v3566, 0.0
      %3604 = vadd.xlane.f32.xlu0 %v3603
      %v3605 = vpop.xlane.xlu0 %3604
      %v3606 = vsel %vm917, %v3568, 0.0
      %3607 = vadd.xlane.f32.xlu0 %v3606
      %v3608 = vpop.xlane.xlu0 %3607
      %v3609 = vsel %vm917, %v3570, 0.0
      %3610 = vadd.xlane.f32.xlu0 %v3609
      %v3611 = vpop.xlane.xlu0 %3610
      %v3612 = vsel %vm917, %v3572, 0.0
      %3613 = vadd.xlane.f32.xlu0 %v3612
      %v3614 = vpop.xlane.xlu0 %3613
      %v3615 = vsel %vm917, %v3574, 0.0
      %3616 = vadd.xlane.f32.xlu0 %v3615
      %v3617 = vpop.xlane.xlu0 %3616
      %v3618 = vsel %vm917, %v3576, 0.0
      %3619 = vadd.xlane.f32.xlu0 %v3618
      %v3620 = vpop.xlane.xlu0 %3619
      %v3621 = vsel %vm917, %v3578, 0.0
      %3622 = vadd.xlane.f32.xlu0 %v3621
      %v3623 = vpop.xlane.xlu0 %3622
      %v3624 = vsel %vm917, %v3580, 0.0
      %3625 = vadd.xlane.f32.xlu0 %v3624
      %v3626 = vpop.xlane.xlu0 %3625
      %v3627 = vsel %vm917, %v3582, 0.0
      %3628 = vadd.xlane.f32.xlu0 %v3627
      %v3629 = vpop.xlane.xlu0 %3628
      %v3630 = vsel %vm917, %v3584, 0.0
      %3631 = vadd.xlane.f32.xlu0 %v3630
      %v3632 = vpop.xlane.xlu0 %3631
      %v3633 = vrcp.pop %v3587
      %v3634 = vrcp.pop %v3590
      %v3635 = vrcp.pop %v3593
      %v3636 = vrcp.pop %v3596
      %v3637 = vrcp.pop %v3599
      %v3638 = vrcp.pop %v3602
      %v3639 = vrcp.pop %v3605
      %v3640 = vrcp.pop %v3608
      %v3641 = vrcp.pop %v3611
      %v3642 = vrcp.pop %v3614
      %v3643 = vrcp.pop %v3617
      %v3644 = vrcp.pop %v3620
      %v3645 = vrcp.pop %v3623
      %v3646 = vrcp.pop %v3626
      %v3647 = vrcp.pop %v3629
      %v3648 = vrcp.pop %v3632
      %v3649 = vmul.f32 %v3554, %v3633
      %v3650 = vmul.f32 %v3556, %v3634
      %v3651 = vmul.f32 %v3558, %v3635
      %v3652 = vmul.f32 %v3560, %v3636
      %v3653 = vmul.f32 %v3562, %v3637
      %v3654 = vmul.f32 %v3564, %v3638
      %v3655 = vmul.f32 %v3566, %v3639
      %v3656 = vmul.f32 %v3568, %v3640
      %v3657 = vmul.f32 %v3570, %v3641
      %v3658 = vmul.f32 %v3572, %v3642
      %v3659 = vmul.f32 %v3574, %v3643
      %v3660 = vmul.f32 %v3576, %v3644
      %v3661 = vmul.f32 %v3578, %v3645
      %v3662 = vmul.f32 %v3580, %v3646
      %v3663 = vmul.f32 %v3582, %v3647
      %v3664 = vmul.f32 %v3584, %v3648
      %v3666 = vsel %vm917, %v3649, 0
      %3668 = vmatpush.msra.mxu0 0.0
      %3669 = vmatpush.msra.mxu0 0.0
      %3670 = vmatpush.msra.mxu0 0.0
      %3671 = vmatpush.msra.mxu0 0.0
      %3672 = vmatpush.msra.mxu0 0.0
      %3673 = vmatpush.msra.mxu0 0.0
      %3674 = vmatpush.msra.mxu0 0.0
      %3675 = vmatpush.msra.mxu0 0.0
      %3676 = vmatpush.msra.mxu0 0.0
      %3677 = vmatpush.msra.mxu0 0.0
      %3678 = vmatpush.msra.mxu0 0.0
      %3679 = vmatpush.msra.mxu0 0.0
      %3680 = vmatpush.msra.mxu0 0.0
      %3681 = vmatpush.msra.mxu0 0.0
      %3682 = vmatpush.msra.mxu0 0.0
      %3683 = vmatpush.msra.mxu0 %v3026
      %3684 = vmatmul.f32.gmra.mxu0 %v3666
      %v3685 = vpop.f32.mrf.mxu0
      %v3686 = vadd.f32 0.0, %v3685
      %3687 = vdwg.mxu0
      %v3689 = vsel %vm917, %v3650, 0
      %3691 = vmatpush.msra.mxu0 0.0
      %3692 = vmatpush.msra.mxu0 0.0
      %3693 = vmatpush.msra.mxu0 0.0
      %3694 = vmatpush.msra.mxu0 0.0
      %3695 = vmatpush.msra.mxu0 0.0
      %3696 = vmatpush.msra.mxu0 0.0
      %3697 = vmatpush.msra.mxu0 0.0
      %3698 = vmatpush.msra.mxu0 0.0
      %3699 = vmatpush.msra.mxu0 0.0
      %3700 = vmatpush.msra.mxu0 0.0
      %3701 = vmatpush.msra.mxu0 0.0
      %3702 = vmatpush.msra.mxu0 0.0
      %3703 = vmatpush.msra.mxu0 0.0
      %3704 = vmatpush.msra.mxu0 0.0
      %3705 = vmatpush.msra.mxu0 0.0
      %3706 = vmatpush.msra.mxu0 %v3029
      %3707 = vmatmul.f32.gmra.mxu0 %v3689
      %v3708 = vpop.f32.mrf.mxu0
      %v3709 = vadd.f32 0.0, %v3708
      %3710 = vdwg.mxu0
      %v3712 = vsel %vm917, %v3651, 0
      %3714 = vmatpush.msra.mxu0 0.0
      %3715 = vmatpush.msra.mxu0 0.0
      %3716 = vmatpush.msra.mxu0 0.0
      %3717 = vmatpush.msra.mxu0 0.0
      %3718 = vmatpush.msra.mxu0 0.0
      %3719 = vmatpush.msra.mxu0 0.0
      %3720 = vmatpush.msra.mxu0 0.0
      %3721 = vmatpush.msra.mxu0 0.0
      %3722 = vmatpush.msra.mxu0 0.0
      %3723 = vmatpush.msra.mxu0 0.0
      %3724 = vmatpush.msra.mxu0 0.0
      %3725 = vmatpush.msra.mxu0 0.0
      %3726 = vmatpush.msra.mxu0 0.0
      %3727 = vmatpush.msra.mxu0 0.0
      %3728 = vmatpush.msra.mxu0 0.0
      %3729 = vmatpush.msra.mxu0 %v3032
      %3730 = vmatmul.f32.gmra.mxu0 %v3712
      %v3731 = vpop.f32.mrf.mxu0
      %v3732 = vadd.f32 0.0, %v3731
      %3733 = vdwg.mxu0
      %v3735 = vsel %vm917, %v3652, 0
      %3737 = vmatpush.msra.mxu0 0.0
      %3738 = vmatpush.msra.mxu0 0.0
      %3739 = vmatpush.msra.mxu0 0.0
      %3740 = vmatpush.msra.mxu0 0.0
      %3741 = vmatpush.msra.mxu0 0.0
      %3742 = vmatpush.msra.mxu0 0.0
      %3743 = vmatpush.msra.mxu0 0.0
      %3744 = vmatpush.msra.mxu0 0.0
      %3745 = vmatpush.msra.mxu0 0.0
      %3746 = vmatpush.msra.mxu0 0.0
      %3747 = vmatpush.msra.mxu0 0.0
      %3748 = vmatpush.msra.mxu0 0.0
      %3749 = vmatpush.msra.mxu0 0.0
      %3750 = vmatpush.msra.mxu0 0.0
      %3751 = vmatpush.msra.mxu0 0.0
      %3752 = vmatpush.msra.mxu0 %v3035
      %3753 = vmatmul.f32.gmra.mxu0 %v3735
      %v3754 = vpop.f32.mrf.mxu0
      %v3755 = vadd.f32 0.0, %v3754
      %3756 = vdwg.mxu0
      %v3758 = vsel %vm917, %v3653, 0
      %3760 = vmatpush.msra.mxu0 0.0
      %3761 = vmatpush.msra.mxu0 0.0
      %3762 = vmatpush.msra.mxu0 0.0
      %3763 = vmatpush.msra.mxu0 0.0
      %3764 = vmatpush.msra.mxu0 0.0
      %3765 = vmatpush.msra.mxu0 0.0
      %3766 = vmatpush.msra.mxu0 0.0
      %3767 = vmatpush.msra.mxu0 0.0
      %3768 = vmatpush.msra.mxu0 0.0
      %3769 = vmatpush.msra.mxu0 0.0
      %3770 = vmatpush.msra.mxu0 0.0
      %3771 = vmatpush.msra.mxu0 0.0
      %3772 = vmatpush.msra.mxu0 0.0
      %3773 = vmatpush.msra.mxu0 0.0
      %3774 = vmatpush.msra.mxu0 0.0
      %3775 = vmatpush.msra.mxu0 %v3038
      %3776 = vmatmul.f32.gmra.mxu0 %v3758
      %v3777 = vpop.f32.mrf.mxu0
      %v3778 = vadd.f32 0.0, %v3777
      %3779 = vdwg.mxu0
      %v3781 = vsel %vm917, %v3654, 0
      %3783 = vmatpush.msra.mxu0 0.0
      %3784 = vmatpush.msra.mxu0 0.0
      %3785 = vmatpush.msra.mxu0 0.0
      %3786 = vmatpush.msra.mxu0 0.0
      %3787 = vmatpush.msra.mxu0 0.0
      %3788 = vmatpush.msra.mxu0 0.0
      %3789 = vmatpush.msra.mxu0 0.0
      %3790 = vmatpush.msra.mxu0 0.0
      %3791 = vmatpush.msra.mxu0 0.0
      %3792 = vmatpush.msra.mxu0 0.0
      %3793 = vmatpush.msra.mxu0 0.0
      %3794 = vmatpush.msra.mxu0 0.0
      %3795 = vmatpush.msra.mxu0 0.0
      %3796 = vmatpush.msra.mxu0 0.0
      %3797 = vmatpush.msra.mxu0 0.0
      %3798 = vmatpush.msra.mxu0 %v3041
      %3799 = vmatmul.f32.gmra.mxu0 %v3781
      %v3800 = vpop.f32.mrf.mxu0
      %v3801 = vadd.f32 0.0, %v3800
      %3802 = vdwg.mxu0
      %v3804 = vsel %vm917, %v3655, 0
      %3806 = vmatpush.msra.mxu0 0.0
      %3807 = vmatpush.msra.mxu0 0.0
      %3808 = vmatpush.msra.mxu0 0.0
      %3809 = vmatpush.msra.mxu0 0.0
      %3810 = vmatpush.msra.mxu0 0.0
      %3811 = vmatpush.msra.mxu0 0.0
      %3812 = vmatpush.msra.mxu0 0.0
      %3813 = vmatpush.msra.mxu0 0.0
      %3814 = vmatpush.msra.mxu0 0.0
      %3815 = vmatpush.msra.mxu0 0.0
      %3816 = vmatpush.msra.mxu0 0.0
      %3817 = vmatpush.msra.mxu0 0.0
      %3818 = vmatpush.msra.mxu0 0.0
      %3819 = vmatpush.msra.mxu0 0.0
      %3820 = vmatpush.msra.mxu0 0.0
      %3821 = vmatpush.msra.mxu0 %v3044
      %3822 = vmatmul.f32.gmra.mxu0 %v3804
      %v3823 = vpop.f32.mrf.mxu0
      %v3824 = vadd.f32 0.0, %v3823
      %3825 = vdwg.mxu0
      %v3827 = vsel %vm917, %v3656, 0
      %3829 = vmatpush.msra.mxu0 0.0
      %3830 = vmatpush.msra.mxu0 0.0
      %3831 = vmatpush.msra.mxu0 0.0
      %3832 = vmatpush.msra.mxu0 0.0
      %3833 = vmatpush.msra.mxu0 0.0
      %3834 = vmatpush.msra.mxu0 0.0
      %3835 = vmatpush.msra.mxu0 0.0
      %3836 = vmatpush.msra.mxu0 0.0
      %3837 = vmatpush.msra.mxu0 0.0
      %3838 = vmatpush.msra.mxu0 0.0
      %3839 = vmatpush.msra.mxu0 0.0
      %3840 = vmatpush.msra.mxu0 0.0
      %3841 = vmatpush.msra.mxu0 0.0
      %3842 = vmatpush.msra.mxu0 0.0
      %3843 = vmatpush.msra.mxu0 0.0
      %3844 = vmatpush.msra.mxu0 %v3047
      %3845 = vmatmul.f32.gmra.mxu0 %v3827
      %v3846 = vpop.f32.mrf.mxu0
      %v3847 = vadd.f32 0.0, %v3846
      %3848 = vdwg.mxu0
      %v3850 = vsel %vm917, %v3657, 0
      %3852 = vmatpush.msra.mxu0 0.0
      %3853 = vmatpush.msra.mxu0 0.0
      %3854 = vmatpush.msra.mxu0 0.0
      %3855 = vmatpush.msra.mxu0 0.0
      %3856 = vmatpush.msra.mxu0 0.0
      %3857 = vmatpush.msra.mxu0 0.0
      %3858 = vmatpush.msra.mxu0 0.0
      %3859 = vmatpush.msra.mxu0 0.0
      %3860 = vmatpush.msra.mxu0 0.0
      %3861 = vmatpush.msra.mxu0 0.0
      %3862 = vmatpush.msra.mxu0 0.0
      %3863 = vmatpush.msra.mxu0 0.0
      %3864 = vmatpush.msra.mxu0 0.0
      %3865 = vmatpush.msra.mxu0 0.0
      %3866 = vmatpush.msra.mxu0 0.0
      %3867 = vmatpush.msra.mxu0 %v3050
      %3868 = vmatmul.f32.gmra.mxu0 %v3850
      %v3869 = vpop.f32.mrf.mxu0
      %v3870 = vadd.f32 0.0, %v3869
      %3871 = vdwg.mxu0
      %v3873 = vsel %vm917, %v3658, 0
      %3875 = vmatpush.msra.mxu0 0.0
      %3876 = vmatpush.msra.mxu0 0.0
      %3877 = vmatpush.msra.mxu0 0.0
      %3878 = vmatpush.msra.mxu0 0.0
      %3879 = vmatpush.msra.mxu0 0.0
      %3880 = vmatpush.msra.mxu0 0.0
      %3881 = vmatpush.msra.mxu0 0.0
      %3882 = vmatpush.msra.mxu0 0.0
      %3883 = vmatpush.msra.mxu0 0.0
      %3884 = vmatpush.msra.mxu0 0.0
      %3885 = vmatpush.msra.mxu0 0.0
      %3886 = vmatpush.msra.mxu0 0.0
      %3887 = vmatpush.msra.mxu0 0.0
      %3888 = vmatpush.msra.mxu0 0.0
      %3889 = vmatpush.msra.mxu0 0.0
      %3890 = vmatpush.msra.mxu0 %v3053
      %3891 = vmatmul.f32.gmra.mxu0 %v3873
      %v3892 = vpop.f32.mrf.mxu0
      %v3893 = vadd.f32 0.0, %v3892
      %3894 = vdwg.mxu0
      %v3896 = vsel %vm917, %v3659, 0
      %3898 = vmatpush.msra.mxu0 0.0
      %3899 = vmatpush.msra.mxu0 0.0
      %3900 = vmatpush.msra.mxu0 0.0
      %3901 = vmatpush.msra.mxu0 0.0
      %3902 = vmatpush.msra.mxu0 0.0
      %3903 = vmatpush.msra.mxu0 0.0
      %3904 = vmatpush.msra.mxu0 0.0
      %3905 = vmatpush.msra.mxu0 0.0
      %3906 = vmatpush.msra.mxu0 0.0
      %3907 = vmatpush.msra.mxu0 0.0
      %3908 = vmatpush.msra.mxu0 0.0
      %3909 = vmatpush.msra.mxu0 0.0
      %3910 = vmatpush.msra.mxu0 0.0
      %3911 = vmatpush.msra.mxu0 0.0
      %3912 = vmatpush.msra.mxu0 0.0
      %3913 = vmatpush.msra.mxu0 %v3056
      %3914 = vmatmul.f32.gmra.mxu0 %v3896
      %v3915 = vpop.f32.mrf.mxu0
      %v3916 = vadd.f32 0.0, %v3915
      %3917 = vdwg.mxu0
      %v3919 = vsel %vm917, %v3660, 0
      %3921 = vmatpush.msra.mxu0 0.0
      %3922 = vmatpush.msra.mxu0 0.0
      %3923 = vmatpush.msra.mxu0 0.0
      %3924 = vmatpush.msra.mxu0 0.0
      %3925 = vmatpush.msra.mxu0 0.0
      %3926 = vmatpush.msra.mxu0 0.0
      %3927 = vmatpush.msra.mxu0 0.0
      %3928 = vmatpush.msra.mxu0 0.0
      %3929 = vmatpush.msra.mxu0 0.0
      %3930 = vmatpush.msra.mxu0 0.0
      %3931 = vmatpush.msra.mxu0 0.0
      %3932 = vmatpush.msra.mxu0 0.0
      %3933 = vmatpush.msra.mxu0 0.0
      %3934 = vmatpush.msra.mxu0 0.0
      %3935 = vmatpush.msra.mxu0 0.0
      %3936 = vmatpush.msra.mxu0 %v3059
      %3937 = vmatmul.f32.gmra.mxu0 %v3919
      %v3938 = vpop.f32.mrf.mxu0
      %v3939 = vadd.f32 0.0, %v3938
      %3940 = vdwg.mxu0
      %v3942 = vsel %vm917, %v3661, 0
      %3944 = vmatpush.msra.mxu0 0.0
      %3945 = vmatpush.msra.mxu0 0.0
      %3946 = vmatpush.msra.mxu0 0.0
      %3947 = vmatpush.msra.mxu0 0.0
      %3948 = vmatpush.msra.mxu0 0.0
      %3949 = vmatpush.msra.mxu0 0.0
      %3950 = vmatpush.msra.mxu0 0.0
      %3951 = vmatpush.msra.mxu0 0.0
      %3952 = vmatpush.msra.mxu0 0.0
      %3953 = vmatpush.msra.mxu0 0.0
      %3954 = vmatpush.msra.mxu0 0.0
      %3955 = vmatpush.msra.mxu0 0.0
      %3956 = vmatpush.msra.mxu0 0.0
      %3957 = vmatpush.msra.mxu0 0.0
      %3958 = vmatpush.msra.mxu0 0.0
      %3959 = vmatpush.msra.mxu0 %v3062
      %3960 = vmatmul.f32.gmra.mxu0 %v3942
      %v3961 = vpop.f32.mrf.mxu0
      %v3962 = vadd.f32 0.0, %v3961
      %3963 = vdwg.mxu0
      %v3965 = vsel %vm917, %v3662, 0
      %3967 = vmatpush.msra.mxu0 0.0
      %3968 = vmatpush.msra.mxu0 0.0
      %3969 = vmatpush.msra.mxu0 0.0
      %3970 = vmatpush.msra.mxu0 0.0
      %3971 = vmatpush.msra.mxu0 0.0
      %3972 = vmatpush.msra.mxu0 0.0
      %3973 = vmatpush.msra.mxu0 0.0
      %3974 = vmatpush.msra.mxu0 0.0
      %3975 = vmatpush.msra.mxu0 0.0
      %3976 = vmatpush.msra.mxu0 0.0
      %3977 = vmatpush.msra.mxu0 0.0
      %3978 = vmatpush.msra.mxu0 0.0
      %3979 = vmatpush.msra.mxu0 0.0
      %3980 = vmatpush.msra.mxu0 0.0
      %3981 = vmatpush.msra.mxu0 0.0
      %3982 = vmatpush.msra.mxu0 %v3065
      %3983 = vmatmul.f32.gmra.mxu0 %v3965
      %v3984 = vpop.f32.mrf.mxu0
      %v3985 = vadd.f32 0.0, %v3984
      %3986 = vdwg.mxu0
      %v3988 = vsel %vm917, %v3663, 0
      %3990 = vmatpush.msra.mxu0 0.0
      %3991 = vmatpush.msra.mxu0 0.0
      %3992 = vmatpush.msra.mxu0 0.0
      %3993 = vmatpush.msra.mxu0 0.0
      %3994 = vmatpush.msra.mxu0 0.0
      %3995 = vmatpush.msra.mxu0 0.0
      %3996 = vmatpush.msra.mxu0 0.0
      %3997 = vmatpush.msra.mxu0 0.0
      %3998 = vmatpush.msra.mxu0 0.0
      %3999 = vmatpush.msra.mxu0 0.0
      %4000 = vmatpush.msra.mxu0 0.0
      %4001 = vmatpush.msra.mxu0 0.0
      %4002 = vmatpush.msra.mxu0 0.0
      %4003 = vmatpush.msra.mxu0 0.0
      %4004 = vmatpush.msra.mxu0 0.0
      %4005 = vmatpush.msra.mxu0 %v3068
      %4006 = vmatmul.f32.gmra.mxu0 %v3988
      %v4007 = vpop.f32.mrf.mxu0
      %v4008 = vadd.f32 0.0, %v4007
      %4009 = vdwg.mxu0
      %v4011 = vsel %vm917, %v3664, 0
      %4013 = vmatpush.msra.mxu0 0.0
      %4014 = vmatpush.msra.mxu0 0.0
      %4015 = vmatpush.msra.mxu0 0.0
      %4016 = vmatpush.msra.mxu0 0.0
      %4017 = vmatpush.msra.mxu0 0.0
      %4018 = vmatpush.msra.mxu0 0.0
      %4019 = vmatpush.msra.mxu0 0.0
      %4020 = vmatpush.msra.mxu0 0.0
      %4021 = vmatpush.msra.mxu0 0.0
      %4022 = vmatpush.msra.mxu0 0.0
      %4023 = vmatpush.msra.mxu0 0.0
      %4024 = vmatpush.msra.mxu0 0.0
      %4025 = vmatpush.msra.mxu0 0.0
      %4026 = vmatpush.msra.mxu0 0.0
      %4027 = vmatpush.msra.mxu0 0.0
      %4028 = vmatpush.msra.mxu0 %v3071
      %4029 = vmatmul.f32.gmra.mxu0 %v4011
      %v4030 = vpop.f32.mrf.mxu0
      %v4031 = vadd.f32 0.0, %v4030
      %4032 = vdwg.mxu0
      %s4033 = scalar_lea.vmem %s4, 32
      %v4034 = vld [vmem:[%s4033] sm:$0xff]
      %v4035 = vld [vmem:[%s4033 + $0x8] sm:$0xff]
      %v4037 = vsel %vm500, %v3686, 0
      %v4040 = vsel %vm500, %v3709, 0
      %v4043 = vsel %vm500, %v3732, 0
      %v4046 = vsel %vm500, %v3755, 0
      %v4049 = vsel %vm500, %v3778, 0
      %v4052 = vsel %vm500, %v3801, 0
      %v4055 = vsel %vm500, %v3824, 0
      %v4058 = vsel %vm500, %v3847, 0
      %v4061 = vsel %vm500, %v3870, 0
      %v4064 = vsel %vm500, %v3893, 0
      %v4067 = vsel %vm500, %v3916, 0
      %v4070 = vsel %vm500, %v3939, 0
      %v4073 = vsel %vm500, %v3962, 0
      %v4076 = vsel %vm500, %v3985, 0
      %v4079 = vsel %vm500, %v4008, 0
      %v4082 = vsel %vm500, %v4031, 0
      %4084 = vmatpush.msra.mxu0 0.0
      %4085 = vmatpush.msra.mxu0 0.0
      %4086 = vmatpush.msra.mxu0 0.0
      %4087 = vmatpush.msra.mxu0 0.0
      %4088 = vmatpush.msra.mxu0 0.0
      %4089 = vmatpush.msra.mxu0 0.0
      %4090 = vmatpush.msra.mxu0 0.0
      %4091 = vmatpush.msra.mxu0 0.0
      %4092 = vmatpush.msra.mxu0 0.0
      %4093 = vmatpush.msra.mxu0 0.0
      %4094 = vmatpush.msra.mxu0 0.0
      %4095 = vmatpush.msra.mxu0 0.0
      %4096 = vmatpush.msra.mxu0 0.0
      %4097 = vmatpush.msra.mxu0 0.0
      %4098 = vmatpush.msra.mxu0 %v4035
      %4099 = vmatpush.msra.mxu0 %v4034
      %4100 = vmatmul.f32.gmra.mxu0 %v4037
      %v4101 = vpop.f32.mrf.mxu0
      %v4102 = vadd.f32 0.0, %v4101
      %4103 = vmatmul.f32.gmra.mxu0 %v4040
      %v4104 = vpop.f32.mrf.mxu0
      %v4105 = vadd.f32 0.0, %v4104
      %4106 = vmatmul.f32.gmra.mxu0 %v4043
      %v4107 = vpop.f32.mrf.mxu0
      %v4108 = vadd.f32 0.0, %v4107
      %4109 = vmatmul.f32.gmra.mxu0 %v4046
      %v4110 = vpop.f32.mrf.mxu0
      %v4111 = vadd.f32 0.0, %v4110
      %4112 = vmatmul.f32.gmra.mxu0 %v4049
      %v4113 = vpop.f32.mrf.mxu0
      %v4114 = vadd.f32 0.0, %v4113
      %4115 = vmatmul.f32.gmra.mxu0 %v4052
      %v4116 = vpop.f32.mrf.mxu0
      %v4117 = vadd.f32 0.0, %v4116
      %4118 = vmatmul.f32.gmra.mxu0 %v4055
      %v4119 = vpop.f32.mrf.mxu0
      %v4120 = vadd.f32 0.0, %v4119
      %4121 = vmatmul.f32.gmra.mxu0 %v4058
      %v4122 = vpop.f32.mrf.mxu0
      %v4123 = vadd.f32 0.0, %v4122
      %4124 = vmatmul.f32.gmra.mxu0 %v4061
      %v4125 = vpop.f32.mrf.mxu0
      %v4126 = vadd.f32 0.0, %v4125
      %4127 = vmatmul.f32.gmra.mxu0 %v4064
      %v4128 = vpop.f32.mrf.mxu0
      %v4129 = vadd.f32 0.0, %v4128
      %4130 = vmatmul.f32.gmra.mxu0 %v4067
      %v4131 = vpop.f32.mrf.mxu0
      %v4132 = vadd.f32 0.0, %v4131
      %4133 = vmatmul.f32.gmra.mxu0 %v4070
      %v4134 = vpop.f32.mrf.mxu0
      %v4135 = vadd.f32 0.0, %v4134
      %4136 = vmatmul.f32.gmra.mxu0 %v4073
      %v4137 = vpop.f32.mrf.mxu0
      %v4138 = vadd.f32 0.0, %v4137
      %4139 = vmatmul.f32.gmra.mxu0 %v4076
      %v4140 = vpop.f32.mrf.mxu0
      %v4141 = vadd.f32 0.0, %v4140
      %4142 = vmatmul.f32.gmra.mxu0 %v4079
      %v4143 = vpop.f32.mrf.mxu0
      %v4144 = vadd.f32 0.0, %v4143
      %4145 = vmatmul.f32.gmra.mxu0 %v4082
      %v4146 = vpop.f32.mrf.mxu0
      %v4147 = vadd.f32 0.0, %v4146
      %4148 = vdwg.mxu0
      %v4149 = vadd.f32 %v2816, %v4102
      %v4150 = vadd.f32 %v2819, %v4105
      %v4151 = vadd.f32 %v2822, %v4108
      %v4152 = vadd.f32 %v2825, %v4111
      %v4153 = vadd.f32 %v2828, %v4114
      %v4154 = vadd.f32 %v2831, %v4117
      %v4155 = vadd.f32 %v2834, %v4120
      %v4156 = vadd.f32 %v2837, %v4123
      %v4157 = vadd.f32 %v2840, %v4126
      %v4158 = vadd.f32 %v2843, %v4129
      %v4159 = vadd.f32 %v2846, %v4132
      %v4160 = vadd.f32 %v2849, %v4135
      %v4161 = vadd.f32 %v2852, %v4138
      %v4162 = vadd.f32 %v2855, %v4141
      %v4163 = vadd.f32 %v2858, %v4144
      %v4164 = vadd.f32 %v2861, %v4147
      %s4165 = scalar_lea.vmem %s1, 96
      %v4166 = vld [vmem:[%s4165] sm:$0xff]
      %v4167 = vld [vmem:[%s4165 + $0x8] sm:$0xff]
      %v4168 = vld [vmem:[%s4165 + $0x10] sm:$0xff]
      %v4169 = vld [vmem:[%s4165 + $0x18] sm:$0xff]
      %4170 = vmatpush.msra.mxu0 0.0
      %4171 = vmatpush.msra.mxu0 0.0
      %4172 = vmatpush.msra.mxu0 0.0
      %4173 = vmatpush.msra.mxu0 0.0
      %4174 = vmatpush.msra.mxu0 0.0
      %4175 = vmatpush.msra.mxu0 0.0
      %4176 = vmatpush.msra.mxu0 0.0
      %4177 = vmatpush.msra.mxu0 0.0
      %4178 = vmatpush.msra.mxu0 0.0
      %4179 = vmatpush.msra.mxu0 0.0
      %4180 = vmatpush.msra.mxu0 0.0
      %4181 = vmatpush.msra.mxu0 0.0
      %4182 = vmatpush.msra.mxu0 %v4169
      %4183 = vmatpush.msra.mxu0 %v4168
      %4184 = vmatpush.msra.mxu0 %v4167
      %4185 = vmatpush.msra.mxu0 %v4166
      %4186 = vmatmul.f32.gmra.mxu0 %v250
      %v4187 = vpop.f32.mrf.mxu0
      %v4188 = vadd.f32 0.0, %v4187
      %4189 = vmatmul.f32.gmra.mxu0 %v253
      %v4190 = vpop.f32.mrf.mxu0
      %v4191 = vadd.f32 0.0, %v4190
      %4192 = vmatmul.f32.gmra.mxu0 %v256
      %v4193 = vpop.f32.mrf.mxu0
      %v4194 = vadd.f32 0.0, %v4193
      %4195 = vmatmul.f32.gmra.mxu0 %v259
      %v4196 = vpop.f32.mrf.mxu0
      %v4197 = vadd.f32 0.0, %v4196
      %4198 = vmatmul.f32.gmra.mxu0 %v262
      %v4199 = vpop.f32.mrf.mxu0
      %v4200 = vadd.f32 0.0, %v4199
      %4201 = vmatmul.f32.gmra.mxu0 %v265
      %v4202 = vpop.f32.mrf.mxu0
      %v4203 = vadd.f32 0.0, %v4202
      %4204 = vmatmul.f32.gmra.mxu0 %v268
      %v4205 = vpop.f32.mrf.mxu0
      %v4206 = vadd.f32 0.0, %v4205
      %4207 = vmatmul.f32.gmra.mxu0 %v271
      %v4208 = vpop.f32.mrf.mxu0
      %v4209 = vadd.f32 0.0, %v4208
      %4210 = vmatmul.f32.gmra.mxu0 %v274
      %v4211 = vpop.f32.mrf.mxu0
      %v4212 = vadd.f32 0.0, %v4211
      %4213 = vmatmul.f32.gmra.mxu0 %v277
      %v4214 = vpop.f32.mrf.mxu0
      %v4215 = vadd.f32 0.0, %v4214
      %4216 = vmatmul.f32.gmra.mxu0 %v280
      %v4217 = vpop.f32.mrf.mxu0
      %v4218 = vadd.f32 0.0, %v4217
      %4219 = vmatmul.f32.gmra.mxu0 %v283
      %v4220 = vpop.f32.mrf.mxu0
      %v4221 = vadd.f32 0.0, %v4220
      %4222 = vmatmul.f32.gmra.mxu0 %v286
      %v4223 = vpop.f32.mrf.mxu0
      %v4224 = vadd.f32 0.0, %v4223
      %4225 = vmatmul.f32.gmra.mxu0 %v289
      %v4226 = vpop.f32.mrf.mxu0
      %v4227 = vadd.f32 0.0, %v4226
      %4228 = vmatmul.f32.gmra.mxu0 %v292
      %v4229 = vpop.f32.mrf.mxu0
      %v4230 = vadd.f32 0.0, %v4229
      %4231 = vmatmul.f32.gmra.mxu0 %v295
      %v4232 = vpop.f32.mrf.mxu0
      %v4233 = vadd.f32 0.0, %v4232
      %4234 = vdwg.mxu0
      %s4235 = scalar_lea.vmem %s2, 96
      %v4236 = vld [vmem:[%s4235] sm:$0xff]
      %v4237 = vld [vmem:[%s4235 + $0x8] sm:$0xff]
      %v4238 = vld [vmem:[%s4235 + $0x10] sm:$0xff]
      %v4239 = vld [vmem:[%s4235 + $0x18] sm:$0xff]
      %4240 = vmatpush.msra.mxu0 0.0
      %4241 = vmatpush.msra.mxu0 0.0
      %4242 = vmatpush.msra.mxu0 0.0
      %4243 = vmatpush.msra.mxu0 0.0
      %4244 = vmatpush.msra.mxu0 0.0
      %4245 = vmatpush.msra.mxu0 0.0
      %4246 = vmatpush.msra.mxu0 0.0
      %4247 = vmatpush.msra.mxu0 0.0
      %4248 = vmatpush.msra.mxu0 0.0
      %4249 = vmatpush.msra.mxu0 0.0
      %4250 = vmatpush.msra.mxu0 0.0
      %4251 = vmatpush.msra.mxu0 0.0
      %4252 = vmatpush.msra.mxu0 %v4239
      %4253 = vmatpush.msra.mxu0 %v4238
      %4254 = vmatpush.msra.mxu0 %v4237
      %4255 = vmatpush.msra.mxu0 %v4236
      %4256 = vmatmul.f32.gmra.mxu0 %v250
      %v4257 = vpop.f32.mrf.mxu0
      %v4258 = vadd.f32 0.0, %v4257
      %4259 = vmatmul.f32.gmra.mxu0 %v253
      %v4260 = vpop.f32.mrf.mxu0
      %v4261 = vadd.f32 0.0, %v4260
      %4262 = vmatmul.f32.gmra.mxu0 %v256
      %v4263 = vpop.f32.mrf.mxu0
      %v4264 = vadd.f32 0.0, %v4263
      %4265 = vmatmul.f32.gmra.mxu0 %v259
      %v4266 = vpop.f32.mrf.mxu0
      %v4267 = vadd.f32 0.0, %v4266
      %4268 = vmatmul.f32.gmra.mxu0 %v262
      %v4269 = vpop.f32.mrf.mxu0
      %v4270 = vadd.f32 0.0, %v4269
      %4271 = vmatmul.f32.gmra.mxu0 %v265
      %v4272 = vpop.f32.mrf.mxu0
      %v4273 = vadd.f32 0.0, %v4272
      %4274 = vmatmul.f32.gmra.mxu0 %v268
      %v4275 = vpop.f32.mrf.mxu0
      %v4276 = vadd.f32 0.0, %v4275
      %4277 = vmatmul.f32.gmra.mxu0 %v271
      %v4278 = vpop.f32.mrf.mxu0
      %v4279 = vadd.f32 0.0, %v4278
      %4280 = vmatmul.f32.gmra.mxu0 %v274
      %v4281 = vpop.f32.mrf.mxu0
      %v4282 = vadd.f32 0.0, %v4281
      %4283 = vmatmul.f32.gmra.mxu0 %v277
      %v4284 = vpop.f32.mrf.mxu0
      %v4285 = vadd.f32 0.0, %v4284
      %4286 = vmatmul.f32.gmra.mxu0 %v280
      %v4287 = vpop.f32.mrf.mxu0
      %v4288 = vadd.f32 0.0, %v4287
      %4289 = vmatmul.f32.gmra.mxu0 %v283
      %v4290 = vpop.f32.mrf.mxu0
      %v4291 = vadd.f32 0.0, %v4290
      %4292 = vmatmul.f32.gmra.mxu0 %v286
      %v4293 = vpop.f32.mrf.mxu0
      %v4294 = vadd.f32 0.0, %v4293
      %4295 = vmatmul.f32.gmra.mxu0 %v289
      %v4296 = vpop.f32.mrf.mxu0
      %v4297 = vadd.f32 0.0, %v4296
      %4298 = vmatmul.f32.gmra.mxu0 %v292
      %v4299 = vpop.f32.mrf.mxu0
      %v4300 = vadd.f32 0.0, %v4299
      %4301 = vmatmul.f32.gmra.mxu0 %v295
      %v4302 = vpop.f32.mrf.mxu0
      %v4303 = vadd.f32 0.0, %v4302
      %4304 = vdwg.mxu0
      %s4305 = scalar_lea.vmem %s3, 96
      %v4306 = vld [vmem:[%s4305] sm:$0xff]
      %v4307 = vld [vmem:[%s4305 + $0x8] sm:$0xff]
      %v4308 = vld [vmem:[%s4305 + $0x10] sm:$0xff]
      %v4309 = vld [vmem:[%s4305 + $0x18] sm:$0xff]
      %4310 = vmatpush.msra.mxu0 0.0
      %4311 = vmatpush.msra.mxu0 0.0
      %4312 = vmatpush.msra.mxu0 0.0
      %4313 = vmatpush.msra.mxu0 0.0
      %4314 = vmatpush.msra.mxu0 0.0
      %4315 = vmatpush.msra.mxu0 0.0
      %4316 = vmatpush.msra.mxu0 0.0
      %4317 = vmatpush.msra.mxu0 0.0
      %4318 = vmatpush.msra.mxu0 0.0
      %4319 = vmatpush.msra.mxu0 0.0
      %4320 = vmatpush.msra.mxu0 0.0
      %4321 = vmatpush.msra.mxu0 0.0
      %4322 = vmatpush.msra.mxu0 %v4309
      %4323 = vmatpush.msra.mxu0 %v4308
      %4324 = vmatpush.msra.mxu0 %v4307
      %4325 = vmatpush.msra.mxu0 %v4306
      %4326 = vmatmul.f32.gmra.mxu0 %v250
      %v4327 = vpop.f32.mrf.mxu0
      %v4328 = vadd.f32 0.0, %v4327
      %4329 = vmatmul.f32.gmra.mxu0 %v253
      %v4330 = vpop.f32.mrf.mxu0
      %v4331 = vadd.f32 0.0, %v4330
      %4332 = vmatmul.f32.gmra.mxu0 %v256
      %v4333 = vpop.f32.mrf.mxu0
      %v4334 = vadd.f32 0.0, %v4333
      %4335 = vmatmul.f32.gmra.mxu0 %v259
      %v4336 = vpop.f32.mrf.mxu0
      %v4337 = vadd.f32 0.0, %v4336
      %4338 = vmatmul.f32.gmra.mxu0 %v262
      %v4339 = vpop.f32.mrf.mxu0
      %v4340 = vadd.f32 0.0, %v4339
      %4341 = vmatmul.f32.gmra.mxu0 %v265
      %v4342 = vpop.f32.mrf.mxu0
      %v4343 = vadd.f32 0.0, %v4342
      %4344 = vmatmul.f32.gmra.mxu0 %v268
      %v4345 = vpop.f32.mrf.mxu0
      %v4346 = vadd.f32 0.0, %v4345
      %4347 = vmatmul.f32.gmra.mxu0 %v271
      %v4348 = vpop.f32.mrf.mxu0
      %v4349 = vadd.f32 0.0, %v4348
      %4350 = vmatmul.f32.gmra.mxu0 %v274
      %v4351 = vpop.f32.mrf.mxu0
      %v4352 = vadd.f32 0.0, %v4351
      %4353 = vmatmul.f32.gmra.mxu0 %v277
      %v4354 = vpop.f32.mrf.mxu0
      %v4355 = vadd.f32 0.0, %v4354
      %4356 = vmatmul.f32.gmra.mxu0 %v280
      %v4357 = vpop.f32.mrf.mxu0
      %v4358 = vadd.f32 0.0, %v4357
      %4359 = vmatmul.f32.gmra.mxu0 %v283
      %v4360 = vpop.f32.mrf.mxu0
      %v4361 = vadd.f32 0.0, %v4360
      %4362 = vmatmul.f32.gmra.mxu0 %v286
      %v4363 = vpop.f32.mrf.mxu0
      %v4364 = vadd.f32 0.0, %v4363
      %4365 = vmatmul.f32.gmra.mxu0 %v289
      %v4366 = vpop.f32.mrf.mxu0
      %v4367 = vadd.f32 0.0, %v4366
      %4368 = vmatmul.f32.gmra.mxu0 %v292
      %v4369 = vpop.f32.mrf.mxu0
      %v4370 = vadd.f32 0.0, %v4369
      %4371 = vmatmul.f32.gmra.mxu0 %v295
      %v4372 = vpop.f32.mrf.mxu0
      %v4373 = vadd.f32 0.0, %v4372
      %4374 = vdwg.mxu0
      %v4376 = vsel %vm500, %v4188, 0
      %v4379 = vsel %vm500, %v4258, 0
      %4381 = vmatpush.xpose.msra.mxu0 0.0
      %4382 = vmatpush.xpose.msra.mxu0 0.0
      %4383 = vmatpush.xpose.msra.mxu0 0.0
      %4384 = vmatpush.xpose.msra.mxu0 0.0
      %4385 = vmatpush.xpose.msra.mxu0 0.0
      %4386 = vmatpush.xpose.msra.mxu0 0.0
      %4387 = vmatpush.xpose.msra.mxu0 0.0
      %4388 = vmatpush.xpose.msra.mxu0 0.0
      %4389 = vmatpush.xpose.msra.mxu0 0.0
      %4390 = vmatpush.xpose.msra.mxu0 0.0
      %4391 = vmatpush.xpose.msra.mxu0 0.0
      %4392 = vmatpush.xpose.msra.mxu0 0.0
      %4393 = vmatpush.xpose.msra.mxu0 0.0
      %4394 = vmatpush.xpose.msra.mxu0 0.0
      %4395 = vmatpush.xpose.msra.mxu0 0.0
      %4396 = vmatpush.xpose.msra.mxu0 %v4379
      %4397 = vmatmul.f32.gmra.mxu0 %v4376
      %v4398 = vpop.f32.mrf.mxu0
      %v4399 = vadd.f32 0.0, %v4398
      %4400 = vdwg.mxu0
      %v4402 = vsel %vm500, %v4191, 0
      %v4405 = vsel %vm500, %v4261, 0
      %4407 = vmatpush.xpose.msra.mxu0 0.0
      %4408 = vmatpush.xpose.msra.mxu0 0.0
      %4409 = vmatpush.xpose.msra.mxu0 0.0
      %4410 = vmatpush.xpose.msra.mxu0 0.0
      %4411 = vmatpush.xpose.msra.mxu0 0.0
      %4412 = vmatpush.xpose.msra.mxu0 0.0
      %4413 = vmatpush.xpose.msra.mxu0 0.0
      %4414 = vmatpush.xpose.msra.mxu0 0.0
      %4415 = vmatpush.xpose.msra.mxu0 0.0
      %4416 = vmatpush.xpose.msra.mxu0 0.0
      %4417 = vmatpush.xpose.msra.mxu0 0.0
      %4418 = vmatpush.xpose.msra.mxu0 0.0
      %4419 = vmatpush.xpose.msra.mxu0 0.0
      %4420 = vmatpush.xpose.msra.mxu0 0.0
      %4421 = vmatpush.xpose.msra.mxu0 0.0
      %4422 = vmatpush.xpose.msra.mxu0 %v4405
      %4423 = vmatmul.f32.gmra.mxu0 %v4402
      %v4424 = vpop.f32.mrf.mxu0
      %v4425 = vadd.f32 0.0, %v4424
      %4426 = vdwg.mxu0
      %v4428 = vsel %vm500, %v4194, 0
      %v4431 = vsel %vm500, %v4264, 0
      %4433 = vmatpush.xpose.msra.mxu0 0.0
      %4434 = vmatpush.xpose.msra.mxu0 0.0
      %4435 = vmatpush.xpose.msra.mxu0 0.0
      %4436 = vmatpush.xpose.msra.mxu0 0.0
      %4437 = vmatpush.xpose.msra.mxu0 0.0
      %4438 = vmatpush.xpose.msra.mxu0 0.0
      %4439 = vmatpush.xpose.msra.mxu0 0.0
      %4440 = vmatpush.xpose.msra.mxu0 0.0
      %4441 = vmatpush.xpose.msra.mxu0 0.0
      %4442 = vmatpush.xpose.msra.mxu0 0.0
      %4443 = vmatpush.xpose.msra.mxu0 0.0
      %4444 = vmatpush.xpose.msra.mxu0 0.0
      %4445 = vmatpush.xpose.msra.mxu0 0.0
      %4446 = vmatpush.xpose.msra.mxu0 0.0
      %4447 = vmatpush.xpose.msra.mxu0 0.0
      %4448 = vmatpush.xpose.msra.mxu0 %v4431
      %4449 = vmatmul.f32.gmra.mxu0 %v4428
      %v4450 = vpop.f32.mrf.mxu0
      %v4451 = vadd.f32 0.0, %v4450
      %4452 = vdwg.mxu0
      %v4454 = vsel %vm500, %v4197, 0
      %v4457 = vsel %vm500, %v4267, 0
      %4459 = vmatpush.xpose.msra.mxu0 0.0
      %4460 = vmatpush.xpose.msra.mxu0 0.0
      %4461 = vmatpush.xpose.msra.mxu0 0.0
      %4462 = vmatpush.xpose.msra.mxu0 0.0
      %4463 = vmatpush.xpose.msra.mxu0 0.0
      %4464 = vmatpush.xpose.msra.mxu0 0.0
      %4465 = vmatpush.xpose.msra.mxu0 0.0
      %4466 = vmatpush.xpose.msra.mxu0 0.0
      %4467 = vmatpush.xpose.msra.mxu0 0.0
      %4468 = vmatpush.xpose.msra.mxu0 0.0
      %4469 = vmatpush.xpose.msra.mxu0 0.0
      %4470 = vmatpush.xpose.msra.mxu0 0.0
      %4471 = vmatpush.xpose.msra.mxu0 0.0
      %4472 = vmatpush.xpose.msra.mxu0 0.0
      %4473 = vmatpush.xpose.msra.mxu0 0.0
      %4474 = vmatpush.xpose.msra.mxu0 %v4457
      %4475 = vmatmul.f32.gmra.mxu0 %v4454
      %v4476 = vpop.f32.mrf.mxu0
      %v4477 = vadd.f32 0.0, %v4476
      %4478 = vdwg.mxu0
      %v4480 = vsel %vm500, %v4200, 0
      %v4483 = vsel %vm500, %v4270, 0
      %4485 = vmatpush.xpose.msra.mxu0 0.0
      %4486 = vmatpush.xpose.msra.mxu0 0.0
      %4487 = vmatpush.xpose.msra.mxu0 0.0
      %4488 = vmatpush.xpose.msra.mxu0 0.0
      %4489 = vmatpush.xpose.msra.mxu0 0.0
      %4490 = vmatpush.xpose.msra.mxu0 0.0
      %4491 = vmatpush.xpose.msra.mxu0 0.0
      %4492 = vmatpush.xpose.msra.mxu0 0.0
      %4493 = vmatpush.xpose.msra.mxu0 0.0
      %4494 = vmatpush.xpose.msra.mxu0 0.0
      %4495 = vmatpush.xpose.msra.mxu0 0.0
      %4496 = vmatpush.xpose.msra.mxu0 0.0
      %4497 = vmatpush.xpose.msra.mxu0 0.0
      %4498 = vmatpush.xpose.msra.mxu0 0.0
      %4499 = vmatpush.xpose.msra.mxu0 0.0
      %4500 = vmatpush.xpose.msra.mxu0 %v4483
      %4501 = vmatmul.f32.gmra.mxu0 %v4480
      %v4502 = vpop.f32.mrf.mxu0
      %v4503 = vadd.f32 0.0, %v4502
      %4504 = vdwg.mxu0
      %v4506 = vsel %vm500, %v4203, 0
      %v4509 = vsel %vm500, %v4273, 0
      %4511 = vmatpush.xpose.msra.mxu0 0.0
      %4512 = vmatpush.xpose.msra.mxu0 0.0
      %4513 = vmatpush.xpose.msra.mxu0 0.0
      %4514 = vmatpush.xpose.msra.mxu0 0.0
      %4515 = vmatpush.xpose.msra.mxu0 0.0
      %4516 = vmatpush.xpose.msra.mxu0 0.0
      %4517 = vmatpush.xpose.msra.mxu0 0.0
      %4518 = vmatpush.xpose.msra.mxu0 0.0
      %4519 = vmatpush.xpose.msra.mxu0 0.0
      %4520 = vmatpush.xpose.msra.mxu0 0.0
      %4521 = vmatpush.xpose.msra.mxu0 0.0
      %4522 = vmatpush.xpose.msra.mxu0 0.0
      %4523 = vmatpush.xpose.msra.mxu0 0.0
      %4524 = vmatpush.xpose.msra.mxu0 0.0
      %4525 = vmatpush.xpose.msra.mxu0 0.0
      %4526 = vmatpush.xpose.msra.mxu0 %v4509
      %4527 = vmatmul.f32.gmra.mxu0 %v4506
      %v4528 = vpop.f32.mrf.mxu0
      %v4529 = vadd.f32 0.0, %v4528
      %4530 = vdwg.mxu0
      %v4532 = vsel %vm500, %v4206, 0
      %v4535 = vsel %vm500, %v4276, 0
      %4537 = vmatpush.xpose.msra.mxu0 0.0
      %4538 = vmatpush.xpose.msra.mxu0 0.0
      %4539 = vmatpush.xpose.msra.mxu0 0.0
      %4540 = vmatpush.xpose.msra.mxu0 0.0
      %4541 = vmatpush.xpose.msra.mxu0 0.0
      %4542 = vmatpush.xpose.msra.mxu0 0.0
      %4543 = vmatpush.xpose.msra.mxu0 0.0
      %4544 = vmatpush.xpose.msra.mxu0 0.0
      %4545 = vmatpush.xpose.msra.mxu0 0.0
      %4546 = vmatpush.xpose.msra.mxu0 0.0
      %4547 = vmatpush.xpose.msra.mxu0 0.0
      %4548 = vmatpush.xpose.msra.mxu0 0.0
      %4549 = vmatpush.xpose.msra.mxu0 0.0
      %4550 = vmatpush.xpose.msra.mxu0 0.0
      %4551 = vmatpush.xpose.msra.mxu0 0.0
      %4552 = vmatpush.xpose.msra.mxu0 %v4535
      %4553 = vmatmul.f32.gmra.mxu0 %v4532
      %v4554 = vpop.f32.mrf.mxu0
      %v4555 = vadd.f32 0.0, %v4554
      %4556 = vdwg.mxu0
      %v4558 = vsel %vm500, %v4209, 0
      %v4561 = vsel %vm500, %v4279, 0
      %4563 = vmatpush.xpose.msra.mxu0 0.0
      %4564 = vmatpush.xpose.msra.mxu0 0.0
      %4565 = vmatpush.xpose.msra.mxu0 0.0
      %4566 = vmatpush.xpose.msra.mxu0 0.0
      %4567 = vmatpush.xpose.msra.mxu0 0.0
      %4568 = vmatpush.xpose.msra.mxu0 0.0
      %4569 = vmatpush.xpose.msra.mxu0 0.0
      %4570 = vmatpush.xpose.msra.mxu0 0.0
      %4571 = vmatpush.xpose.msra.mxu0 0.0
      %4572 = vmatpush.xpose.msra.mxu0 0.0
      %4573 = vmatpush.xpose.msra.mxu0 0.0
      %4574 = vmatpush.xpose.msra.mxu0 0.0
      %4575 = vmatpush.xpose.msra.mxu0 0.0
      %4576 = vmatpush.xpose.msra.mxu0 0.0
      %4577 = vmatpush.xpose.msra.mxu0 0.0
      %4578 = vmatpush.xpose.msra.mxu0 %v4561
      %4579 = vmatmul.f32.gmra.mxu0 %v4558
      %v4580 = vpop.f32.mrf.mxu0
      %v4581 = vadd.f32 0.0, %v4580
      %4582 = vdwg.mxu0
      %v4584 = vsel %vm500, %v4212, 0
      %v4587 = vsel %vm500, %v4282, 0
      %4589 = vmatpush.xpose.msra.mxu0 0.0
      %4590 = vmatpush.xpose.msra.mxu0 0.0
      %4591 = vmatpush.xpose.msra.mxu0 0.0
      %4592 = vmatpush.xpose.msra.mxu0 0.0
      %4593 = vmatpush.xpose.msra.mxu0 0.0
      %4594 = vmatpush.xpose.msra.mxu0 0.0
      %4595 = vmatpush.xpose.msra.mxu0 0.0
      %4596 = vmatpush.xpose.msra.mxu0 0.0
      %4597 = vmatpush.xpose.msra.mxu0 0.0
      %4598 = vmatpush.xpose.msra.mxu0 0.0
      %4599 = vmatpush.xpose.msra.mxu0 0.0
      %4600 = vmatpush.xpose.msra.mxu0 0.0
      %4601 = vmatpush.xpose.msra.mxu0 0.0
      %4602 = vmatpush.xpose.msra.mxu0 0.0
      %4603 = vmatpush.xpose.msra.mxu0 0.0
      %4604 = vmatpush.xpose.msra.mxu0 %v4587
      %4605 = vmatmul.f32.gmra.mxu0 %v4584
      %v4606 = vpop.f32.mrf.mxu0
      %v4607 = vadd.f32 0.0, %v4606
      %4608 = vdwg.mxu0
      %v4610 = vsel %vm500, %v4215, 0
      %v4613 = vsel %vm500, %v4285, 0
      %4615 = vmatpush.xpose.msra.mxu0 0.0
      %4616 = vmatpush.xpose.msra.mxu0 0.0
      %4617 = vmatpush.xpose.msra.mxu0 0.0
      %4618 = vmatpush.xpose.msra.mxu0 0.0
      %4619 = vmatpush.xpose.msra.mxu0 0.0
      %4620 = vmatpush.xpose.msra.mxu0 0.0
      %4621 = vmatpush.xpose.msra.mxu0 0.0
      %4622 = vmatpush.xpose.msra.mxu0 0.0
      %4623 = vmatpush.xpose.msra.mxu0 0.0
      %4624 = vmatpush.xpose.msra.mxu0 0.0
      %4625 = vmatpush.xpose.msra.mxu0 0.0
      %4626 = vmatpush.xpose.msra.mxu0 0.0
      %4627 = vmatpush.xpose.msra.mxu0 0.0
      %4628 = vmatpush.xpose.msra.mxu0 0.0
      %4629 = vmatpush.xpose.msra.mxu0 0.0
      %4630 = vmatpush.xpose.msra.mxu0 %v4613
      %4631 = vmatmul.f32.gmra.mxu0 %v4610
      %v4632 = vpop.f32.mrf.mxu0
      %v4633 = vadd.f32 0.0, %v4632
      %4634 = vdwg.mxu0
      %v4636 = vsel %vm500, %v4218, 0
      %v4639 = vsel %vm500, %v4288, 0
      %4641 = vmatpush.xpose.msra.mxu0 0.0
      %4642 = vmatpush.xpose.msra.mxu0 0.0
      %4643 = vmatpush.xpose.msra.mxu0 0.0
      %4644 = vmatpush.xpose.msra.mxu0 0.0
      %4645 = vmatpush.xpose.msra.mxu0 0.0
      %4646 = vmatpush.xpose.msra.mxu0 0.0
      %4647 = vmatpush.xpose.msra.mxu0 0.0
      %4648 = vmatpush.xpose.msra.mxu0 0.0
      %4649 = vmatpush.xpose.msra.mxu0 0.0
      %4650 = vmatpush.xpose.msra.mxu0 0.0
      %4651 = vmatpush.xpose.msra.mxu0 0.0
      %4652 = vmatpush.xpose.msra.mxu0 0.0
      %4653 = vmatpush.xpose.msra.mxu0 0.0
      %4654 = vmatpush.xpose.msra.mxu0 0.0
      %4655 = vmatpush.xpose.msra.mxu0 0.0
      %4656 = vmatpush.xpose.msra.mxu0 %v4639
      %4657 = vmatmul.f32.gmra.mxu0 %v4636
      %v4658 = vpop.f32.mrf.mxu0
      %v4659 = vadd.f32 0.0, %v4658
      %4660 = vdwg.mxu0
      %v4662 = vsel %vm500, %v4221, 0
      %v4665 = vsel %vm500, %v4291, 0
      %4667 = vmatpush.xpose.msra.mxu0 0.0
      %4668 = vmatpush.xpose.msra.mxu0 0.0
      %4669 = vmatpush.xpose.msra.mxu0 0.0
      %4670 = vmatpush.xpose.msra.mxu0 0.0
      %4671 = vmatpush.xpose.msra.mxu0 0.0
      %4672 = vmatpush.xpose.msra.mxu0 0.0
      %4673 = vmatpush.xpose.msra.mxu0 0.0
      %4674 = vmatpush.xpose.msra.mxu0 0.0
      %4675 = vmatpush.xpose.msra.mxu0 0.0
      %4676 = vmatpush.xpose.msra.mxu0 0.0
      %4677 = vmatpush.xpose.msra.mxu0 0.0
      %4678 = vmatpush.xpose.msra.mxu0 0.0
      %4679 = vmatpush.xpose.msra.mxu0 0.0
      %4680 = vmatpush.xpose.msra.mxu0 0.0
      %4681 = vmatpush.xpose.msra.mxu0 0.0
      %4682 = vmatpush.xpose.msra.mxu0 %v4665
      %4683 = vmatmul.f32.gmra.mxu0 %v4662
      %v4684 = vpop.f32.mrf.mxu0
      %v4685 = vadd.f32 0.0, %v4684
      %4686 = vdwg.mxu0
      %v4688 = vsel %vm500, %v4224, 0
      %v4691 = vsel %vm500, %v4294, 0
      %4693 = vmatpush.xpose.msra.mxu0 0.0
      %4694 = vmatpush.xpose.msra.mxu0 0.0
      %4695 = vmatpush.xpose.msra.mxu0 0.0
      %4696 = vmatpush.xpose.msra.mxu0 0.0
      %4697 = vmatpush.xpose.msra.mxu0 0.0
      %4698 = vmatpush.xpose.msra.mxu0 0.0
      %4699 = vmatpush.xpose.msra.mxu0 0.0
      %4700 = vmatpush.xpose.msra.mxu0 0.0
      %4701 = vmatpush.xpose.msra.mxu0 0.0
      %4702 = vmatpush.xpose.msra.mxu0 0.0
      %4703 = vmatpush.xpose.msra.mxu0 0.0
      %4704 = vmatpush.xpose.msra.mxu0 0.0
      %4705 = vmatpush.xpose.msra.mxu0 0.0
      %4706 = vmatpush.xpose.msra.mxu0 0.0
      %4707 = vmatpush.xpose.msra.mxu0 0.0
      %4708 = vmatpush.xpose.msra.mxu0 %v4691
      %4709 = vmatmul.f32.gmra.mxu0 %v4688
      %v4710 = vpop.f32.mrf.mxu0
      %v4711 = vadd.f32 0.0, %v4710
      %4712 = vdwg.mxu0
      %v4714 = vsel %vm500, %v4227, 0
      %v4717 = vsel %vm500, %v4297, 0
      %4719 = vmatpush.xpose.msra.mxu0 0.0
      %4720 = vmatpush.xpose.msra.mxu0 0.0
      %4721 = vmatpush.xpose.msra.mxu0 0.0
      %4722 = vmatpush.xpose.msra.mxu0 0.0
      %4723 = vmatpush.xpose.msra.mxu0 0.0
      %4724 = vmatpush.xpose.msra.mxu0 0.0
      %4725 = vmatpush.xpose.msra.mxu0 0.0
      %4726 = vmatpush.xpose.msra.mxu0 0.0
      %4727 = vmatpush.xpose.msra.mxu0 0.0
      %4728 = vmatpush.xpose.msra.mxu0 0.0
      %4729 = vmatpush.xpose.msra.mxu0 0.0
      %4730 = vmatpush.xpose.msra.mxu0 0.0
      %4731 = vmatpush.xpose.msra.mxu0 0.0
      %4732 = vmatpush.xpose.msra.mxu0 0.0
      %4733 = vmatpush.xpose.msra.mxu0 0.0
      %4734 = vmatpush.xpose.msra.mxu0 %v4717
      %4735 = vmatmul.f32.gmra.mxu0 %v4714
      %v4736 = vpop.f32.mrf.mxu0
      %v4737 = vadd.f32 0.0, %v4736
      %4738 = vdwg.mxu0
      %v4740 = vsel %vm500, %v4230, 0
      %v4743 = vsel %vm500, %v4300, 0
      %4745 = vmatpush.xpose.msra.mxu0 0.0
      %4746 = vmatpush.xpose.msra.mxu0 0.0
      %4747 = vmatpush.xpose.msra.mxu0 0.0
      %4748 = vmatpush.xpose.msra.mxu0 0.0
      %4749 = vmatpush.xpose.msra.mxu0 0.0
      %4750 = vmatpush.xpose.msra.mxu0 0.0
      %4751 = vmatpush.xpose.msra.mxu0 0.0
      %4752 = vmatpush.xpose.msra.mxu0 0.0
      %4753 = vmatpush.xpose.msra.mxu0 0.0
      %4754 = vmatpush.xpose.msra.mxu0 0.0
      %4755 = vmatpush.xpose.msra.mxu0 0.0
      %4756 = vmatpush.xpose.msra.mxu0 0.0
      %4757 = vmatpush.xpose.msra.mxu0 0.0
      %4758 = vmatpush.xpose.msra.mxu0 0.0
      %4759 = vmatpush.xpose.msra.mxu0 0.0
      %4760 = vmatpush.xpose.msra.mxu0 %v4743
      %4761 = vmatmul.f32.gmra.mxu0 %v4740
      %v4762 = vpop.f32.mrf.mxu0
      %v4763 = vadd.f32 0.0, %v4762
      %4764 = vdwg.mxu0
      %v4766 = vsel %vm500, %v4233, 0
      %v4769 = vsel %vm500, %v4303, 0
      %4771 = vmatpush.xpose.msra.mxu0 0.0
      %4772 = vmatpush.xpose.msra.mxu0 0.0
      %4773 = vmatpush.xpose.msra.mxu0 0.0
      %4774 = vmatpush.xpose.msra.mxu0 0.0
      %4775 = vmatpush.xpose.msra.mxu0 0.0
      %4776 = vmatpush.xpose.msra.mxu0 0.0
      %4777 = vmatpush.xpose.msra.mxu0 0.0
      %4778 = vmatpush.xpose.msra.mxu0 0.0
      %4779 = vmatpush.xpose.msra.mxu0 0.0
      %4780 = vmatpush.xpose.msra.mxu0 0.0
      %4781 = vmatpush.xpose.msra.mxu0 0.0
      %4782 = vmatpush.xpose.msra.mxu0 0.0
      %4783 = vmatpush.xpose.msra.mxu0 0.0
      %4784 = vmatpush.xpose.msra.mxu0 0.0
      %4785 = vmatpush.xpose.msra.mxu0 0.0
      %4786 = vmatpush.xpose.msra.mxu0 %v4769
      %4787 = vmatmul.f32.gmra.mxu0 %v4766
      %v4788 = vpop.f32.mrf.mxu0
      %v4789 = vadd.f32 0.0, %v4788
      %4790 = vdwg.mxu0
      %v4791 = vsel %vm917, %v4399, -inf
      %4792 = vmax.xlane.f32.xlu0 %v4791
      %v4793 = vpop.xlane.xlu0 %4792
      %v4794 = vsel %vm917, %v4425, -inf
      %4795 = vmax.xlane.f32.xlu0 %v4794
      %v4796 = vpop.xlane.xlu0 %4795
      %v4797 = vsel %vm917, %v4451, -inf
      %4798 = vmax.xlane.f32.xlu0 %v4797
      %v4799 = vpop.xlane.xlu0 %4798
      %v4800 = vsel %vm917, %v4477, -inf
      %4801 = vmax.xlane.f32.xlu0 %v4800
      %v4802 = vpop.xlane.xlu0 %4801
      %v4803 = vsel %vm917, %v4503, -inf
      %4804 = vmax.xlane.f32.xlu0 %v4803
      %v4805 = vpop.xlane.xlu0 %4804
      %v4806 = vsel %vm917, %v4529, -inf
      %4807 = vmax.xlane.f32.xlu0 %v4806
      %v4808 = vpop.xlane.xlu0 %4807
      %v4809 = vsel %vm917, %v4555, -inf
      %4810 = vmax.xlane.f32.xlu0 %v4809
      %v4811 = vpop.xlane.xlu0 %4810
      %v4812 = vsel %vm917, %v4581, -inf
      %4813 = vmax.xlane.f32.xlu0 %v4812
      %v4814 = vpop.xlane.xlu0 %4813
      %v4815 = vsel %vm917, %v4607, -inf
      %4816 = vmax.xlane.f32.xlu0 %v4815
      %v4817 = vpop.xlane.xlu0 %4816
      %v4818 = vsel %vm917, %v4633, -inf
      %4819 = vmax.xlane.f32.xlu0 %v4818
      %v4820 = vpop.xlane.xlu0 %4819
      %v4821 = vsel %vm917, %v4659, -inf
      %4822 = vmax.xlane.f32.xlu0 %v4821
      %v4823 = vpop.xlane.xlu0 %4822
      %v4824 = vsel %vm917, %v4685, -inf
      %4825 = vmax.xlane.f32.xlu0 %v4824
      %v4826 = vpop.xlane.xlu0 %4825
      %v4827 = vsel %vm917, %v4711, -inf
      %4828 = vmax.xlane.f32.xlu0 %v4827
      %v4829 = vpop.xlane.xlu0 %4828
      %v4830 = vsel %vm917, %v4737, -inf
      %4831 = vmax.xlane.f32.xlu0 %v4830
      %v4832 = vpop.xlane.xlu0 %4831
      %v4833 = vsel %vm917, %v4763, -inf
      %4834 = vmax.xlane.f32.xlu0 %v4833
      %v4835 = vpop.xlane.xlu0 %4834
      %v4836 = vsel %vm917, %v4789, -inf
      %4837 = vmax.xlane.f32.xlu0 %v4836
      %v4838 = vpop.xlane.xlu0 %4837
      %v4839 = vsub.f32 %v4399, %v4793
      %v4840 = vsub.f32 %v4425, %v4796
      %v4841 = vsub.f32 %v4451, %v4799
      %v4842 = vsub.f32 %v4477, %v4802
      %v4843 = vsub.f32 %v4503, %v4805
      %v4844 = vsub.f32 %v4529, %v4808
      %v4845 = vsub.f32 %v4555, %v4811
      %v4846 = vsub.f32 %v4581, %v4814
      %v4847 = vsub.f32 %v4607, %v4817
      %v4848 = vsub.f32 %v4633, %v4820
      %v4849 = vsub.f32 %v4659, %v4823
      %v4850 = vsub.f32 %v4685, %v4826
      %v4851 = vsub.f32 %v4711, %v4829
      %v4852 = vsub.f32 %v4737, %v4832
      %v4853 = vsub.f32 %v4763, %v4835
      %v4854 = vsub.f32 %v4789, %v4838
      %v4855 = vmul.f32 %v4839, 1.442695
      %v4856 = vpow.pop %v4855
      %v4857 = vmul.f32 %v4840, 1.442695
      %v4858 = vpow.pop %v4857
      %v4859 = vmul.f32 %v4841, 1.442695
      %v4860 = vpow.pop %v4859
      %v4861 = vmul.f32 %v4842, 1.442695
      %v4862 = vpow.pop %v4861
      %v4863 = vmul.f32 %v4843, 1.442695
      %v4864 = vpow.pop %v4863
      %v4865 = vmul.f32 %v4844, 1.442695
      %v4866 = vpow.pop %v4865
      %v4867 = vmul.f32 %v4845, 1.442695
      %v4868 = vpow.pop %v4867
      %v4869 = vmul.f32 %v4846, 1.442695
      %v4870 = vpow.pop %v4869
      %v4871 = vmul.f32 %v4847, 1.442695
      %v4872 = vpow.pop %v4871
      %v4873 = vmul.f32 %v4848, 1.442695
      %v4874 = vpow.pop %v4873
      %v4875 = vmul.f32 %v4849, 1.442695
      %v4876 = vpow.pop %v4875
      %v4877 = vmul.f32 %v4850, 1.442695
      %v4878 = vpow.pop %v4877
      %v4879 = vmul.f32 %v4851, 1.442695
      %v4880 = vpow.pop %v4879
      %v4881 = vmul.f32 %v4852, 1.442695
      %v4882 = vpow.pop %v4881
      %v4883 = vmul.f32 %v4853, 1.442695
      %v4884 = vpow.pop %v4883
      %v4885 = vmul.f32 %v4854, 1.442695
      %v4886 = vpow.pop %v4885
      %v4887 = vsel %vm917, %v4856, 0.0
      %4888 = vadd.xlane.f32.xlu0 %v4887
      %v4889 = vpop.xlane.xlu0 %4888
      %v4890 = vsel %vm917, %v4858, 0.0
      %4891 = vadd.xlane.f32.xlu0 %v4890
      %v4892 = vpop.xlane.xlu0 %4891
      %v4893 = vsel %vm917, %v4860, 0.0
      %4894 = vadd.xlane.f32.xlu0 %v4893
      %v4895 = vpop.xlane.xlu0 %4894
      %v4896 = vsel %vm917, %v4862, 0.0
      %4897 = vadd.xlane.f32.xlu0 %v4896
      %v4898 = vpop.xlane.xlu0 %4897
      %v4899 = vsel %vm917, %v4864, 0.0
      %4900 = vadd.xlane.f32.xlu0 %v4899
      %v4901 = vpop.xlane.xlu0 %4900
      %v4902 = vsel %vm917, %v4866, 0.0
      %4903 = vadd.xlane.f32.xlu0 %v4902
      %v4904 = vpop.xlane.xlu0 %4903
      %v4905 = vsel %vm917, %v4868, 0.0
      %4906 = vadd.xlane.f32.xlu0 %v4905
      %v4907 = vpop.xlane.xlu0 %4906
      %v4908 = vsel %vm917, %v4870, 0.0
      %4909 = vadd.xlane.f32.xlu0 %v4908
      %v4910 = vpop.xlane.xlu0 %4909
      %v4911 = vsel %vm917, %v4872, 0.0
      %4912 = vadd.xlane.f32.xlu0 %v4911
      %v4913 = vpop.xlane.xlu0 %4912
      %v4914 = vsel %vm917, %v4874, 0.0
      %4915 = vadd.xlane.f32.xlu0 %v4914
      %v4916 = vpop.xlane.xlu0 %4915
      %v4917 = vsel %vm917, %v4876, 0.0
      %4918 = vadd.xlane.f32.xlu0 %v4917
      %v4919 = vpop.xlane.xlu0 %4918
      %v4920 = vsel %vm917, %v4878, 0.0
      %4921 = vadd.xlane.f32.xlu0 %v4920
      %v4922 = vpop.xlane.xlu0 %4921
      %v4923 = vsel %vm917, %v4880, 0.0
      %4924 = vadd.xlane.f32.xlu0 %v4923
      %v4925 = vpop.xlane.xlu0 %4924
      %v4926 = vsel %vm917, %v4882, 0.0
      %4927 = vadd.xlane.f32.xlu0 %v4926
      %v4928 = vpop.xlane.xlu0 %4927
      %v4929 = vsel %vm917, %v4884, 0.0
      %4930 = vadd.xlane.f32.xlu0 %v4929
      %v4931 = vpop.xlane.xlu0 %4930
      %v4932 = vsel %vm917, %v4886, 0.0
      %4933 = vadd.xlane.f32.xlu0 %v4932
      %v4934 = vpop.xlane.xlu0 %4933
      %v4935 = vrcp.pop %v4889
      %v4936 = vrcp.pop %v4892
      %v4937 = vrcp.pop %v4895
      %v4938 = vrcp.pop %v4898
      %v4939 = vrcp.pop %v4901
      %v4940 = vrcp.pop %v4904
      %v4941 = vrcp.pop %v4907
      %v4942 = vrcp.pop %v4910
      %v4943 = vrcp.pop %v4913
      %v4944 = vrcp.pop %v4916
      %v4945 = vrcp.pop %v4919
      %v4946 = vrcp.pop %v4922
      %v4947 = vrcp.pop %v4925
      %v4948 = vrcp.pop %v4928
      %v4949 = vrcp.pop %v4931
      %v4950 = vrcp.pop %v4934
      %v4951 = vmul.f32 %v4856, %v4935
      %v4952 = vmul.f32 %v4858, %v4936
      %v4953 = vmul.f32 %v4860, %v4937
      %v4954 = vmul.f32 %v4862, %v4938
      %v4955 = vmul.f32 %v4864, %v4939
      %v4956 = vmul.f32 %v4866, %v4940
      %v4957 = vmul.f32 %v4868, %v4941
      %v4958 = vmul.f32 %v4870, %v4942
      %v4959 = vmul.f32 %v4872, %v4943
      %v4960 = vmul.f32 %v4874, %v4944
      %v4961 = vmul.f32 %v4876, %v4945
      %v4962 = vmul.f32 %v4878, %v4946
      %v4963 = vmul.f32 %v4880, %v4947
      %v4964 = vmul.f32 %v4882, %v4948
      %v4965 = vmul.f32 %v4884, %v4949
      %v4966 = vmul.f32 %v4886, %v4950
      %v4968 = vsel %vm917, %v4951, 0
      %4970 = vmatpush.msra.mxu0 0.0
      %4971 = vmatpush.msra.mxu0 0.0
      %4972 = vmatpush.msra.mxu0 0.0
      %4973 = vmatpush.msra.mxu0 0.0
      %4974 = vmatpush.msra.mxu0 0.0
      %4975 = vmatpush.msra.mxu0 0.0
      %4976 = vmatpush.msra.mxu0 0.0
      %4977 = vmatpush.msra.mxu0 0.0
      %4978 = vmatpush.msra.mxu0 0.0
      %4979 = vmatpush.msra.mxu0 0.0
      %4980 = vmatpush.msra.mxu0 0.0
      %4981 = vmatpush.msra.mxu0 0.0
      %4982 = vmatpush.msra.mxu0 0.0
      %4983 = vmatpush.msra.mxu0 0.0
      %4984 = vmatpush.msra.mxu0 0.0
      %4985 = vmatpush.msra.mxu0 %v4328
      %4986 = vmatmul.f32.gmra.mxu0 %v4968
      %v4987 = vpop.f32.mrf.mxu0
      %v4988 = vadd.f32 0.0, %v4987
      %4989 = vdwg.mxu0
      %v4991 = vsel %vm917, %v4952, 0
      %4993 = vmatpush.msra.mxu0 0.0
      %4994 = vmatpush.msra.mxu0 0.0
      %4995 = vmatpush.msra.mxu0 0.0
      %4996 = vmatpush.msra.mxu0 0.0
      %4997 = vmatpush.msra.mxu0 0.0
      %4998 = vmatpush.msra.mxu0 0.0
      %4999 = vmatpush.msra.mxu0 0.0
      %5000 = vmatpush.msra.mxu0 0.0
      %5001 = vmatpush.msra.mxu0 0.0
      %5002 = vmatpush.msra.mxu0 0.0
      %5003 = vmatpush.msra.mxu0 0.0
      %5004 = vmatpush.msra.mxu0 0.0
      %5005 = vmatpush.msra.mxu0 0.0
      %5006 = vmatpush.msra.mxu0 0.0
      %5007 = vmatpush.msra.mxu0 0.0
      %5008 = vmatpush.msra.mxu0 %v4331
      %5009 = vmatmul.f32.gmra.mxu0 %v4991
      %v5010 = vpop.f32.mrf.mxu0
      %v5011 = vadd.f32 0.0, %v5010
      %5012 = vdwg.mxu0
      %v5014 = vsel %vm917, %v4953, 0
      %5016 = vmatpush.msra.mxu0 0.0
      %5017 = vmatpush.msra.mxu0 0.0
      %5018 = vmatpush.msra.mxu0 0.0
      %5019 = vmatpush.msra.mxu0 0.0
      %5020 = vmatpush.msra.mxu0 0.0
      %5021 = vmatpush.msra.mxu0 0.0
      %5022 = vmatpush.msra.mxu0 0.0
      %5023 = vmatpush.msra.mxu0 0.0
      %5024 = vmatpush.msra.mxu0 0.0
      %5025 = vmatpush.msra.mxu0 0.0
      %5026 = vmatpush.msra.mxu0 0.0
      %5027 = vmatpush.msra.mxu0 0.0
      %5028 = vmatpush.msra.mxu0 0.0
      %5029 = vmatpush.msra.mxu0 0.0
      %5030 = vmatpush.msra.mxu0 0.0
      %5031 = vmatpush.msra.mxu0 %v4334
      %5032 = vmatmul.f32.gmra.mxu0 %v5014
      %v5033 = vpop.f32.mrf.mxu0
      %v5034 = vadd.f32 0.0, %v5033
      %5035 = vdwg.mxu0
      %v5037 = vsel %vm917, %v4954, 0
      %5039 = vmatpush.msra.mxu0 0.0
      %5040 = vmatpush.msra.mxu0 0.0
      %5041 = vmatpush.msra.mxu0 0.0
      %5042 = vmatpush.msra.mxu0 0.0
      %5043 = vmatpush.msra.mxu0 0.0
      %5044 = vmatpush.msra.mxu0 0.0
      %5045 = vmatpush.msra.mxu0 0.0
      %5046 = vmatpush.msra.mxu0 0.0
      %5047 = vmatpush.msra.mxu0 0.0
      %5048 = vmatpush.msra.mxu0 0.0
      %5049 = vmatpush.msra.mxu0 0.0
      %5050 = vmatpush.msra.mxu0 0.0
      %5051 = vmatpush.msra.mxu0 0.0
      %5052 = vmatpush.msra.mxu0 0.0
      %5053 = vmatpush.msra.mxu0 0.0
      %5054 = vmatpush.msra.mxu0 %v4337
      %5055 = vmatmul.f32.gmra.mxu0 %v5037
      %v5056 = vpop.f32.mrf.mxu0
      %v5057 = vadd.f32 0.0, %v5056
      %5058 = vdwg.mxu0
      %v5060 = vsel %vm917, %v4955, 0
      %5062 = vmatpush.msra.mxu0 0.0
      %5063 = vmatpush.msra.mxu0 0.0
      %5064 = vmatpush.msra.mxu0 0.0
      %5065 = vmatpush.msra.mxu0 0.0
      %5066 = vmatpush.msra.mxu0 0.0
      %5067 = vmatpush.msra.mxu0 0.0
      %5068 = vmatpush.msra.mxu0 0.0
      %5069 = vmatpush.msra.mxu0 0.0
      %5070 = vmatpush.msra.mxu0 0.0
      %5071 = vmatpush.msra.mxu0 0.0
      %5072 = vmatpush.msra.mxu0 0.0
      %5073 = vmatpush.msra.mxu0 0.0
      %5074 = vmatpush.msra.mxu0 0.0
      %5075 = vmatpush.msra.mxu0 0.0
      %5076 = vmatpush.msra.mxu0 0.0
      %5077 = vmatpush.msra.mxu0 %v4340
      %5078 = vmatmul.f32.gmra.mxu0 %v5060
      %v5079 = vpop.f32.mrf.mxu0
      %v5080 = vadd.f32 0.0, %v5079
      %5081 = vdwg.mxu0
      %v5083 = vsel %vm917, %v4956, 0
      %5085 = vmatpush.msra.mxu0 0.0
      %5086 = vmatpush.msra.mxu0 0.0
      %5087 = vmatpush.msra.mxu0 0.0
      %5088 = vmatpush.msra.mxu0 0.0
      %5089 = vmatpush.msra.mxu0 0.0
      %5090 = vmatpush.msra.mxu0 0.0
      %5091 = vmatpush.msra.mxu0 0.0
      %5092 = vmatpush.msra.mxu0 0.0
      %5093 = vmatpush.msra.mxu0 0.0
      %5094 = vmatpush.msra.mxu0 0.0
      %5095 = vmatpush.msra.mxu0 0.0
      %5096 = vmatpush.msra.mxu0 0.0
      %5097 = vmatpush.msra.mxu0 0.0
      %5098 = vmatpush.msra.mxu0 0.0
      %5099 = vmatpush.msra.mxu0 0.0
      %5100 = vmatpush.msra.mxu0 %v4343
      %5101 = vmatmul.f32.gmra.mxu0 %v5083
      %v5102 = vpop.f32.mrf.mxu0
      %v5103 = vadd.f32 0.0, %v5102
      %5104 = vdwg.mxu0
      %v5106 = vsel %vm917, %v4957, 0
      %5108 = vmatpush.msra.mxu0 0.0
      %5109 = vmatpush.msra.mxu0 0.0
      %5110 = vmatpush.msra.mxu0 0.0
      %5111 = vmatpush.msra.mxu0 0.0
      %5112 = vmatpush.msra.mxu0 0.0
      %5113 = vmatpush.msra.mxu0 0.0
      %5114 = vmatpush.msra.mxu0 0.0
      %5115 = vmatpush.msra.mxu0 0.0
      %5116 = vmatpush.msra.mxu0 0.0
      %5117 = vmatpush.msra.mxu0 0.0
      %5118 = vmatpush.msra.mxu0 0.0
      %5119 = vmatpush.msra.mxu0 0.0
      %5120 = vmatpush.msra.mxu0 0.0
      %5121 = vmatpush.msra.mxu0 0.0
      %5122 = vmatpush.msra.mxu0 0.0
      %5123 = vmatpush.msra.mxu0 %v4346
      %5124 = vmatmul.f32.gmra.mxu0 %v5106
      %v5125 = vpop.f32.mrf.mxu0
      %v5126 = vadd.f32 0.0, %v5125
      %5127 = vdwg.mxu0
      %v5129 = vsel %vm917, %v4958, 0
      %5131 = vmatpush.msra.mxu0 0.0
      %5132 = vmatpush.msra.mxu0 0.0
      %5133 = vmatpush.msra.mxu0 0.0
      %5134 = vmatpush.msra.mxu0 0.0
      %5135 = vmatpush.msra.mxu0 0.0
      %5136 = vmatpush.msra.mxu0 0.0
      %5137 = vmatpush.msra.mxu0 0.0
      %5138 = vmatpush.msra.mxu0 0.0
      %5139 = vmatpush.msra.mxu0 0.0
      %5140 = vmatpush.msra.mxu0 0.0
      %5141 = vmatpush.msra.mxu0 0.0
      %5142 = vmatpush.msra.mxu0 0.0
      %5143 = vmatpush.msra.mxu0 0.0
      %5144 = vmatpush.msra.mxu0 0.0
      %5145 = vmatpush.msra.mxu0 0.0
      %5146 = vmatpush.msra.mxu0 %v4349
      %5147 = vmatmul.f32.gmra.mxu0 %v5129
      %v5148 = vpop.f32.mrf.mxu0
      %v5149 = vadd.f32 0.0, %v5148
      %5150 = vdwg.mxu0
      %v5152 = vsel %vm917, %v4959, 0
      %5154 = vmatpush.msra.mxu0 0.0
      %5155 = vmatpush.msra.mxu0 0.0
      %5156 = vmatpush.msra.mxu0 0.0
      %5157 = vmatpush.msra.mxu0 0.0
      %5158 = vmatpush.msra.mxu0 0.0
      %5159 = vmatpush.msra.mxu0 0.0
      %5160 = vmatpush.msra.mxu0 0.0
      %5161 = vmatpush.msra.mxu0 0.0
      %5162 = vmatpush.msra.mxu0 0.0
      %5163 = vmatpush.msra.mxu0 0.0
      %5164 = vmatpush.msra.mxu0 0.0
      %5165 = vmatpush.msra.mxu0 0.0
      %5166 = vmatpush.msra.mxu0 0.0
      %5167 = vmatpush.msra.mxu0 0.0
      %5168 = vmatpush.msra.mxu0 0.0
      %5169 = vmatpush.msra.mxu0 %v4352
      %5170 = vmatmul.f32.gmra.mxu0 %v5152
      %v5171 = vpop.f32.mrf.mxu0
      %v5172 = vadd.f32 0.0, %v5171
      %5173 = vdwg.mxu0
      %v5175 = vsel %vm917, %v4960, 0
      %5177 = vmatpush.msra.mxu0 0.0
      %5178 = vmatpush.msra.mxu0 0.0
      %5179 = vmatpush.msra.mxu0 0.0
      %5180 = vmatpush.msra.mxu0 0.0
      %5181 = vmatpush.msra.mxu0 0.0
      %5182 = vmatpush.msra.mxu0 0.0
      %5183 = vmatpush.msra.mxu0 0.0
      %5184 = vmatpush.msra.mxu0 0.0
      %5185 = vmatpush.msra.mxu0 0.0
      %5186 = vmatpush.msra.mxu0 0.0
      %5187 = vmatpush.msra.mxu0 0.0
      %5188 = vmatpush.msra.mxu0 0.0
      %5189 = vmatpush.msra.mxu0 0.0
      %5190 = vmatpush.msra.mxu0 0.0
      %5191 = vmatpush.msra.mxu0 0.0
      %5192 = vmatpush.msra.mxu0 %v4355
      %5193 = vmatmul.f32.gmra.mxu0 %v5175
      %v5194 = vpop.f32.mrf.mxu0
      %v5195 = vadd.f32 0.0, %v5194
      %5196 = vdwg.mxu0
      %v5198 = vsel %vm917, %v4961, 0
      %5200 = vmatpush.msra.mxu0 0.0
      %5201 = vmatpush.msra.mxu0 0.0
      %5202 = vmatpush.msra.mxu0 0.0
      %5203 = vmatpush.msra.mxu0 0.0
      %5204 = vmatpush.msra.mxu0 0.0
      %5205 = vmatpush.msra.mxu0 0.0
      %5206 = vmatpush.msra.mxu0 0.0
      %5207 = vmatpush.msra.mxu0 0.0
      %5208 = vmatpush.msra.mxu0 0.0
      %5209 = vmatpush.msra.mxu0 0.0
      %5210 = vmatpush.msra.mxu0 0.0
      %5211 = vmatpush.msra.mxu0 0.0
      %5212 = vmatpush.msra.mxu0 0.0
      %5213 = vmatpush.msra.mxu0 0.0
      %5214 = vmatpush.msra.mxu0 0.0
      %5215 = vmatpush.msra.mxu0 %v4358
      %5216 = vmatmul.f32.gmra.mxu0 %v5198
      %v5217 = vpop.f32.mrf.mxu0
      %v5218 = vadd.f32 0.0, %v5217
      %5219 = vdwg.mxu0
      %v5221 = vsel %vm917, %v4962, 0
      %5223 = vmatpush.msra.mxu0 0.0
      %5224 = vmatpush.msra.mxu0 0.0
      %5225 = vmatpush.msra.mxu0 0.0
      %5226 = vmatpush.msra.mxu0 0.0
      %5227 = vmatpush.msra.mxu0 0.0
      %5228 = vmatpush.msra.mxu0 0.0
      %5229 = vmatpush.msra.mxu0 0.0
      %5230 = vmatpush.msra.mxu0 0.0
      %5231 = vmatpush.msra.mxu0 0.0
      %5232 = vmatpush.msra.mxu0 0.0
      %5233 = vmatpush.msra.mxu0 0.0
      %5234 = vmatpush.msra.mxu0 0.0
      %5235 = vmatpush.msra.mxu0 0.0
      %5236 = vmatpush.msra.mxu0 0.0
      %5237 = vmatpush.msra.mxu0 0.0
      %5238 = vmatpush.msra.mxu0 %v4361
      %5239 = vmatmul.f32.gmra.mxu0 %v5221
      %v5240 = vpop.f32.mrf.mxu0
      %v5241 = vadd.f32 0.0, %v5240
      %5242 = vdwg.mxu0
      %v5244 = vsel %vm917, %v4963, 0
      %5246 = vmatpush.msra.mxu0 0.0
      %5247 = vmatpush.msra.mxu0 0.0
      %5248 = vmatpush.msra.mxu0 0.0
      %5249 = vmatpush.msra.mxu0 0.0
      %5250 = vmatpush.msra.mxu0 0.0
      %5251 = vmatpush.msra.mxu0 0.0
      %5252 = vmatpush.msra.mxu0 0.0
      %5253 = vmatpush.msra.mxu0 0.0
      %5254 = vmatpush.msra.mxu0 0.0
      %5255 = vmatpush.msra.mxu0 0.0
      %5256 = vmatpush.msra.mxu0 0.0
      %5257 = vmatpush.msra.mxu0 0.0
      %5258 = vmatpush.msra.mxu0 0.0
      %5259 = vmatpush.msra.mxu0 0.0
      %5260 = vmatpush.msra.mxu0 0.0
      %5261 = vmatpush.msra.mxu0 %v4364
      %5262 = vmatmul.f32.gmra.mxu0 %v5244
      %v5263 = vpop.f32.mrf.mxu0
      %v5264 = vadd.f32 0.0, %v5263
      %5265 = vdwg.mxu0
      %v5267 = vsel %vm917, %v4964, 0
      %5269 = vmatpush.msra.mxu0 0.0
      %5270 = vmatpush.msra.mxu0 0.0
      %5271 = vmatpush.msra.mxu0 0.0
      %5272 = vmatpush.msra.mxu0 0.0
      %5273 = vmatpush.msra.mxu0 0.0
      %5274 = vmatpush.msra.mxu0 0.0
      %5275 = vmatpush.msra.mxu0 0.0
      %5276 = vmatpush.msra.mxu0 0.0
      %5277 = vmatpush.msra.mxu0 0.0
      %5278 = vmatpush.msra.mxu0 0.0
      %5279 = vmatpush.msra.mxu0 0.0
      %5280 = vmatpush.msra.mxu0 0.0
      %5281 = vmatpush.msra.mxu0 0.0
      %5282 = vmatpush.msra.mxu0 0.0
      %5283 = vmatpush.msra.mxu0 0.0
      %5284 = vmatpush.msra.mxu0 %v4367
      %5285 = vmatmul.f32.gmra.mxu0 %v5267
      %v5286 = vpop.f32.mrf.mxu0
      %v5287 = vadd.f32 0.0, %v5286
      %5288 = vdwg.mxu0
      %v5290 = vsel %vm917, %v4965, 0
      %5292 = vmatpush.msra.mxu0 0.0
      %5293 = vmatpush.msra.mxu0 0.0
      %5294 = vmatpush.msra.mxu0 0.0
      %5295 = vmatpush.msra.mxu0 0.0
      %5296 = vmatpush.msra.mxu0 0.0
      %5297 = vmatpush.msra.mxu0 0.0
      %5298 = vmatpush.msra.mxu0 0.0
      %5299 = vmatpush.msra.mxu0 0.0
      %5300 = vmatpush.msra.mxu0 0.0
      %5301 = vmatpush.msra.mxu0 0.0
      %5302 = vmatpush.msra.mxu0 0.0
      %5303 = vmatpush.msra.mxu0 0.0
      %5304 = vmatpush.msra.mxu0 0.0
      %5305 = vmatpush.msra.mxu0 0.0
      %5306 = vmatpush.msra.mxu0 0.0
      %5307 = vmatpush.msra.mxu0 %v4370
      %5308 = vmatmul.f32.gmra.mxu0 %v5290
      %v5309 = vpop.f32.mrf.mxu0
      %v5310 = vadd.f32 0.0, %v5309
      %5311 = vdwg.mxu0
      %v5313 = vsel %vm917, %v4966, 0
      %5315 = vmatpush.msra.mxu0 0.0
      %5316 = vmatpush.msra.mxu0 0.0
      %5317 = vmatpush.msra.mxu0 0.0
      %5318 = vmatpush.msra.mxu0 0.0
      %5319 = vmatpush.msra.mxu0 0.0
      %5320 = vmatpush.msra.mxu0 0.0
      %5321 = vmatpush.msra.mxu0 0.0
      %5322 = vmatpush.msra.mxu0 0.0
      %5323 = vmatpush.msra.mxu0 0.0
      %5324 = vmatpush.msra.mxu0 0.0
      %5325 = vmatpush.msra.mxu0 0.0
      %5326 = vmatpush.msra.mxu0 0.0
      %5327 = vmatpush.msra.mxu0 0.0
      %5328 = vmatpush.msra.mxu0 0.0
      %5329 = vmatpush.msra.mxu0 0.0
      %5330 = vmatpush.msra.mxu0 %v4373
      %5331 = vmatmul.f32.gmra.mxu0 %v5313
      %v5332 = vpop.f32.mrf.mxu0
      %v5333 = vadd.f32 0.0, %v5332
      %5334 = vdwg.mxu0
      %s5335 = scalar_lea.vmem %s4, 48
      %v5336 = vld [vmem:[%s5335] sm:$0xff]
      %v5337 = vld [vmem:[%s5335 + $0x8] sm:$0xff]
      %v5339 = vsel %vm500, %v4988, 0
      %v5342 = vsel %vm500, %v5011, 0
      %v5345 = vsel %vm500, %v5034, 0
      %v5348 = vsel %vm500, %v5057, 0
      %v5351 = vsel %vm500, %v5080, 0
      %v5354 = vsel %vm500, %v5103, 0
      %v5357 = vsel %vm500, %v5126, 0
      %v5360 = vsel %vm500, %v5149, 0
      %v5363 = vsel %vm500, %v5172, 0
      %v5366 = vsel %vm500, %v5195, 0
      %v5369 = vsel %vm500, %v5218, 0
      %v5372 = vsel %vm500, %v5241, 0
      %v5375 = vsel %vm500, %v5264, 0
      %v5378 = vsel %vm500, %v5287, 0
      %v5381 = vsel %vm500, %v5310, 0
      %v5384 = vsel %vm500, %v5333, 0
      %5386 = vmatpush.msra.mxu0 0.0
      %5387 = vmatpush.msra.mxu0 0.0
      %5388 = vmatpush.msra.mxu0 0.0
      %5389 = vmatpush.msra.mxu0 0.0
      %5390 = vmatpush.msra.mxu0 0.0
      %5391 = vmatpush.msra.mxu0 0.0
      %5392 = vmatpush.msra.mxu0 0.0
      %5393 = vmatpush.msra.mxu0 0.0
      %5394 = vmatpush.msra.mxu0 0.0
      %5395 = vmatpush.msra.mxu0 0.0
      %5396 = vmatpush.msra.mxu0 0.0
      %5397 = vmatpush.msra.mxu0 0.0
      %5398 = vmatpush.msra.mxu0 0.0
      %5399 = vmatpush.msra.mxu0 0.0
      %5400 = vmatpush.msra.mxu0 %v5337
      %5401 = vmatpush.msra.mxu0 %v5336
      %5402 = vmatmul.f32.gmra.mxu0 %v5339
      %v5403 = vpop.f32.mrf.mxu0
      %v5404 = vadd.f32 0.0, %v5403
      %5405 = vmatmul.f32.gmra.mxu0 %v5342
      %v5406 = vpop.f32.mrf.mxu0
      %v5407 = vadd.f32 0.0, %v5406
      %5408 = vmatmul.f32.gmra.mxu0 %v5345
      %v5409 = vpop.f32.mrf.mxu0
      %v5410 = vadd.f32 0.0, %v5409
      %5411 = vmatmul.f32.gmra.mxu0 %v5348
      %v5412 = vpop.f32.mrf.mxu0
      %v5413 = vadd.f32 0.0, %v5412
      %5414 = vmatmul.f32.gmra.mxu0 %v5351
      %v5415 = vpop.f32.mrf.mxu0
      %v5416 = vadd.f32 0.0, %v5415
      %5417 = vmatmul.f32.gmra.mxu0 %v5354
      %v5418 = vpop.f32.mrf.mxu0
      %v5419 = vadd.f32 0.0, %v5418
      %5420 = vmatmul.f32.gmra.mxu0 %v5357
      %v5421 = vpop.f32.mrf.mxu0
      %v5422 = vadd.f32 0.0, %v5421
      %5423 = vmatmul.f32.gmra.mxu0 %v5360
      %v5424 = vpop.f32.mrf.mxu0
      %v5425 = vadd.f32 0.0, %v5424
      %5426 = vmatmul.f32.gmra.mxu0 %v5363
      %v5427 = vpop.f32.mrf.mxu0
      %v5428 = vadd.f32 0.0, %v5427
      %5429 = vmatmul.f32.gmra.mxu0 %v5366
      %v5430 = vpop.f32.mrf.mxu0
      %v5431 = vadd.f32 0.0, %v5430
      %5432 = vmatmul.f32.gmra.mxu0 %v5369
      %v5433 = vpop.f32.mrf.mxu0
      %v5434 = vadd.f32 0.0, %v5433
      %5435 = vmatmul.f32.gmra.mxu0 %v5372
      %v5436 = vpop.f32.mrf.mxu0
      %v5437 = vadd.f32 0.0, %v5436
      %5438 = vmatmul.f32.gmra.mxu0 %v5375
      %v5439 = vpop.f32.mrf.mxu0
      %v5440 = vadd.f32 0.0, %v5439
      %5441 = vmatmul.f32.gmra.mxu0 %v5378
      %v5442 = vpop.f32.mrf.mxu0
      %v5443 = vadd.f32 0.0, %v5442
      %5444 = vmatmul.f32.gmra.mxu0 %v5381
      %v5445 = vpop.f32.mrf.mxu0
      %v5446 = vadd.f32 0.0, %v5445
      %5447 = vmatmul.f32.gmra.mxu0 %v5384
      %v5448 = vpop.f32.mrf.mxu0
      %v5449 = vadd.f32 0.0, %v5448
      %5450 = vdwg.mxu0
      %v5451 = vadd.f32 %v4149, %v5404
      %v5452 = vadd.f32 %v4150, %v5407
      %v5453 = vadd.f32 %v4151, %v5410
      %v5454 = vadd.f32 %v4152, %v5413
      %v5455 = vadd.f32 %v4153, %v5416
      %v5456 = vadd.f32 %v4154, %v5419
      %v5457 = vadd.f32 %v4155, %v5422
      %v5458 = vadd.f32 %v4156, %v5425
      %v5459 = vadd.f32 %v4157, %v5428
      %v5460 = vadd.f32 %v4158, %v5431
      %v5461 = vadd.f32 %v4159, %v5434
      %v5462 = vadd.f32 %v4160, %v5437
      %v5463 = vadd.f32 %v4161, %v5440
      %v5464 = vadd.f32 %v4162, %v5443
      %v5465 = vadd.f32 %v4163, %v5446
      %v5466 = vadd.f32 %v4164, %v5449
      %5467 = vst.msk [vmem:[%s226] sm:$0xff] %vm248, %v5451
      %5468 = vst.msk [vmem:[%s226 + $0x8] sm:$0xff] %vm248, %v5452
      %5469 = vst.msk [vmem:[%s226 + $0x10] sm:$0xff] %vm248, %v5453
      %5470 = vst.msk [vmem:[%s226 + $0x18] sm:$0xff] %vm248, %v5454
      %5471 = vst.msk [vmem:[%s226 + $0x20] sm:$0xff] %vm248, %v5455
      %5472 = vst.msk [vmem:[%s226 + $0x28] sm:$0xff] %vm248, %v5456
      %5473 = vst.msk [vmem:[%s226 + $0x30] sm:$0xff] %vm248, %v5457
      %5474 = vst.msk [vmem:[%s226 + $0x38] sm:$0xff] %vm248, %v5458
      %5475 = vst.msk [vmem:[%s226 + $0x40] sm:$0xff] %vm248, %v5459
      %5476 = vst.msk [vmem:[%s226 + $0x48] sm:$0xff] %vm248, %v5460
      %5477 = vst.msk [vmem:[%s226 + $0x50] sm:$0xff] %vm248, %v5461
      %5478 = vst.msk [vmem:[%s226 + $0x58] sm:$0xff] %vm248, %v5462
      %5479 = vst.msk [vmem:[%s226 + $0x60] sm:$0xff] %vm248, %v5463
      %5480 = vst.msk [vmem:[%s226 + $0x68] sm:$0xff] %vm248, %v5464
      %5481 = vst.msk [vmem:[%s226 + $0x70] sm:$0xff] %vm248, %v5465
      %5482 = vst.msk [vmem:[%s226 + $0x78] sm:$0xff] %vm248, %v5466
      %s5483 = smul.u32 16, %s16
      %p5484 = scmp.lt.s32.totalorder %s5483, 63
      %s5485 = scalar_select %p5484, %s5483, 63
      %s5486 = smul.addr %s5485, 8
      %s5487 = scalar_lea.vmem %s5, %s5486
      // Predicated region
      $region41: #{tpu_custom_call.1} parent=39 // pred_check
        %p5488 = pneg %p144
      $region42: #{tpu_custom_call.1} parent=39 // pred_check_branch
        %5490 = sbr.rel (%p5488) target = $region44
      $region43: #{tpu_custom_call.1} parent=39 // pred_region
        %s5491 = smul.u32 16, %s16
      $region44: #{tpu_custom_call.1} parent=39 // pred_fallthru
        _
    $region40: #{tpu_custom_call.1} parent=5 // pred_fallthru
      _
    %p5492 = scmp.le.s32.totalorder 2, %s11
    // Predicated region
    $region45: #{tpu_custom_call.1} parent=5 // pred_check
      %p5493 = pneg %p5492
    $region46: #{tpu_custom_call.1} parent=5 // pred_check_branch
      %5495 = sbr.rel (%p5493) target = $region48
    $region47: #{tpu_custom_call.1} parent=5 // pred_region
      %s5496 = ssub.s32 %s11, 2
      // Predicated region
      $region49: #{tpu_custom_call.1} parent=47 // pred_check
        %p5497 = pneg %p150
      $region50: #{tpu_custom_call.1} parent=47 // pred_check_branch
        %5499 = sbr.rel (%p5497) target = $region52
      $region51: #{tpu_custom_call.1} parent=47 // pred_region
        %s5500 = smul.u32 16, %s17
        %p5501 = scmp.lt.s32.totalorder %s5500, 63
        %s5502 = scalar_select %p5501, %s5500, 63
        %s5503 = smul.addr %s5502, 8
        %s5504 = scalar_lea.vmem %s5, %s5503
      $region52: #{tpu_custom_call.1} parent=47 // pred_fallthru
        _
    $region48: #{tpu_custom_call.1} parent=5 // pred_fallthru
      _
  $region6: #{tpu_custom_call.1} parent=0 // loop_footer
    %s15 = sadd.s32 1, %s11
  $region7: #{tpu_custom_call.1} parent=0 // loop_footer_branch
    %10 = sbr.rel target = $region3
  $region8: #{tpu_custom_call.1} parent=0 // loop_exit
    _

</llo_original>
